<compile_context>
chip_gen: v6e
topology: v6e:2x2x1
jax: 0.10.0
libtpu: 0.0.40
codegen_flags: <defaults>
</compile_context>

<pallas_src>
import math
import jax
import jax.numpy as jnp
from jax import lax
from jax.experimental import pallas as pl
from jax.experimental.pallas import tpu as pltpu

DROPOUT_P = 0.2
DROPOUT_THRESHOLD = int(DROPOUT_P * (1 << 32))        # keep if hash >= threshold
INV_KEEP = 1.0 / (1.0 - DROPOUT_P)

N_EMBD = 384                                          # matches the module spec
HIDDEN = 4 * N_EMBD


def _hash_u32(x):
    """lowbias32 integer hash (uint32 -> uint32), pure VPU ops."""
    x = x ^ (x >> 16)
    x = x * jnp.uint32(0x7FEB352D)
    x = x ^ (x >> 15)
    x = x * jnp.uint32(0x846CA68B)
    x = x ^ (x >> 16)
    return x


def _make_ffn_kernel(apply_dropout: bool):
    def ffn_kernel(seed_ref, x_ref, w1_ref, b1_ref, w2_ref, b2_ref, o_ref):
        # ---- Linear 1 (bf16 MXU, f32 accumulate) + bias + ReLU ----
        x = x_ref[...].astype(jnp.bfloat16)
        h = jnp.dot(x, w1_ref[...], preferred_element_type=jnp.float32)
        h = jnp.maximum(h + b1_ref[...], 0.0)

        # ---- Linear 2 (bf16 MXU, f32 accumulate) + bias ----
        y = jnp.dot(h.astype(jnp.bfloat16), w2_ref[...],
                    preferred_element_type=jnp.float32)
        y = y + b2_ref[...]

        if apply_dropout:
            # ---- Dropout(p): zero w.p. p, scale kept values by 1/(1-p) ----
            tm, c = y.shape
            row = lax.broadcasted_iota(jnp.uint32, (tm, c), 0)
            col = lax.broadcasted_iota(jnp.uint32, (tm, c), 1)
            row0 = (pl.program_id(0) * tm).astype(jnp.uint32)
            idx = (row0 + row) * jnp.uint32(c) + col
            seed = seed_ref[0].astype(jnp.uint32)
            r = _hash_u32(idx * jnp.uint32(0x9E3779B9)
                          + seed * jnp.uint32(0x85EBCA6B))
            keep = r >= jnp.uint32(DROPOUT_THRESHOLD)
            y = jnp.where(keep, y * jnp.float32(INV_KEEP), 0.0)

        o_ref[...] = y.astype(o_ref.dtype)

    return ffn_kernel


def _pick_tm(M: int, cap: int = 1024) -> int:
    """Largest row tile <= cap that divides M and is a multiple of 8."""
    if M <= cap:
        return M
    for t in range(cap, 0, -8):
        if M % t == 0:
            return t
    return M


def feed_forward(x, w1, b1, w2, b2, seed=0, *, training=True, tm=None):
    """x: (B, T, C) float32. Returns (B, T, C)."""
    B, T, C = x.shape
    M = B * T
    H = w1.shape[1]
    x2 = x.reshape(M, C)

    if tm is None:
        tm = _pick_tm(M)
    assert M % tm == 0, f"row tile {tm} must divide M={M}"

    # Weights resident in VMEM in bf16 (half the footprint / DMA traffic);
    # biases stay f32.
    w1b = w1.astype(jnp.bfloat16)
    w2b = w2.astype(jnp.bfloat16)
    b1_2d = b1.reshape(1, H).astype(jnp.float32)
    b2_2d = b2.reshape(1, C).astype(jnp.float32)
    seed_arr = jnp.asarray([seed], dtype=jnp.int32)

    flops = 2 * M * C * H * 2                               # two matmuls
    bytes_accessed = (2 * M * C) * 4 + (C * H + H * C) * 2 + (H + C) * 4

    out = pl.pallas_call(
        _make_ffn_kernel(training),
        out_shape=jax.ShapeDtypeStruct((M, C), x.dtype),
        grid=(M // tm,),
        in_specs=[
            pl.BlockSpec(memory_space=pltpu.SMEM),           # seed (scalar)
            pl.BlockSpec((tm, C), lambda i: (i, 0)),         # x tile
            pl.BlockSpec((C, H), lambda i: (0, 0)),          # W1 (resident)
            pl.BlockSpec((1, H), lambda i: (0, 0)),          # b1
            pl.BlockSpec((H, C), lambda i: (0, 0)),          # W2 (resident)
            pl.BlockSpec((1, C), lambda i: (0, 0)),          # b2
        ],
        out_specs=pl.BlockSpec((tm, C), lambda i: (i, 0)),
        compiler_params=pltpu.CompilerParams(
            dimension_semantics=("parallel",),
            vmem_limit_bytes=64 * 1024 * 1024,
        ),
        cost_estimate=pl.CostEstimate(
            flops=flops, transcendentals=0, bytes_accessed=bytes_accessed),
    )(seed_arr, x2, w1b, b1_2d, w2b, b2_2d)
    return out.reshape(B, T, C)


def init_params(key, n_embd):
    """Deterministic init mimicking nn.Linear default U(-1/sqrt(fan_in), 1/sqrt(fan_in))."""
    k1, k2, k3, k4 = jax.random.split(key, 4)
    h = 4 * n_embd
    bound1 = 1.0 / math.sqrt(n_embd)
    bound2 = 1.0 / math.sqrt(h)
    # stored transposed for the x @ W convention: W1 (C, H), W2 (H, C)
    w1 = jax.random.uniform(k1, (n_embd, h), jnp.float32, -bound1, bound1)
    b1 = jax.random.uniform(k2, (h,), jnp.float32, -bound1, bound1)
    w2 = jax.random.uniform(k3, (h, n_embd), jnp.float32, -bound2, bound2)
    b2 = jax.random.uniform(k4, (n_embd,), jnp.float32, -bound2, bound2)
    return w1, b1, w2, b2


if __name__ == "__main__":
    key = jax.random.PRNGKey(0)
    kx, kp = jax.random.split(key)

    B, T = 2, 8
    x = jax.random.normal(kx, (B, T, N_EMBD), jnp.float32)
    w1, b1, w2, b2 = init_params(kp, N_EMBD)

    # Training-mode forward (dropout active).
    y = feed_forward(x, w1, b1, w2, b2, seed=1234, training=True)
    jax.block_until_ready(y)
    assert y.shape == (B, T, N_EMBD)
    assert jnp.isfinite(y).all()
    # Roughly p=0.2 of outputs should be zeroed by dropout.
    zero_frac = float(jnp.mean(y == 0.0))
    assert 0.1 < zero_frac < 0.3, f"unexpected dropout zero fraction {zero_frac}"

    # Eval-mode forward (dropout skipped) also compiles/runs.
    y_eval = feed_forward(x, w1, b1, w2, b2, training=False)
    jax.block_until_ready(y_eval)
    assert y_eval.shape == (B, T, N_EMBD)
    assert jnp.isfinite(y_eval).all()

    print("KERNEL_OK")
</pallas_src>

<mosaic_0001>
module attributes {stable_mosaic.version = 11 : i64} {
  func.func @ffn_kernel(%arg0: i32, %arg1: memref<1xi32, #tpu.memory_space<smem>>, %arg2: memref<16x384xf32, #tpu.memory_space<vmem>>, %arg3: memref<384x1536xbf16, #tpu.memory_space<vmem>>, %arg4: memref<1x1536xf32, #tpu.memory_space<vmem>>, %arg5: memref<1536x384xbf16, #tpu.memory_space<vmem>>, %arg6: memref<1x384xf32, #tpu.memory_space<vmem>>, %arg7: memref<16x384xf32, #tpu.memory_space<vmem>>) attributes {dimension_semantics = [#tpu.dimension_semantics<parallel>], iteration_bounds = array<i64: 1>, scalar_prefetch = 0 : i64, scratch_operands = 0 : i64, tpu.core_type = #tpu.core_type<tc>, window_params = [{transform_indices = @transform_0, window_bounds = array<i64: 1>}, {transform_indices = @transform_1, window_bounds = array<i64: 16, 384>}, {pipeline_mode = #tpu.pipeline_mode<synchronous>, transform_indices = @transform_2, window_bounds = array<i64: 384, 1536>}, {pipeline_mode = #tpu.pipeline_mode<synchronous>, transform_indices = @transform_3, window_bounds = array<i64: 1, 1536>}, {pipeline_mode = #tpu.pipeline_mode<synchronous>, transform_indices = @transform_4, window_bounds = array<i64: 1536, 384>}, {pipeline_mode = #tpu.pipeline_mode<synchronous>, transform_indices = @transform_5, window_bounds = array<i64: 1, 384>}, {transform_indices = @transform_6, window_bounds = array<i64: 16, 384>}]} {
    %c0 = arith.constant 0 : index
    %c0_0 = arith.constant 0 : index
    %0 = vector.load %arg2[%c0, %c0_0] : memref<16x384xf32, #tpu.memory_space<vmem>>, vector<16x384xf32>
    %1 = arith.truncf %0 : vector<16x384xf32> to vector<16x384xbf16>
    %c0_1 = arith.constant 0 : index
    %c0_2 = arith.constant 0 : index
    %2 = vector.load %arg3[%c0_1, %c0_2] : memref<384x1536xbf16, #tpu.memory_space<vmem>>, vector<384x1536xbf16>
    %cst = arith.constant dense<0.000000e+00> : vector<16x1536xf32>
    %3 = tpu.matmul %1, %2, %cst {dimension_numbers = #tpu.dot_dimension_numbers<[1], [0], [0], [1], [0, 0, 1, 1], [], []>} : vector<16x384xbf16>, vector<384x1536xbf16>, vector<16x1536xf32> -> vector<16x1536xf32>
    %c0_3 = arith.constant 0 : index
    %c0_4 = arith.constant 0 : index
    %4 = vector.load %arg4[%c0_3, %c0_4] : memref<1x1536xf32, #tpu.memory_space<vmem>>, vector<1x1536xf32>
    %5 = vector.broadcast %4 : vector<1x1536xf32> to vector<16x1536xf32>
    %6 = arith.addf %3, %5 : vector<16x1536xf32>
    %cst_5 = arith.constant 0.000000e+00 : f32
    %7 = vector.broadcast %cst_5 : f32 to vector<16x1536xf32>
    %8 = arith.maximumf %6, %7 : vector<16x1536xf32>
    %9 = arith.truncf %8 : vector<16x1536xf32> to vector<16x1536xbf16>
    %c0_6 = arith.constant 0 : index
    %c0_7 = arith.constant 0 : index
    %10 = vector.load %arg5[%c0_6, %c0_7] : memref<1536x384xbf16, #tpu.memory_space<vmem>>, vector<1536x384xbf16>
    %cst_8 = arith.constant dense<0.000000e+00> : vector<16x384xf32>
    %11 = tpu.matmul %9, %10, %cst_8 {dimension_numbers = #tpu.dot_dimension_numbers<[1], [0], [0], [1], [0, 0, 1, 1], [], []>} : vector<16x1536xbf16>, vector<1536x384xbf16>, vector<16x384xf32> -> vector<16x384xf32>
    %c0_9 = arith.constant 0 : index
    %c0_10 = arith.constant 0 : index
    %12 = vector.load %arg6[%c0_9, %c0_10] : memref<1x384xf32, #tpu.memory_space<vmem>>, vector<1x384xf32>
    %13 = vector.broadcast %12 : vector<1x384xf32> to vector<16x384xf32>
    %14 = arith.addf %11, %13 : vector<16x384xf32>
    %15 = tpu.iota {dimensions = array<i32: 0>} : vector<16x384xi32>
    %16 = tpu.iota {dimensions = array<i32: 1>} : vector<16x384xi32>
    %c16_i32 = arith.constant 16 : i32
    %17 = arith.muli %arg0, %c16_i32 : i32
    %18 = vector.broadcast %17 : i32 to vector<16x384xi32>
    %19 = arith.addi %18, %15 : vector<16x384xi32>
    %c384_i32 = arith.constant 384 : i32
    %20 = vector.broadcast %c384_i32 : i32 to vector<16x384xi32>
    %21 = arith.muli %19, %20 : vector<16x384xi32>
    %22 = arith.addi %21, %16 : vector<16x384xi32>
    %c0_11 = arith.constant 0 : index
    %23 = memref.load %arg1[%c0_11] : memref<1xi32, #tpu.memory_space<smem>>
    %c-1640531527_i32 = arith.constant -1640531527 : i32
    %24 = vector.broadcast %c-1640531527_i32 : i32 to vector<16x384xi32>
    %25 = arith.muli %22, %24 : vector<16x384xi32>
    %c-2048144789_i32 = arith.constant -2048144789 : i32
    %26 = arith.muli %23, %c-2048144789_i32 : i32
    %27 = vector.broadcast %26 : i32 to vector<16x384xi32>
    %28 = arith.addi %25, %27 : vector<16x384xi32>
    %c16_i32_12 = arith.constant 16 : i32
    %29 = vector.broadcast %c16_i32_12 : i32 to vector<16x384xi32>
    %30 = arith.shrui %28, %29 : vector<16x384xi32>
    %31 = arith.xori %28, %30 : vector<16x384xi32>
    %c2146121005_i32 = arith.constant 2146121005 : i32
    %32 = vector.broadcast %c2146121005_i32 : i32 to vector<16x384xi32>
    %33 = arith.muli %31, %32 : vector<16x384xi32>
    %c15_i32 = arith.constant 15 : i32
    %34 = vector.broadcast %c15_i32 : i32 to vector<16x384xi32>
    %35 = arith.shrui %33, %34 : vector<16x384xi32>
    %36 = arith.xori %33, %35 : vector<16x384xi32>
    %c-2073254261_i32 = arith.constant -2073254261 : i32
    %37 = vector.broadcast %c-2073254261_i32 : i32 to vector<16x384xi32>
    %38 = arith.muli %36, %37 : vector<16x384xi32>
    %c16_i32_13 = arith.constant 16 : i32
    %39 = vector.broadcast %c16_i32_13 : i32 to vector<16x384xi32>
    %40 = arith.shrui %38, %39 : vector<16x384xi32>
    %41 = arith.xori %38, %40 : vector<16x384xi32>
    %c858993459_i32 = arith.constant 858993459 : i32
    %42 = vector.broadcast %c858993459_i32 : i32 to vector<16x384xi32>
    %43 = arith.cmpi uge, %41, %42 : vector<16x384xi32>
    %cst_14 = arith.constant 1.250000e+00 : f32
    %44 = vector.broadcast %cst_14 : f32 to vector<16x384xf32>
    %45 = arith.mulf %14, %44 : vector<16x384xf32>
    %cst_15 = arith.constant 0.000000e+00 : f32
    %46 = vector.broadcast %cst_15 : f32 to vector<16x384xf32>
    %47 = arith.select %43, %45, %46 : vector<16x384xi1>, vector<16x384xf32>
    %c0_16 = arith.constant 0 : index
    %c0_17 = arith.constant 0 : index
    %48 = vector.load %arg7[%c0_16, %c0_17] : memref<16x384xf32, #tpu.memory_space<vmem>>, vector<16x384xf32>
    tpu.vector_store %arg7[%c0_16, %c0_17], %47 {strides = array<i32>} : memref<16x384xf32, #tpu.memory_space<vmem>>, vector<16x384xf32>,
    return
  }
  func.func @transform_0(%arg0: i32) -> i32 {
    %c0_i32 = arith.constant 0 : i32
    %c0_i32_0 = arith.constant 0 : i32
    return %c0_i32 : i32
  }
  func.func @transform_1(%arg0: i32) -> (i32, i32) {
    %c0_i32 = arith.constant 0 : i32
    %c0_i32_0 = arith.constant 0 : i32
    return %arg0, %c0_i32 : i32, i32
  }
  func.func @transform_2(%arg0: i32) -> (i32, i32) {
    %c0_i32 = arith.constant 0 : i32
    %c0_i32_0 = arith.constant 0 : i32
    %c0_i32_1 = arith.constant 0 : i32
    return %c0_i32, %c0_i32_0 : i32, i32
  }
  func.func @transform_3(%arg0: i32) -> (i32, i32) {
    %c0_i32 = arith.constant 0 : i32
    %c0_i32_0 = arith.constant 0 : i32
    %c0_i32_1 = arith.constant 0 : i32
    return %c0_i32, %c0_i32_0 : i32, i32
  }
  func.func @transform_4(%arg0: i32) -> (i32, i32) {
    %c0_i32 = arith.constant 0 : i32
    %c0_i32_0 = arith.constant 0 : i32
    %c0_i32_1 = arith.constant 0 : i32
    return %c0_i32, %c0_i32_0 : i32, i32
  }
  func.func @transform_5(%arg0: i32) -> (i32, i32) {
    %c0_i32 = arith.constant 0 : i32
    %c0_i32_0 = arith.constant 0 : i32
    %c0_i32_1 = arith.constant 0 : i32
    return %c0_i32, %c0_i32_0 : i32, i32
  }
  func.func @transform_6(%arg0: i32) -> (i32, i32) {
    %c0_i32 = arith.constant 0 : i32
    %c0_i32_0 = arith.constant 0 : i32
    return %arg0, %c0_i32 : i32, i32
  }
}

</mosaic_0001>

<llo_original>
// kernel: tpu_custom_call.1
$region0: #{tpu_custom_call.1}
  #allocation0 [shape = 'u32[]', space=smem, size = 0x4, offset = 0x4, fixed_abs, tag = 'smem constant byte address 0x4 - core index']
  #allocation1 [shape = 'u32[144,128]{1,0:T(1,128)}', space=vmem, size = 0x12000, scoped, tag = 'internal scratch']
  #allocation2 [shape = 's32[1]{0:T(128)S(6)}', space=smem, size = 0x200, scoped, tag = 'scoped memory for tpu_custom_call.1']
  %s0 = inlined_call_operand.<no memory space> [shape: s32[1], index: 0, kind: input, shape index: {}]
  %s1 = inlined_call_operand.hbm [shape: f32[16,384], index: 1, kind: input, shape index: {}]
  %s2 = inlined_call_operand.hbm [shape: bf16[384,1536], index: 2, kind: input, shape index: {}]
  %s3 = inlined_call_operand.hbm [shape: f32[1,1536], index: 3, kind: input, shape index: {}]
  %s4 = inlined_call_operand.hbm [shape: bf16[1536,384], index: 4, kind: input, shape index: {}]
  %s5 = inlined_call_operand.hbm [shape: f32[1,384], index: 5, kind: input, shape index: {}]
  %s6 = inlined_call_operand.hbm [shape: f32[16,384], index: 6, kind: output, shape index: {}]
  %s7 = sld [smem:[#allocation0]]
  $region54: #{tpu_custom_call.1} parent=0
    _
  %s9 = ssub.s32 1, %s7
  %s10 = scalar_select 0, %s9, %s7
  %11 = sst [smem:[#allocation2]] %s0
  $region1: #{tpu_custom_call.1} parent=0
    #allocation3 [shape = 'u8[24576]{0}', space=vmem, size = 0x6000, scoped, tag = 'input window, operand 1, single buffered']
    #allocation4 [shape = 's32[1]{0}', space=sflag, size = 0x4, scoped, tag = 'scoped memory for tpu_custom_call.1']
    #allocation5 [shape = 's32[1]{0}', space=sflag, size = 0x4, scoped, tag = 'scoped memory for tpu_custom_call.1']
    #allocation6 [shape = 'u8[1179648]{0}', space=vmem, size = 0x120000, scoped, tag = 'input window, operand 2, single buffered']
    #allocation7 [shape = 's32[1]{0}', space=sflag, size = 0x4, scoped, tag = 'scoped memory for tpu_custom_call.1']
    #allocation8 [shape = 'u8[6144]{0}', space=vmem, size = 0x1800, scoped, tag = 'input window, operand 3, single buffered']
    #allocation9 [shape = 'u8[1179648]{0}', space=vmem, size = 0x120000, scoped, tag = 'input window, operand 4, single buffered']
    #allocation10 [shape = 's32[1]{0}', space=sflag, size = 0x4, scoped, tag = 'scoped memory for tpu_custom_call.1']
    #allocation11 [shape = 'u8[1536]{0}', space=vmem, size = 0x800, scoped, tag = 'input window, operand 5, single buffered']
    #allocation12 [shape = 'u8[24576]{0}', space=vmem, size = 0x6000, scoped, tag = 'output window, operand 0, single buffered']
    %12 = vsyncpa [#allocation4], 0
    %13 = vsyncpa [#allocation7], 0
    %14 = vsyncpa [#allocation10], 0
    %15 = vsyncpa [#allocation5], 0
    // Predicated region
    $region2: #{tpu_custom_call.1} parent=1 // pred_check
      _
    $region3: #{tpu_custom_call.1} parent=1 // pred_check_branch
      %17 = sbr.rel (0) target = $region5
    $region4: #{tpu_custom_call.1} parent=1 // pred_region
      _
    $region5: #{tpu_custom_call.1} parent=1 // pred_fallthru
      _
    // Predicated region
    $region6: #{tpu_custom_call.1} parent=1 // pred_check
      _
    $region7: #{tpu_custom_call.1} parent=1 // pred_check_branch
      %19 = sbr.rel (0) target = $region9
    $region8: #{tpu_custom_call.1} parent=1 // pred_region
      %s21 = ssub.s32 768, 768
      %22 = vsyncadd [#allocation4], %s21
      %s23 = sshll.u32 [#allocation3], 4
      %s24 = int_to_ptr.vmem [resolvable:$true] %s23
      %29 = dma.hbm_to_vmem [thread:$0]  %s1, 768, %s24, [#allocation4], 384, 384, 24
    $region9: #{tpu_custom_call.1} parent=1 // pred_fallthru
      _
    // Predicated region
    $region10: #{tpu_custom_call.1} parent=1 // pred_check
      _
    $region11: #{tpu_custom_call.1} parent=1 // pred_check_branch
      %31 = sbr.rel (0) target = $region13
    $region12: #{tpu_custom_call.1} parent=1 // pred_region
      %s33 = ssub.s32 36864, 36864
      %34 = vsyncadd [#allocation7], %s33
      %s35 = sshll.u32 [#allocation6], 4
      %s36 = int_to_ptr.vmem [resolvable:$true] %s35
      %41 = dma.hbm_to_vmem [thread:$0]  %s2, 36864, %s36, [#allocation7], 768, 768, 48
    $region13: #{tpu_custom_call.1} parent=1 // pred_fallthru
      _
    // Predicated region
    $region14: #{tpu_custom_call.1} parent=1 // pred_check
      _
    $region15: #{tpu_custom_call.1} parent=1 // pred_check_branch
      %43 = sbr.rel (0) target = $region17
    $region16: #{tpu_custom_call.1} parent=1 // pred_region
      %s45 = ssub.s32 192, 192
      %46 = vsyncadd [#allocation7], %s45
      %s48 = sshll.u32 [#allocation8], 4
      %s49 = int_to_ptr.vmem [resolvable:$true] %s48
      %51 = dma.hbm_to_vmem [thread:$0]  %s3, 192, %s49, [#allocation7]
    $region17: #{tpu_custom_call.1} parent=1 // pred_fallthru
      _
    // Predicated region
    $region18: #{tpu_custom_call.1} parent=1 // pred_check
      _
    $region19: #{tpu_custom_call.1} parent=1 // pred_check_branch
      %53 = sbr.rel (0) target = $region21
    $region20: #{tpu_custom_call.1} parent=1 // pred_region
      %s55 = ssub.s32 36864, 36864
      %56 = vsyncadd [#allocation10], %s55
      %s57 = sshll.u32 [#allocation9], 4
      %s58 = int_to_ptr.vmem [resolvable:$true] %s57
      %63 = dma.hbm_to_vmem [thread:$0]  %s4, 36864, %s58, [#allocation10], 192, 192, 12
    $region21: #{tpu_custom_call.1} parent=1 // pred_fallthru
      _
    // Predicated region
    $region22: #{tpu_custom_call.1} parent=1 // pred_check
      _
    $region23: #{tpu_custom_call.1} parent=1 // pred_check_branch
      %65 = sbr.rel (0) target = $region25
    $region24: #{tpu_custom_call.1} parent=1 // pred_region
      %s67 = ssub.s32 48, 48
      %68 = vsyncadd [#allocation10], %s67
      %s70 = sshll.u32 [#allocation11], 4
      %s71 = int_to_ptr.vmem [resolvable:$true] %s70
      %73 = dma.hbm_to_vmem [thread:$0]  %s5, 48, %s71, [#allocation10]
    $region25: #{tpu_custom_call.1} parent=1 // pred_fallthru
      _
    // Predicated region
    $region26: #{tpu_custom_call.1} parent=1 // pred_check
      _
    $region27: #{tpu_custom_call.1} parent=1 // pred_check_branch
      %75 = sbr.rel (0) target = $region29
    $region28: #{tpu_custom_call.1} parent=1 // pred_region
      %76 = dma.done [#allocation4], 768
    $region29: #{tpu_custom_call.1} parent=1 // pred_fallthru
      _
    // Predicated region
    $region30: #{tpu_custom_call.1} parent=1 // pred_check
      _
    $region31: #{tpu_custom_call.1} parent=1 // pred_check_branch
      %78 = sbr.rel (0) target = $region33
    $region32: #{tpu_custom_call.1} parent=1 // pred_region
      %79 = dma.done [#allocation7], 36864
    $region33: #{tpu_custom_call.1} parent=1 // pred_fallthru
      _
    // Predicated region
    $region34: #{tpu_custom_call.1} parent=1 // pred_check
      _
    $region35: #{tpu_custom_call.1} parent=1 // pred_check_branch
      %81 = sbr.rel (0) target = $region37
    $region36: #{tpu_custom_call.1} parent=1 // pred_region
      %82 = dma.done [#allocation7], 192
    $region37: #{tpu_custom_call.1} parent=1 // pred_fallthru
      _
    // Predicated region
    $region38: #{tpu_custom_call.1} parent=1 // pred_check
      _
    $region39: #{tpu_custom_call.1} parent=1 // pred_check_branch
      %84 = sbr.rel (0) target = $region41
    $region40: #{tpu_custom_call.1} parent=1 // pred_region
      %85 = dma.done [#allocation10], 36864
    $region41: #{tpu_custom_call.1} parent=1 // pred_fallthru
      _
    // Predicated region
    $region42: #{tpu_custom_call.1} parent=1 // pred_check
      _
    $region43: #{tpu_custom_call.1} parent=1 // pred_check_branch
      %87 = sbr.rel (0) target = $region45
    $region44: #{tpu_custom_call.1} parent=1 // pred_region
      %88 = dma.done [#allocation10], 48
    $region45: #{tpu_custom_call.1} parent=1 // pred_fallthru
      _
    %v90 = vld [vmem:[#allocation3] sm:$0xff]
    %v91 = vld [vmem:[#allocation3 + $0x8] sm:$0xff]
    %v92 = vld [vmem:[#allocation3 + $0x10] sm:$0xff]
    %v93 = vld [vmem:[#allocation3 + $0x18] sm:$0xff]
    %v94 = vld [vmem:[#allocation3 + $0x20] sm:$0xff]
    %v95 = vld [vmem:[#allocation3 + $0x28] sm:$0xff]
    %v96 = vpack.c.bf16 %v93, %v90
    %v97 = vpack.c.bf16 %v94, %v91
    %v98 = vpack.c.bf16 %v95, %v92
    %v99 = vld [vmem:[#allocation6] sm:$0xff]
    %v100 = vld [vmem:[#allocation6 + $0x8] sm:$0xff]
    %v101 = vld [vmem:[#allocation6 + $0x10] sm:$0xff]
    %v102 = vld [vmem:[#allocation6 + $0x18] sm:$0xff]
    %v103 = vld [vmem:[#allocation6 + $0x20] sm:$0xff]
    %v104 = vld [vmem:[#allocation6 + $0x28] sm:$0xff]
    %v105 = vld [vmem:[#allocation6 + $0x30] sm:$0xff]
    %v106 = vld [vmem:[#allocation6 + $0x38] sm:$0xff]
    %v107 = vld [vmem:[#allocation6 + $0x40] sm:$0xff]
    %v108 = vld [vmem:[#allocation6 + $0x48] sm:$0xff]
    %v109 = vld [vmem:[#allocation6 + $0x50] sm:$0xff]
    %v110 = vld [vmem:[#allocation6 + $0x58] sm:$0xff]
    %v111 = vld [vmem:[#allocation6 + $0x60] sm:$0xff]
    %v112 = vld [vmem:[#allocation6 + $0x68] sm:$0xff]
    %v113 = vld [vmem:[#allocation6 + $0x70] sm:$0xff]
    %v114 = vld [vmem:[#allocation6 + $0x78] sm:$0xff]
    %v115 = vld [vmem:[#allocation6 + $0x80] sm:$0xff]
    %v116 = vld [vmem:[#allocation6 + $0x88] sm:$0xff]
    %v117 = vld [vmem:[#allocation6 + $0x90] sm:$0xff]
    %v118 = vld [vmem:[#allocation6 + $0x98] sm:$0xff]
    %v119 = vld [vmem:[#allocation6 + $0xa0] sm:$0xff]
    %v120 = vld [vmem:[#allocation6 + $0xa8] sm:$0xff]
    %v121 = vld [vmem:[#allocation6 + $0xb0] sm:$0xff]
    %v122 = vld [vmem:[#allocation6 + $0xb8] sm:$0xff]
    %v123 = vld [vmem:[#allocation6 + $0xc0] sm:$0xff]
    %v124 = vld [vmem:[#allocation6 + $0xc8] sm:$0xff]
    %v125 = vld [vmem:[#allocation6 + $0xd0] sm:$0xff]
    %v126 = vld [vmem:[#allocation6 + $0xd8] sm:$0xff]
    %v127 = vld [vmem:[#allocation6 + $0xe0] sm:$0xff]
    %v128 = vld [vmem:[#allocation6 + $0xe8] sm:$0xff]
    %v129 = vld [vmem:[#allocation6 + $0xf0] sm:$0xff]
    %v130 = vld [vmem:[#allocation6 + $0xf8] sm:$0xff]
    %v131 = vld [vmem:[#allocation6 + $0x100] sm:$0xff]
    %v132 = vld [vmem:[#allocation6 + $0x108] sm:$0xff]
    %v133 = vld [vmem:[#allocation6 + $0x110] sm:$0xff]
    %v134 = vld [vmem:[#allocation6 + $0x118] sm:$0xff]
    %v135 = vld [vmem:[#allocation6 + $0x120] sm:$0xff]
    %v136 = vld [vmem:[#allocation6 + $0x128] sm:$0xff]
    %v137 = vld [vmem:[#allocation6 + $0x130] sm:$0xff]
    %v138 = vld [vmem:[#allocation6 + $0x138] sm:$0xff]
    %v139 = vld [vmem:[#allocation6 + $0x140] sm:$0xff]
    %v140 = vld [vmem:[#allocation6 + $0x148] sm:$0xff]
    %v141 = vld [vmem:[#allocation6 + $0x150] sm:$0xff]
    %v142 = vld [vmem:[#allocation6 + $0x158] sm:$0xff]
    %v143 = vld [vmem:[#allocation6 + $0x160] sm:$0xff]
    %v144 = vld [vmem:[#allocation6 + $0x168] sm:$0xff]
    %v145 = vld [vmem:[#allocation6 + $0x170] sm:$0xff]
    %v146 = vld [vmem:[#allocation6 + $0x178] sm:$0xff]
    %v147 = vld [vmem:[#allocation6 + $0x180] sm:$0xff]
    %v148 = vld [vmem:[#allocation6 + $0x188] sm:$0xff]
    %v149 = vld [vmem:[#allocation6 + $0x190] sm:$0xff]
    %v150 = vld [vmem:[#allocation6 + $0x198] sm:$0xff]
    %v151 = vld [vmem:[#allocation6 + $0x1a0] sm:$0xff]
    %v152 = vld [vmem:[#allocation6 + $0x1a8] sm:$0xff]
    %v153 = vld [vmem:[#allocation6 + $0x1b0] sm:$0xff]
    %v154 = vld [vmem:[#allocation6 + $0x1b8] sm:$0xff]
    %v155 = vld [vmem:[#allocation6 + $0x1c0] sm:$0xff]
    %v156 = vld [vmem:[#allocation6 + $0x1c8] sm:$0xff]
    %v157 = vld [vmem:[#allocation6 + $0x1d0] sm:$0xff]
    %v158 = vld [vmem:[#allocation6 + $0x1d8] sm:$0xff]
    %v159 = vld [vmem:[#allocation6 + $0x1e0] sm:$0xff]
    %v160 = vld [vmem:[#allocation6 + $0x1e8] sm:$0xff]
    %v161 = vld [vmem:[#allocation6 + $0x1f0] sm:$0xff]
    %v162 = vld [vmem:[#allocation6 + $0x1f8] sm:$0xff]
    %v163 = vld [vmem:[#allocation6 + $0x200] sm:$0xff]
    %v164 = vld [vmem:[#allocation6 + $0x208] sm:$0xff]
    %v165 = vld [vmem:[#allocation6 + $0x210] sm:$0xff]
    %v166 = vld [vmem:[#allocation6 + $0x218] sm:$0xff]
    %v167 = vld [vmem:[#allocation6 + $0x220] sm:$0xff]
    %v168 = vld [vmem:[#allocation6 + $0x228] sm:$0xff]
    %v169 = vld [vmem:[#allocation6 + $0x230] sm:$0xff]
    %v170 = vld [vmem:[#allocation6 + $0x238] sm:$0xff]
    %v171 = vld [vmem:[#allocation6 + $0x240] sm:$0xff]
    %v172 = vld [vmem:[#allocation6 + $0x248] sm:$0xff]
    %v173 = vld [vmem:[#allocation6 + $0x250] sm:$0xff]
    %v174 = vld [vmem:[#allocation6 + $0x258] sm:$0xff]
    %v175 = vld [vmem:[#allocation6 + $0x260] sm:$0xff]
    %v176 = vld [vmem:[#allocation6 + $0x268] sm:$0xff]
    %v177 = vld [vmem:[#allocation6 + $0x270] sm:$0xff]
    %v178 = vld [vmem:[#allocation6 + $0x278] sm:$0xff]
    %v179 = vld [vmem:[#allocation6 + $0x280] sm:$0xff]
    %v180 = vld [vmem:[#allocation6 + $0x288] sm:$0xff]
    %v181 = vld [vmem:[#allocation6 + $0x290] sm:$0xff]
    %v182 = vld [vmem:[#allocation6 + $0x298] sm:$0xff]
    %v183 = vld [vmem:[#allocation6 + $0x2a0] sm:$0xff]
    %v184 = vld [vmem:[#allocation6 + $0x2a8] sm:$0xff]
    %v185 = vld [vmem:[#allocation6 + $0x2b0] sm:$0xff]
    %v186 = vld [vmem:[#allocation6 + $0x2b8] sm:$0xff]
    %v187 = vld [vmem:[#allocation6 + $0x2c0] sm:$0xff]
    %v188 = vld [vmem:[#allocation6 + $0x2c8] sm:$0xff]
    %v189 = vld [vmem:[#allocation6 + $0x2d0] sm:$0xff]
    %v190 = vld [vmem:[#allocation6 + $0x2d8] sm:$0xff]
    %v191 = vld [vmem:[#allocation6 + $0x2e0] sm:$0xff]
    %v192 = vld [vmem:[#allocation6 + $0x2e8] sm:$0xff]
    %v193 = vld [vmem:[#allocation6 + $0x2f0] sm:$0xff]
    %v194 = vld [vmem:[#allocation6 + $0x2f8] sm:$0xff]
    %v195 = vld [vmem:[#allocation6 + $0x300] sm:$0xff]
    %v196 = vld [vmem:[#allocation6 + $0x308] sm:$0xff]
    %v197 = vld [vmem:[#allocation6 + $0x310] sm:$0xff]
    %v198 = vld [vmem:[#allocation6 + $0x318] sm:$0xff]
    %v199 = vld [vmem:[#allocation6 + $0x320] sm:$0xff]
    %v200 = vld [vmem:[#allocation6 + $0x328] sm:$0xff]
    %v201 = vld [vmem:[#allocation6 + $0x330] sm:$0xff]
    %v202 = vld [vmem:[#allocation6 + $0x338] sm:$0xff]
    %v203 = vld [vmem:[#allocation6 + $0x340] sm:$0xff]
    %v204 = vld [vmem:[#allocation6 + $0x348] sm:$0xff]
    %v205 = vld [vmem:[#allocation6 + $0x350] sm:$0xff]
    %v206 = vld [vmem:[#allocation6 + $0x358] sm:$0xff]
    %v207 = vld [vmem:[#allocation6 + $0x360] sm:$0xff]
    %v208 = vld [vmem:[#allocation6 + $0x368] sm:$0xff]
    %v209 = vld [vmem:[#allocation6 + $0x370] sm:$0xff]
    %v210 = vld [vmem:[#allocation6 + $0x378] sm:$0xff]
    %v211 = vld [vmem:[#allocation6 + $0x380] sm:$0xff]
    %v212 = vld [vmem:[#allocation6 + $0x388] sm:$0xff]
    %v213 = vld [vmem:[#allocation6 + $0x390] sm:$0xff]
    %v214 = vld [vmem:[#allocation6 + $0x398] sm:$0xff]
    %v215 = vld [vmem:[#allocation6 + $0x3a0] sm:$0xff]
    %v216 = vld [vmem:[#allocation6 + $0x3a8] sm:$0xff]
    %v217 = vld [vmem:[#allocation6 + $0x3b0] sm:$0xff]
    %v218 = vld [vmem:[#allocation6 + $0x3b8] sm:$0xff]
    %v219 = vld [vmem:[#allocation6 + $0x3c0] sm:$0xff]
    %v220 = vld [vmem:[#allocation6 + $0x3c8] sm:$0xff]
    %v221 = vld [vmem:[#allocation6 + $0x3d0] sm:$0xff]
    %v222 = vld [vmem:[#allocation6 + $0x3d8] sm:$0xff]
    %v223 = vld [vmem:[#allocation6 + $0x3e0] sm:$0xff]
    %v224 = vld [vmem:[#allocation6 + $0x3e8] sm:$0xff]
    %v225 = vld [vmem:[#allocation6 + $0x3f0] sm:$0xff]
    %v226 = vld [vmem:[#allocation6 + $0x3f8] sm:$0xff]
    %v227 = vld [vmem:[#allocation6 + $0x400] sm:$0xff]
    %v228 = vld [vmem:[#allocation6 + $0x408] sm:$0xff]
    %v229 = vld [vmem:[#allocation6 + $0x410] sm:$0xff]
    %v230 = vld [vmem:[#allocation6 + $0x418] sm:$0xff]
    %v231 = vld [vmem:[#allocation6 + $0x420] sm:$0xff]
    %v232 = vld [vmem:[#allocation6 + $0x428] sm:$0xff]
    %v233 = vld [vmem:[#allocation6 + $0x430] sm:$0xff]
    %v234 = vld [vmem:[#allocation6 + $0x438] sm:$0xff]
    %v235 = vld [vmem:[#allocation6 + $0x440] sm:$0xff]
    %v236 = vld [vmem:[#allocation6 + $0x448] sm:$0xff]
    %v237 = vld [vmem:[#allocation6 + $0x450] sm:$0xff]
    %v238 = vld [vmem:[#allocation6 + $0x458] sm:$0xff]
    %v239 = vld [vmem:[#allocation6 + $0x460] sm:$0xff]
    %v240 = vld [vmem:[#allocation6 + $0x468] sm:$0xff]
    %v241 = vld [vmem:[#allocation6 + $0x470] sm:$0xff]
    %v242 = vld [vmem:[#allocation6 + $0x478] sm:$0xff]
    %v243 = vld [vmem:[#allocation6 + $0x480] sm:$0xff]
    %v244 = vld [vmem:[#allocation6 + $0x488] sm:$0xff]
    %v245 = vld [vmem:[#allocation6 + $0x490] sm:$0xff]
    %v246 = vld [vmem:[#allocation6 + $0x498] sm:$0xff]
    %v247 = vld [vmem:[#allocation6 + $0x4a0] sm:$0xff]
    %v248 = vld [vmem:[#allocation6 + $0x4a8] sm:$0xff]
    %v249 = vld [vmem:[#allocation6 + $0x4b0] sm:$0xff]
    %v250 = vld [vmem:[#allocation6 + $0x4b8] sm:$0xff]
    %v251 = vld [vmem:[#allocation6 + $0x4c0] sm:$0xff]
    %v252 = vld [vmem:[#allocation6 + $0x4c8] sm:$0xff]
    %v253 = vld [vmem:[#allocation6 + $0x4d0] sm:$0xff]
    %v254 = vld [vmem:[#allocation6 + $0x4d8] sm:$0xff]
    %v255 = vld [vmem:[#allocation6 + $0x4e0] sm:$0xff]
    %v256 = vld [vmem:[#allocation6 + $0x4e8] sm:$0xff]
    %v257 = vld [vmem:[#allocation6 + $0x4f0] sm:$0xff]
    %v258 = vld [vmem:[#allocation6 + $0x4f8] sm:$0xff]
    %v259 = vld [vmem:[#allocation6 + $0x500] sm:$0xff]
    %v260 = vld [vmem:[#allocation6 + $0x508] sm:$0xff]
    %v261 = vld [vmem:[#allocation6 + $0x510] sm:$0xff]
    %v262 = vld [vmem:[#allocation6 + $0x518] sm:$0xff]
    %v263 = vld [vmem:[#allocation6 + $0x520] sm:$0xff]
    %v264 = vld [vmem:[#allocation6 + $0x528] sm:$0xff]
    %v265 = vld [vmem:[#allocation6 + $0x530] sm:$0xff]
    %v266 = vld [vmem:[#allocation6 + $0x538] sm:$0xff]
    %v267 = vld [vmem:[#allocation6 + $0x540] sm:$0xff]
    %v268 = vld [vmem:[#allocation6 + $0x548] sm:$0xff]
    %v269 = vld [vmem:[#allocation6 + $0x550] sm:$0xff]
    %v270 = vld [vmem:[#allocation6 + $0x558] sm:$0xff]
    %v271 = vld [vmem:[#allocation6 + $0x560] sm:$0xff]
    %v272 = vld [vmem:[#allocation6 + $0x568] sm:$0xff]
    %v273 = vld [vmem:[#allocation6 + $0x570] sm:$0xff]
    %v274 = vld [vmem:[#allocation6 + $0x578] sm:$0xff]
    %v275 = vld [vmem:[#allocation6 + $0x580] sm:$0xff]
    %v276 = vld [vmem:[#allocation6 + $0x588] sm:$0xff]
    %v277 = vld [vmem:[#allocation6 + $0x590] sm:$0xff]
    %v278 = vld [vmem:[#allocation6 + $0x598] sm:$0xff]
    %v279 = vld [vmem:[#allocation6 + $0x5a0] sm:$0xff]
    %v280 = vld [vmem:[#allocation6 + $0x5a8] sm:$0xff]
    %v281 = vld [vmem:[#allocation6 + $0x5b0] sm:$0xff]
    %v282 = vld [vmem:[#allocation6 + $0x5b8] sm:$0xff]
    %v283 = vld [vmem:[#allocation6 + $0x5c0] sm:$0xff]
    %v284 = vld [vmem:[#allocation6 + $0x5c8] sm:$0xff]
    %v285 = vld [vmem:[#allocation6 + $0x5d0] sm:$0xff]
    %v286 = vld [vmem:[#allocation6 + $0x5d8] sm:$0xff]
    %v287 = vld [vmem:[#allocation6 + $0x5e0] sm:$0xff]
    %v288 = vld [vmem:[#allocation6 + $0x5e8] sm:$0xff]
    %v289 = vld [vmem:[#allocation6 + $0x5f0] sm:$0xff]
    %v290 = vld [vmem:[#allocation6 + $0x5f8] sm:$0xff]
    %v291 = vld [vmem:[#allocation6 + $0x600] sm:$0xff]
    %v292 = vld [vmem:[#allocation6 + $0x608] sm:$0xff]
    %v293 = vld [vmem:[#allocation6 + $0x610] sm:$0xff]
    %v294 = vld [vmem:[#allocation6 + $0x618] sm:$0xff]
    %v295 = vld [vmem:[#allocation6 + $0x620] sm:$0xff]
    %v296 = vld [vmem:[#allocation6 + $0x628] sm:$0xff]
    %v297 = vld [vmem:[#allocation6 + $0x630] sm:$0xff]
    %v298 = vld [vmem:[#allocation6 + $0x638] sm:$0xff]
    %v299 = vld [vmem:[#allocation6 + $0x640] sm:$0xff]
    %v300 = vld [vmem:[#allocation6 + $0x648] sm:$0xff]
    %v301 = vld [vmem:[#allocation6 + $0x650] sm:$0xff]
    %v302 = vld [vmem:[#allocation6 + $0x658] sm:$0xff]
    %v303 = vld [vmem:[#allocation6 + $0x660] sm:$0xff]
    %v304 = vld [vmem:[#allocation6 + $0x668] sm:$0xff]
    %v305 = vld [vmem:[#allocation6 + $0x670] sm:$0xff]
    %v306 = vld [vmem:[#allocation6 + $0x678] sm:$0xff]
    %v307 = vld [vmem:[#allocation6 + $0x680] sm:$0xff]
    %v308 = vld [vmem:[#allocation6 + $0x688] sm:$0xff]
    %v309 = vld [vmem:[#allocation6 + $0x690] sm:$0xff]
    %v310 = vld [vmem:[#allocation6 + $0x698] sm:$0xff]
    %v311 = vld [vmem:[#allocation6 + $0x6a0] sm:$0xff]
    %v312 = vld [vmem:[#allocation6 + $0x6a8] sm:$0xff]
    %v313 = vld [vmem:[#allocation6 + $0x6b0] sm:$0xff]
    %v314 = vld [vmem:[#allocation6 + $0x6b8] sm:$0xff]
    %v315 = vld [vmem:[#allocation6 + $0x6c0] sm:$0xff]
    %v316 = vld [vmem:[#allocation6 + $0x6c8] sm:$0xff]
    %v317 = vld [vmem:[#allocation6 + $0x6d0] sm:$0xff]
    %v318 = vld [vmem:[#allocation6 + $0x6d8] sm:$0xff]
    %v319 = vld [vmem:[#allocation6 + $0x6e0] sm:$0xff]
    %v320 = vld [vmem:[#allocation6 + $0x6e8] sm:$0xff]
    %v321 = vld [vmem:[#allocation6 + $0x6f0] sm:$0xff]
    %v322 = vld [vmem:[#allocation6 + $0x6f8] sm:$0xff]
    %v323 = vld [vmem:[#allocation6 + $0x700] sm:$0xff]
    %v324 = vld [vmem:[#allocation6 + $0x708] sm:$0xff]
    %v325 = vld [vmem:[#allocation6 + $0x710] sm:$0xff]
    %v326 = vld [vmem:[#allocation6 + $0x718] sm:$0xff]
    %v327 = vld [vmem:[#allocation6 + $0x720] sm:$0xff]
    %v328 = vld [vmem:[#allocation6 + $0x728] sm:$0xff]
    %v329 = vld [vmem:[#allocation6 + $0x730] sm:$0xff]
    %v330 = vld [vmem:[#allocation6 + $0x738] sm:$0xff]
    %v331 = vld [vmem:[#allocation6 + $0x740] sm:$0xff]
    %v332 = vld [vmem:[#allocation6 + $0x748] sm:$0xff]
    %v333 = vld [vmem:[#allocation6 + $0x750] sm:$0xff]
    %v334 = vld [vmem:[#allocation6 + $0x758] sm:$0xff]
    %v335 = vld [vmem:[#allocation6 + $0x760] sm:$0xff]
    %v336 = vld [vmem:[#allocation6 + $0x768] sm:$0xff]
    %v337 = vld [vmem:[#allocation6 + $0x770] sm:$0xff]
    %v338 = vld [vmem:[#allocation6 + $0x778] sm:$0xff]
    %v339 = vld [vmem:[#allocation6 + $0x780] sm:$0xff]
    %v340 = vld [vmem:[#allocation6 + $0x788] sm:$0xff]
    %v341 = vld [vmem:[#allocation6 + $0x790] sm:$0xff]
    %v342 = vld [vmem:[#allocation6 + $0x798] sm:$0xff]
    %v343 = vld [vmem:[#allocation6 + $0x7a0] sm:$0xff]
    %v344 = vld [vmem:[#allocation6 + $0x7a8] sm:$0xff]
    %v345 = vld [vmem:[#allocation6 + $0x7b0] sm:$0xff]
    %v346 = vld [vmem:[#allocation6 + $0x7b8] sm:$0xff]
    %v347 = vld [vmem:[#allocation6 + $0x7c0] sm:$0xff]
    %v348 = vld [vmem:[#allocation6 + $0x7c8] sm:$0xff]
    %v349 = vld [vmem:[#allocation6 + $0x7d0] sm:$0xff]
    %v350 = vld [vmem:[#allocation6 + $0x7d8] sm:$0xff]
    %v351 = vld [vmem:[#allocation6 + $0x7e0] sm:$0xff]
    %v352 = vld [vmem:[#allocation6 + $0x7e8] sm:$0xff]
    %v353 = vld [vmem:[#allocation6 + $0x7f0] sm:$0xff]
    %v354 = vld [vmem:[#allocation6 + $0x7f8] sm:$0xff]
    %v355 = vld [vmem:[#allocation6 + $0x800] sm:$0xff]
    %v356 = vld [vmem:[#allocation6 + $0x808] sm:$0xff]
    %v357 = vld [vmem:[#allocation6 + $0x810] sm:$0xff]
    %v358 = vld [vmem:[#allocation6 + $0x818] sm:$0xff]
    %v359 = vld [vmem:[#allocation6 + $0x820] sm:$0xff]
    %v360 = vld [vmem:[#allocation6 + $0x828] sm:$0xff]
    %v361 = vld [vmem:[#allocation6 + $0x830] sm:$0xff]
    %v362 = vld [vmem:[#allocation6 + $0x838] sm:$0xff]
    %v363 = vld [vmem:[#allocation6 + $0x840] sm:$0xff]
    %v364 = vld [vmem:[#allocation6 + $0x848] sm:$0xff]
    %v365 = vld [vmem:[#allocation6 + $0x850] sm:$0xff]
    %v366 = vld [vmem:[#allocation6 + $0x858] sm:$0xff]
    %v367 = vld [vmem:[#allocation6 + $0x860] sm:$0xff]
    %v368 = vld [vmem:[#allocation6 + $0x868] sm:$0xff]
    %v369 = vld [vmem:[#allocation6 + $0x870] sm:$0xff]
    %v370 = vld [vmem:[#allocation6 + $0x878] sm:$0xff]
    %v371 = vld [vmem:[#allocation6 + $0x880] sm:$0xff]
    %v372 = vld [vmem:[#allocation6 + $0x888] sm:$0xff]
    %v373 = vld [vmem:[#allocation6 + $0x890] sm:$0xff]
    %v374 = vld [vmem:[#allocation6 + $0x898] sm:$0xff]
    %v375 = vld [vmem:[#allocation6 + $0x8a0] sm:$0xff]
    %v376 = vld [vmem:[#allocation6 + $0x8a8] sm:$0xff]
    %v377 = vld [vmem:[#allocation6 + $0x8b0] sm:$0xff]
    %v378 = vld [vmem:[#allocation6 + $0x8b8] sm:$0xff]
    %v379 = vld [vmem:[#allocation6 + $0x8c0] sm:$0xff]
    %v380 = vld [vmem:[#allocation6 + $0x8c8] sm:$0xff]
    %v381 = vld [vmem:[#allocation6 + $0x8d0] sm:$0xff]
    %v382 = vld [vmem:[#allocation6 + $0x8d8] sm:$0xff]
    %v383 = vld [vmem:[#allocation6 + $0x8e0] sm:$0xff]
    %v384 = vld [vmem:[#allocation6 + $0x8e8] sm:$0xff]
    %v385 = vld [vmem:[#allocation6 + $0x8f0] sm:$0xff]
    %v386 = vld [vmem:[#allocation6 + $0x8f8] sm:$0xff]
    %v387 = vld [vmem:[#allocation8] sm:$0xff]
    %v388 = vld [vmem:[#allocation8 + $0x8] sm:$0xf]
    %v391 = vlaneseq
    %v392 = vshrl.u32 %v391, 7
    %v393 = vsub.s32 0, %v392
    %v394 = vrot.slane %v387, %v393
    %v395 = vlaneseq
    %v396 = vshrl.u32 %v395, 7
    %v397 = vsub.s32 1, %v396
    %v398 = vrot.slane %v387, %v397
    %v399 = vlaneseq
    %v400 = vshrl.u32 %v399, 7
    %v401 = vsub.s32 2, %v400
    %v402 = vrot.slane %v387, %v401
    %v403 = vlaneseq
    %v404 = vshrl.u32 %v403, 7
    %v405 = vsub.s32 3, %v404
    %v406 = vrot.slane %v387, %v405
    %v407 = vlaneseq
    %v408 = vshrl.u32 %v407, 7
    %v409 = vsub.s32 4, %v408
    %v410 = vrot.slane %v387, %v409
    %v411 = vlaneseq
    %v412 = vshrl.u32 %v411, 7
    %v413 = vsub.s32 5, %v412
    %v414 = vrot.slane %v387, %v413
    %v415 = vlaneseq
    %v416 = vshrl.u32 %v415, 7
    %v417 = vsub.s32 6, %v416
    %v418 = vrot.slane %v387, %v417
    %v419 = vlaneseq
    %v420 = vshrl.u32 %v419, 7
    %v421 = vsub.s32 7, %v420
    %v422 = vrot.slane %v387, %v421
    %v423 = vlaneseq
    %v424 = vshrl.u32 %v423, 7
    %v425 = vsub.s32 0, %v424
    %v426 = vrot.slane %v388, %v425
    %v427 = vlaneseq
    %v428 = vshrl.u32 %v427, 7
    %v429 = vsub.s32 1, %v428
    %v430 = vrot.slane %v388, %v429
    %v431 = vlaneseq
    %v432 = vshrl.u32 %v431, 7
    %v433 = vsub.s32 2, %v432
    %v434 = vrot.slane %v388, %v433
    %v435 = vlaneseq
    %v436 = vshrl.u32 %v435, 7
    %v437 = vsub.s32 3, %v436
    %v438 = vrot.slane %v388, %v437
    %v739 = vunpack.c.l.b16 %v99
    %v740 = vunpack.c.h.b16 %v99
    %v741 = vunpack.c.l.b16 %v100
    %v742 = vunpack.c.h.b16 %v100
    %v743 = vunpack.c.l.b16 %v101
    %v744 = vunpack.c.h.b16 %v101
    %v745 = vunpack.c.l.b16 %v102
    %v746 = vunpack.c.h.b16 %v102
    %v747 = vunpack.c.l.b16 %v103
    %v748 = vunpack.c.h.b16 %v103
    %v749 = vunpack.c.l.b16 %v104
    %v750 = vunpack.c.h.b16 %v104
    %v751 = vunpack.c.l.b16 %v105
    %v752 = vunpack.c.h.b16 %v105
    %v753 = vunpack.c.l.b16 %v106
    %v754 = vunpack.c.h.b16 %v106
    %v755 = vunpack.c.l.b16 %v107
    %v756 = vunpack.c.h.b16 %v107
    %v757 = vunpack.c.l.b16 %v108
    %v758 = vunpack.c.h.b16 %v108
    %v759 = vunpack.c.l.b16 %v109
    %v760 = vunpack.c.h.b16 %v109
    %v761 = vunpack.c.l.b16 %v110
    %v762 = vunpack.c.h.b16 %v110
    %v763 = vunpack.c.l.b16 %v111
    %v764 = vunpack.c.h.b16 %v111
    %v765 = vunpack.c.l.b16 %v112
    %v766 = vunpack.c.h.b16 %v112
    %v767 = vunpack.c.l.b16 %v113
    %v768 = vunpack.c.h.b16 %v113
    %v769 = vunpack.c.l.b16 %v114
    %v770 = vunpack.c.h.b16 %v114
    %v771 = vunpack.c.l.b16 %v115
    %v772 = vunpack.c.h.b16 %v115
    %v773 = vunpack.c.l.b16 %v116
    %v774 = vunpack.c.h.b16 %v116
    %v775 = vunpack.c.l.b16 %v117
    %v776 = vunpack.c.h.b16 %v117
    %v777 = vunpack.c.l.b16 %v118
    %v778 = vunpack.c.h.b16 %v118
    %v779 = vunpack.c.l.b16 %v119
    %v780 = vunpack.c.h.b16 %v119
    %v781 = vunpack.c.l.b16 %v120
    %v782 = vunpack.c.h.b16 %v120
    %v783 = vunpack.c.l.b16 %v121
    %v784 = vunpack.c.h.b16 %v121
    %v785 = vunpack.c.l.b16 %v122
    %v786 = vunpack.c.h.b16 %v122
    %v787 = vunpack.c.l.b16 %v123
    %v788 = vunpack.c.h.b16 %v123
    %v789 = vunpack.c.l.b16 %v124
    %v790 = vunpack.c.h.b16 %v124
    %v791 = vunpack.c.l.b16 %v125
    %v792 = vunpack.c.h.b16 %v125
    %v793 = vunpack.c.l.b16 %v126
    %v794 = vunpack.c.h.b16 %v126
    %v795 = vunpack.c.l.b16 %v127
    %v796 = vunpack.c.h.b16 %v127
    %v797 = vunpack.c.l.b16 %v128
    %v798 = vunpack.c.h.b16 %v128
    %v799 = vunpack.c.l.b16 %v129
    %v800 = vunpack.c.h.b16 %v129
    %v801 = vunpack.c.l.b16 %v130
    %v802 = vunpack.c.h.b16 %v130
    %v803 = vunpack.c.l.b16 %v131
    %v804 = vunpack.c.h.b16 %v131
    %v805 = vunpack.c.l.b16 %v132
    %v806 = vunpack.c.h.b16 %v132
    %v807 = vunpack.c.l.b16 %v133
    %v808 = vunpack.c.h.b16 %v133
    %v809 = vunpack.c.l.b16 %v134
    %v810 = vunpack.c.h.b16 %v134
    %v811 = vunpack.c.l.b16 %v135
    %v812 = vunpack.c.h.b16 %v135
    %v813 = vunpack.c.l.b16 %v136
    %v814 = vunpack.c.h.b16 %v136
    %v815 = vunpack.c.l.b16 %v137
    %v816 = vunpack.c.h.b16 %v137
    %v817 = vunpack.c.l.b16 %v138
    %v818 = vunpack.c.h.b16 %v138
    %v819 = vunpack.c.l.b16 %v139
    %v820 = vunpack.c.h.b16 %v139
    %v821 = vunpack.c.l.b16 %v140
    %v822 = vunpack.c.h.b16 %v140
    %v823 = vunpack.c.l.b16 %v141
    %v824 = vunpack.c.h.b16 %v141
    %v825 = vunpack.c.l.b16 %v142
    %v826 = vunpack.c.h.b16 %v142
    %v827 = vunpack.c.l.b16 %v143
    %v828 = vunpack.c.h.b16 %v143
    %v829 = vunpack.c.l.b16 %v144
    %v830 = vunpack.c.h.b16 %v144
    %v831 = vunpack.c.l.b16 %v145
    %v832 = vunpack.c.h.b16 %v145
    %v833 = vunpack.c.l.b16 %v146
    %v834 = vunpack.c.h.b16 %v146
    %v835 = vunpack.c.l.b16 %v147
    %v836 = vunpack.c.h.b16 %v147
    %v837 = vunpack.c.l.b16 %v148
    %v838 = vunpack.c.h.b16 %v148
    %v839 = vunpack.c.l.b16 %v149
    %v840 = vunpack.c.h.b16 %v149
    %v841 = vunpack.c.l.b16 %v150
    %v842 = vunpack.c.h.b16 %v150
    %v843 = vunpack.c.l.b16 %v151
    %v844 = vunpack.c.h.b16 %v151
    %v845 = vunpack.c.l.b16 %v152
    %v846 = vunpack.c.h.b16 %v152
    %v847 = vunpack.c.l.b16 %v153
    %v848 = vunpack.c.h.b16 %v153
    %v849 = vunpack.c.l.b16 %v154
    %v850 = vunpack.c.h.b16 %v154
    %v851 = vunpack.c.l.b16 %v155
    %v852 = vunpack.c.h.b16 %v155
    %v853 = vunpack.c.l.b16 %v156
    %v854 = vunpack.c.h.b16 %v156
    %v855 = vunpack.c.l.b16 %v157
    %v856 = vunpack.c.h.b16 %v157
    %v857 = vunpack.c.l.b16 %v158
    %v858 = vunpack.c.h.b16 %v158
    %v859 = vunpack.c.l.b16 %v159
    %v860 = vunpack.c.h.b16 %v159
    %v861 = vunpack.c.l.b16 %v160
    %v862 = vunpack.c.h.b16 %v160
    %v863 = vunpack.c.l.b16 %v161
    %v864 = vunpack.c.h.b16 %v161
    %v865 = vunpack.c.l.b16 %v162
    %v866 = vunpack.c.h.b16 %v162
    %v867 = vunpack.c.l.b16 %v163
    %v868 = vunpack.c.h.b16 %v163
    %v869 = vunpack.c.l.b16 %v164
    %v870 = vunpack.c.h.b16 %v164
    %v871 = vunpack.c.l.b16 %v165
    %v872 = vunpack.c.h.b16 %v165
    %v873 = vunpack.c.l.b16 %v166
    %v874 = vunpack.c.h.b16 %v166
    %v875 = vunpack.c.l.b16 %v167
    %v876 = vunpack.c.h.b16 %v167
    %v877 = vunpack.c.l.b16 %v168
    %v878 = vunpack.c.h.b16 %v168
    %v879 = vunpack.c.l.b16 %v169
    %v880 = vunpack.c.h.b16 %v169
    %v881 = vunpack.c.l.b16 %v170
    %v882 = vunpack.c.h.b16 %v170
    %v883 = vunpack.c.l.b16 %v171
    %v884 = vunpack.c.h.b16 %v171
    %v885 = vunpack.c.l.b16 %v172
    %v886 = vunpack.c.h.b16 %v172
    %v887 = vunpack.c.l.b16 %v173
    %v888 = vunpack.c.h.b16 %v173
    %v889 = vunpack.c.l.b16 %v174
    %v890 = vunpack.c.h.b16 %v174
    %v891 = vunpack.c.l.b16 %v175
    %v892 = vunpack.c.h.b16 %v175
    %v893 = vunpack.c.l.b16 %v176
    %v894 = vunpack.c.h.b16 %v176
    %v895 = vunpack.c.l.b16 %v177
    %v896 = vunpack.c.h.b16 %v177
    %v897 = vunpack.c.l.b16 %v178
    %v898 = vunpack.c.h.b16 %v178
    %v899 = vunpack.c.l.b16 %v179
    %v900 = vunpack.c.h.b16 %v179
    %v901 = vunpack.c.l.b16 %v180
    %v902 = vunpack.c.h.b16 %v180
    %v903 = vunpack.c.l.b16 %v181
    %v904 = vunpack.c.h.b16 %v181
    %v905 = vunpack.c.l.b16 %v182
    %v906 = vunpack.c.h.b16 %v182
    %v907 = vunpack.c.l.b16 %v183
    %v908 = vunpack.c.h.b16 %v183
    %v909 = vunpack.c.l.b16 %v184
    %v910 = vunpack.c.h.b16 %v184
    %v911 = vunpack.c.l.b16 %v185
    %v912 = vunpack.c.h.b16 %v185
    %v913 = vunpack.c.l.b16 %v186
    %v914 = vunpack.c.h.b16 %v186
    %v915 = vunpack.c.l.b16 %v187
    %v916 = vunpack.c.h.b16 %v187
    %v917 = vunpack.c.l.b16 %v188
    %v918 = vunpack.c.h.b16 %v188
    %v919 = vunpack.c.l.b16 %v189
    %v920 = vunpack.c.h.b16 %v189
    %v921 = vunpack.c.l.b16 %v190
    %v922 = vunpack.c.h.b16 %v190
    %v923 = vunpack.c.l.b16 %v191
    %v924 = vunpack.c.h.b16 %v191
    %v925 = vunpack.c.l.b16 %v192
    %v926 = vunpack.c.h.b16 %v192
    %v927 = vunpack.c.l.b16 %v193
    %v928 = vunpack.c.h.b16 %v193
    %v929 = vunpack.c.l.b16 %v194
    %v930 = vunpack.c.h.b16 %v194
    %v931 = vunpack.c.l.b16 %v195
    %v932 = vunpack.c.h.b16 %v195
    %v933 = vunpack.c.l.b16 %v196
    %v934 = vunpack.c.h.b16 %v196
    %v935 = vunpack.c.l.b16 %v197
    %v936 = vunpack.c.h.b16 %v197
    %v937 = vunpack.c.l.b16 %v198
    %v938 = vunpack.c.h.b16 %v198
    %v939 = vunpack.c.l.b16 %v199
    %v940 = vunpack.c.h.b16 %v199
    %v941 = vunpack.c.l.b16 %v200
    %v942 = vunpack.c.h.b16 %v200
    %v943 = vunpack.c.l.b16 %v201
    %v944 = vunpack.c.h.b16 %v201
    %v945 = vunpack.c.l.b16 %v202
    %v946 = vunpack.c.h.b16 %v202
    %v947 = vunpack.c.l.b16 %v203
    %v948 = vunpack.c.h.b16 %v203
    %v949 = vunpack.c.l.b16 %v204
    %v950 = vunpack.c.h.b16 %v204
    %v951 = vunpack.c.l.b16 %v205
    %v952 = vunpack.c.h.b16 %v205
    %v953 = vunpack.c.l.b16 %v206
    %v954 = vunpack.c.h.b16 %v206
    %v955 = vunpack.c.l.b16 %v207
    %v956 = vunpack.c.h.b16 %v207
    %v957 = vunpack.c.l.b16 %v208
    %v958 = vunpack.c.h.b16 %v208
    %v959 = vunpack.c.l.b16 %v209
    %v960 = vunpack.c.h.b16 %v209
    %v961 = vunpack.c.l.b16 %v210
    %v962 = vunpack.c.h.b16 %v210
    %v963 = vunpack.c.l.b16 %v211
    %v964 = vunpack.c.h.b16 %v211
    %v965 = vunpack.c.l.b16 %v212
    %v966 = vunpack.c.h.b16 %v212
    %v967 = vunpack.c.l.b16 %v213
    %v968 = vunpack.c.h.b16 %v213
    %v969 = vunpack.c.l.b16 %v214
    %v970 = vunpack.c.h.b16 %v214
    %v971 = vunpack.c.l.b16 %v215
    %v972 = vunpack.c.h.b16 %v215
    %v973 = vunpack.c.l.b16 %v216
    %v974 = vunpack.c.h.b16 %v216
    %v975 = vunpack.c.l.b16 %v217
    %v976 = vunpack.c.h.b16 %v217
    %v977 = vunpack.c.l.b16 %v218
    %v978 = vunpack.c.h.b16 %v218
    %v979 = vunpack.c.l.b16 %v219
    %v980 = vunpack.c.h.b16 %v219
    %v981 = vunpack.c.l.b16 %v220
    %v982 = vunpack.c.h.b16 %v220
    %v983 = vunpack.c.l.b16 %v221
    %v984 = vunpack.c.h.b16 %v221
    %v985 = vunpack.c.l.b16 %v222
    %v986 = vunpack.c.h.b16 %v222
    %v987 = vunpack.c.l.b16 %v223
    %v988 = vunpack.c.h.b16 %v223
    %v989 = vunpack.c.l.b16 %v224
    %v990 = vunpack.c.h.b16 %v224
    %v991 = vunpack.c.l.b16 %v225
    %v992 = vunpack.c.h.b16 %v225
    %v993 = vunpack.c.l.b16 %v226
    %v994 = vunpack.c.h.b16 %v226
    %v995 = vunpack.c.l.b16 %v227
    %v996 = vunpack.c.h.b16 %v227
    %v997 = vunpack.c.l.b16 %v228
    %v998 = vunpack.c.h.b16 %v228
    %v999 = vunpack.c.l.b16 %v229
    %v1000 = vunpack.c.h.b16 %v229
    %v1001 = vunpack.c.l.b16 %v230
    %v1002 = vunpack.c.h.b16 %v230
    %v1003 = vunpack.c.l.b16 %v231
    %v1004 = vunpack.c.h.b16 %v231
    %v1005 = vunpack.c.l.b16 %v232
    %v1006 = vunpack.c.h.b16 %v232
    %v1007 = vunpack.c.l.b16 %v233
    %v1008 = vunpack.c.h.b16 %v233
    %v1009 = vunpack.c.l.b16 %v234
    %v1010 = vunpack.c.h.b16 %v234
    %v1011 = vunpack.c.l.b16 %v235
    %v1012 = vunpack.c.h.b16 %v235
    %v1013 = vunpack.c.l.b16 %v236
    %v1014 = vunpack.c.h.b16 %v236
    %v1015 = vunpack.c.l.b16 %v237
    %v1016 = vunpack.c.h.b16 %v237
    %v1017 = vunpack.c.l.b16 %v238
    %v1018 = vunpack.c.h.b16 %v238
    %v1019 = vunpack.c.l.b16 %v239
    %v1020 = vunpack.c.h.b16 %v239
    %v1021 = vunpack.c.l.b16 %v240
    %v1022 = vunpack.c.h.b16 %v240
    %v1023 = vunpack.c.l.b16 %v241
    %v1024 = vunpack.c.h.b16 %v241
    %v1025 = vunpack.c.l.b16 %v242
    %v1026 = vunpack.c.h.b16 %v242
    %v1027 = vunpack.c.l.b16 %v243
    %v1028 = vunpack.c.h.b16 %v243
    %v1029 = vunpack.c.l.b16 %v244
    %v1030 = vunpack.c.h.b16 %v244
    %v1031 = vunpack.c.l.b16 %v245
    %v1032 = vunpack.c.h.b16 %v245
    %v1033 = vunpack.c.l.b16 %v246
    %v1034 = vunpack.c.h.b16 %v246
    %v1035 = vunpack.c.l.b16 %v247
    %v1036 = vunpack.c.h.b16 %v247
    %v1037 = vunpack.c.l.b16 %v248
    %v1038 = vunpack.c.h.b16 %v248
    %v1039 = vunpack.c.l.b16 %v249
    %v1040 = vunpack.c.h.b16 %v249
    %v1041 = vunpack.c.l.b16 %v250
    %v1042 = vunpack.c.h.b16 %v250
    %v1043 = vunpack.c.l.b16 %v251
    %v1044 = vunpack.c.h.b16 %v251
    %v1045 = vunpack.c.l.b16 %v252
    %v1046 = vunpack.c.h.b16 %v252
    %v1047 = vunpack.c.l.b16 %v253
    %v1048 = vunpack.c.h.b16 %v253
    %v1049 = vunpack.c.l.b16 %v254
    %v1050 = vunpack.c.h.b16 %v254
    %v1051 = vunpack.c.l.b16 %v255
    %v1052 = vunpack.c.h.b16 %v255
    %v1053 = vunpack.c.l.b16 %v256
    %v1054 = vunpack.c.h.b16 %v256
    %v1055 = vunpack.c.l.b16 %v257
    %v1056 = vunpack.c.h.b16 %v257
    %v1057 = vunpack.c.l.b16 %v258
    %v1058 = vunpack.c.h.b16 %v258
    %v1059 = vunpack.c.l.b16 %v259
    %v1060 = vunpack.c.h.b16 %v259
    %v1061 = vunpack.c.l.b16 %v260
    %v1062 = vunpack.c.h.b16 %v260
    %v1063 = vunpack.c.l.b16 %v261
    %v1064 = vunpack.c.h.b16 %v261
    %v1065 = vunpack.c.l.b16 %v262
    %v1066 = vunpack.c.h.b16 %v262
    %v1067 = vunpack.c.l.b16 %v263
    %v1068 = vunpack.c.h.b16 %v263
    %v1069 = vunpack.c.l.b16 %v264
    %v1070 = vunpack.c.h.b16 %v264
    %v1071 = vunpack.c.l.b16 %v265
    %v1072 = vunpack.c.h.b16 %v265
    %v1073 = vunpack.c.l.b16 %v266
    %v1074 = vunpack.c.h.b16 %v266
    %v1075 = vunpack.c.l.b16 %v267
    %v1076 = vunpack.c.h.b16 %v267
    %v1077 = vunpack.c.l.b16 %v268
    %v1078 = vunpack.c.h.b16 %v268
    %v1079 = vunpack.c.l.b16 %v269
    %v1080 = vunpack.c.h.b16 %v269
    %v1081 = vunpack.c.l.b16 %v270
    %v1082 = vunpack.c.h.b16 %v270
    %v1083 = vunpack.c.l.b16 %v271
    %v1084 = vunpack.c.h.b16 %v271
    %v1085 = vunpack.c.l.b16 %v272
    %v1086 = vunpack.c.h.b16 %v272
    %v1087 = vunpack.c.l.b16 %v273
    %v1088 = vunpack.c.h.b16 %v273
    %v1089 = vunpack.c.l.b16 %v274
    %v1090 = vunpack.c.h.b16 %v274
    %v1091 = vunpack.c.l.b16 %v275
    %v1092 = vunpack.c.h.b16 %v275
    %v1093 = vunpack.c.l.b16 %v276
    %v1094 = vunpack.c.h.b16 %v276
    %v1095 = vunpack.c.l.b16 %v277
    %v1096 = vunpack.c.h.b16 %v277
    %v1097 = vunpack.c.l.b16 %v278
    %v1098 = vunpack.c.h.b16 %v278
    %v1099 = vunpack.c.l.b16 %v279
    %v1100 = vunpack.c.h.b16 %v279
    %v1101 = vunpack.c.l.b16 %v280
    %v1102 = vunpack.c.h.b16 %v280
    %v1103 = vunpack.c.l.b16 %v281
    %v1104 = vunpack.c.h.b16 %v281
    %v1105 = vunpack.c.l.b16 %v282
    %v1106 = vunpack.c.h.b16 %v282
    %v1107 = vunpack.c.l.b16 %v283
    %v1108 = vunpack.c.h.b16 %v283
    %v1109 = vunpack.c.l.b16 %v284
    %v1110 = vunpack.c.h.b16 %v284
    %v1111 = vunpack.c.l.b16 %v285
    %v1112 = vunpack.c.h.b16 %v285
    %v1113 = vunpack.c.l.b16 %v286
    %v1114 = vunpack.c.h.b16 %v286
    %v1115 = vunpack.c.l.b16 %v287
    %v1116 = vunpack.c.h.b16 %v287
    %v1117 = vunpack.c.l.b16 %v288
    %v1118 = vunpack.c.h.b16 %v288
    %v1119 = vunpack.c.l.b16 %v289
    %v1120 = vunpack.c.h.b16 %v289
    %v1121 = vunpack.c.l.b16 %v290
    %v1122 = vunpack.c.h.b16 %v290
    %v1123 = vunpack.c.l.b16 %v291
    %v1124 = vunpack.c.h.b16 %v291
    %v1125 = vunpack.c.l.b16 %v292
    %v1126 = vunpack.c.h.b16 %v292
    %v1127 = vunpack.c.l.b16 %v293
    %v1128 = vunpack.c.h.b16 %v293
    %v1129 = vunpack.c.l.b16 %v294
    %v1130 = vunpack.c.h.b16 %v294
    %v1131 = vunpack.c.l.b16 %v295
    %v1132 = vunpack.c.h.b16 %v295
    %v1133 = vunpack.c.l.b16 %v296
    %v1134 = vunpack.c.h.b16 %v296
    %v1135 = vunpack.c.l.b16 %v297
    %v1136 = vunpack.c.h.b16 %v297
    %v1137 = vunpack.c.l.b16 %v298
    %v1138 = vunpack.c.h.b16 %v298
    %v1139 = vunpack.c.l.b16 %v299
    %v1140 = vunpack.c.h.b16 %v299
    %v1141 = vunpack.c.l.b16 %v300
    %v1142 = vunpack.c.h.b16 %v300
    %v1143 = vunpack.c.l.b16 %v301
    %v1144 = vunpack.c.h.b16 %v301
    %v1145 = vunpack.c.l.b16 %v302
    %v1146 = vunpack.c.h.b16 %v302
    %v1147 = vunpack.c.l.b16 %v303
    %v1148 = vunpack.c.h.b16 %v303
    %v1149 = vunpack.c.l.b16 %v304
    %v1150 = vunpack.c.h.b16 %v304
    %v1151 = vunpack.c.l.b16 %v305
    %v1152 = vunpack.c.h.b16 %v305
    %v1153 = vunpack.c.l.b16 %v306
    %v1154 = vunpack.c.h.b16 %v306
    %v1155 = vunpack.c.l.b16 %v307
    %v1156 = vunpack.c.h.b16 %v307
    %v1157 = vunpack.c.l.b16 %v308
    %v1158 = vunpack.c.h.b16 %v308
    %v1159 = vunpack.c.l.b16 %v309
    %v1160 = vunpack.c.h.b16 %v309
    %v1161 = vunpack.c.l.b16 %v310
    %v1162 = vunpack.c.h.b16 %v310
    %v1163 = vunpack.c.l.b16 %v311
    %v1164 = vunpack.c.h.b16 %v311
    %v1165 = vunpack.c.l.b16 %v312
    %v1166 = vunpack.c.h.b16 %v312
    %v1167 = vunpack.c.l.b16 %v313
    %v1168 = vunpack.c.h.b16 %v313
    %v1169 = vunpack.c.l.b16 %v314
    %v1170 = vunpack.c.h.b16 %v314
    %v1171 = vunpack.c.l.b16 %v315
    %v1172 = vunpack.c.h.b16 %v315
    %v1173 = vunpack.c.l.b16 %v316
    %v1174 = vunpack.c.h.b16 %v316
    %v1175 = vunpack.c.l.b16 %v317
    %v1176 = vunpack.c.h.b16 %v317
    %v1177 = vunpack.c.l.b16 %v318
    %v1178 = vunpack.c.h.b16 %v318
    %v1179 = vunpack.c.l.b16 %v319
    %v1180 = vunpack.c.h.b16 %v319
    %v1181 = vunpack.c.l.b16 %v320
    %v1182 = vunpack.c.h.b16 %v320
    %v1183 = vunpack.c.l.b16 %v321
    %v1184 = vunpack.c.h.b16 %v321
    %v1185 = vunpack.c.l.b16 %v322
    %v1186 = vunpack.c.h.b16 %v322
    %v1187 = vunpack.c.l.b16 %v323
    %v1188 = vunpack.c.h.b16 %v323
    %v1189 = vunpack.c.l.b16 %v324
    %v1190 = vunpack.c.h.b16 %v324
    %v1191 = vunpack.c.l.b16 %v325
    %v1192 = vunpack.c.h.b16 %v325
    %v1193 = vunpack.c.l.b16 %v326
    %v1194 = vunpack.c.h.b16 %v326
    %v1195 = vunpack.c.l.b16 %v327
    %v1196 = vunpack.c.h.b16 %v327
    %v1197 = vunpack.c.l.b16 %v328
    %v1198 = vunpack.c.h.b16 %v328
    %v1199 = vunpack.c.l.b16 %v329
    %v1200 = vunpack.c.h.b16 %v329
    %v1201 = vunpack.c.l.b16 %v330
    %v1202 = vunpack.c.h.b16 %v330
    %v1203 = vunpack.c.l.b16 %v331
    %v1204 = vunpack.c.h.b16 %v331
    %v1205 = vunpack.c.l.b16 %v332
    %v1206 = vunpack.c.h.b16 %v332
    %v1207 = vunpack.c.l.b16 %v333
    %v1208 = vunpack.c.h.b16 %v333
    %v1209 = vunpack.c.l.b16 %v334
    %v1210 = vunpack.c.h.b16 %v334
    %v1211 = vunpack.c.l.b16 %v335
    %v1212 = vunpack.c.h.b16 %v335
    %v1213 = vunpack.c.l.b16 %v336
    %v1214 = vunpack.c.h.b16 %v336
    %v1215 = vunpack.c.l.b16 %v337
    %v1216 = vunpack.c.h.b16 %v337
    %v1217 = vunpack.c.l.b16 %v338
    %v1218 = vunpack.c.h.b16 %v338
    %v1219 = vunpack.c.l.b16 %v339
    %v1220 = vunpack.c.h.b16 %v339
    %v1221 = vunpack.c.l.b16 %v340
    %v1222 = vunpack.c.h.b16 %v340
    %v1223 = vunpack.c.l.b16 %v341
    %v1224 = vunpack.c.h.b16 %v341
    %v1225 = vunpack.c.l.b16 %v342
    %v1226 = vunpack.c.h.b16 %v342
    %v1227 = vunpack.c.l.b16 %v343
    %v1228 = vunpack.c.h.b16 %v343
    %v1229 = vunpack.c.l.b16 %v344
    %v1230 = vunpack.c.h.b16 %v344
    %v1231 = vunpack.c.l.b16 %v345
    %v1232 = vunpack.c.h.b16 %v345
    %v1233 = vunpack.c.l.b16 %v346
    %v1234 = vunpack.c.h.b16 %v346
    %v1235 = vunpack.c.l.b16 %v347
    %v1236 = vunpack.c.h.b16 %v347
    %v1237 = vunpack.c.l.b16 %v348
    %v1238 = vunpack.c.h.b16 %v348
    %v1239 = vunpack.c.l.b16 %v349
    %v1240 = vunpack.c.h.b16 %v349
    %v1241 = vunpack.c.l.b16 %v350
    %v1242 = vunpack.c.h.b16 %v350
    %v1243 = vunpack.c.l.b16 %v351
    %v1244 = vunpack.c.h.b16 %v351
    %v1245 = vunpack.c.l.b16 %v352
    %v1246 = vunpack.c.h.b16 %v352
    %v1247 = vunpack.c.l.b16 %v353
    %v1248 = vunpack.c.h.b16 %v353
    %v1249 = vunpack.c.l.b16 %v354
    %v1250 = vunpack.c.h.b16 %v354
    %v1251 = vunpack.c.l.b16 %v355
    %v1252 = vunpack.c.h.b16 %v355
    %v1253 = vunpack.c.l.b16 %v356
    %v1254 = vunpack.c.h.b16 %v356
    %v1255 = vunpack.c.l.b16 %v357
    %v1256 = vunpack.c.h.b16 %v357
    %v1257 = vunpack.c.l.b16 %v358
    %v1258 = vunpack.c.h.b16 %v358
    %v1259 = vunpack.c.l.b16 %v359
    %v1260 = vunpack.c.h.b16 %v359
    %v1261 = vunpack.c.l.b16 %v360
    %v1262 = vunpack.c.h.b16 %v360
    %v1263 = vunpack.c.l.b16 %v361
    %v1264 = vunpack.c.h.b16 %v361
    %v1265 = vunpack.c.l.b16 %v362
    %v1266 = vunpack.c.h.b16 %v362
    %v1267 = vunpack.c.l.b16 %v363
    %v1268 = vunpack.c.h.b16 %v363
    %v1269 = vunpack.c.l.b16 %v364
    %v1270 = vunpack.c.h.b16 %v364
    %v1271 = vunpack.c.l.b16 %v365
    %v1272 = vunpack.c.h.b16 %v365
    %v1273 = vunpack.c.l.b16 %v366
    %v1274 = vunpack.c.h.b16 %v366
    %v1275 = vunpack.c.l.b16 %v367
    %v1276 = vunpack.c.h.b16 %v367
    %v1277 = vunpack.c.l.b16 %v368
    %v1278 = vunpack.c.h.b16 %v368
    %v1279 = vunpack.c.l.b16 %v369
    %v1280 = vunpack.c.h.b16 %v369
    %v1281 = vunpack.c.l.b16 %v370
    %v1282 = vunpack.c.h.b16 %v370
    %v1283 = vunpack.c.l.b16 %v371
    %v1284 = vunpack.c.h.b16 %v371
    %v1285 = vunpack.c.l.b16 %v372
    %v1286 = vunpack.c.h.b16 %v372
    %v1287 = vunpack.c.l.b16 %v373
    %v1288 = vunpack.c.h.b16 %v373
    %v1289 = vunpack.c.l.b16 %v374
    %v1290 = vunpack.c.h.b16 %v374
    %v1291 = vunpack.c.l.b16 %v375
    %v1292 = vunpack.c.h.b16 %v375
    %v1293 = vunpack.c.l.b16 %v376
    %v1294 = vunpack.c.h.b16 %v376
    %v1295 = vunpack.c.l.b16 %v377
    %v1296 = vunpack.c.h.b16 %v377
    %v1297 = vunpack.c.l.b16 %v378
    %v1298 = vunpack.c.h.b16 %v378
    %v1299 = vunpack.c.l.b16 %v379
    %v1300 = vunpack.c.h.b16 %v379
    %v1301 = vunpack.c.l.b16 %v380
    %v1302 = vunpack.c.h.b16 %v380
    %v1303 = vunpack.c.l.b16 %v381
    %v1304 = vunpack.c.h.b16 %v381
    %v1305 = vunpack.c.l.b16 %v382
    %v1306 = vunpack.c.h.b16 %v382
    %v1307 = vunpack.c.l.b16 %v383
    %v1308 = vunpack.c.h.b16 %v383
    %v1309 = vunpack.c.l.b16 %v384
    %v1310 = vunpack.c.h.b16 %v384
    %v1311 = vunpack.c.l.b16 %v385
    %v1312 = vunpack.c.h.b16 %v385
    %v1313 = vunpack.c.l.b16 %v386
    %v1314 = vunpack.c.h.b16 %v386
    %v1315 = vpack.c.b16 %v751, %v739
    %v1316 = vpack.c.b16 %v752, %v740
    %v1317 = vpack.c.b16 %v753, %v741
    %v1318 = vpack.c.b16 %v754, %v742
    %v1319 = vpack.c.b16 %v755, %v743
    %v1320 = vpack.c.b16 %v756, %v744
    %v1321 = vpack.c.b16 %v757, %v745
    %v1322 = vpack.c.b16 %v758, %v746
    %v1323 = vpack.c.b16 %v759, %v747
    %v1324 = vpack.c.b16 %v760, %v748
    %v1325 = vpack.c.b16 %v761, %v749
    %v1326 = vpack.c.b16 %v762, %v750
    %v1327 = vpack.c.b16 %v775, %v763
    %v1328 = vpack.c.b16 %v776, %v764
    %v1329 = vpack.c.b16 %v777, %v765
    %v1330 = vpack.c.b16 %v778, %v766
    %v1331 = vpack.c.b16 %v779, %v767
    %v1332 = vpack.c.b16 %v780, %v768
    %v1333 = vpack.c.b16 %v781, %v769
    %v1334 = vpack.c.b16 %v782, %v770
    %v1335 = vpack.c.b16 %v783, %v771
    %v1336 = vpack.c.b16 %v784, %v772
    %v1337 = vpack.c.b16 %v785, %v773
    %v1338 = vpack.c.b16 %v786, %v774
    %v1339 = vpack.c.b16 %v799, %v787
    %v1340 = vpack.c.b16 %v800, %v788
    %v1341 = vpack.c.b16 %v801, %v789
    %v1342 = vpack.c.b16 %v802, %v790
    %v1343 = vpack.c.b16 %v803, %v791
    %v1344 = vpack.c.b16 %v804, %v792
    %v1345 = vpack.c.b16 %v805, %v793
    %v1346 = vpack.c.b16 %v806, %v794
    %v1347 = vpack.c.b16 %v807, %v795
    %v1348 = vpack.c.b16 %v808, %v796
    %v1349 = vpack.c.b16 %v809, %v797
    %v1350 = vpack.c.b16 %v810, %v798
    %v1351 = vpack.c.b16 %v823, %v811
    %v1352 = vpack.c.b16 %v824, %v812
    %v1353 = vpack.c.b16 %v825, %v813
    %v1354 = vpack.c.b16 %v826, %v814
    %v1355 = vpack.c.b16 %v827, %v815
    %v1356 = vpack.c.b16 %v828, %v816
    %v1357 = vpack.c.b16 %v829, %v817
    %v1358 = vpack.c.b16 %v830, %v818
    %v1359 = vpack.c.b16 %v831, %v819
    %v1360 = vpack.c.b16 %v832, %v820
    %v1361 = vpack.c.b16 %v833, %v821
    %v1362 = vpack.c.b16 %v834, %v822
    %v1363 = vpack.c.b16 %v847, %v835
    %v1364 = vpack.c.b16 %v848, %v836
    %v1365 = vpack.c.b16 %v849, %v837
    %v1366 = vpack.c.b16 %v850, %v838
    %v1367 = vpack.c.b16 %v851, %v839
    %v1368 = vpack.c.b16 %v852, %v840
    %v1369 = vpack.c.b16 %v853, %v841
    %v1370 = vpack.c.b16 %v854, %v842
    %v1371 = vpack.c.b16 %v855, %v843
    %v1372 = vpack.c.b16 %v856, %v844
    %v1373 = vpack.c.b16 %v857, %v845
    %v1374 = vpack.c.b16 %v858, %v846
    %v1375 = vpack.c.b16 %v871, %v859
    %v1376 = vpack.c.b16 %v872, %v860
    %v1377 = vpack.c.b16 %v873, %v861
    %v1378 = vpack.c.b16 %v874, %v862
    %v1379 = vpack.c.b16 %v875, %v863
    %v1380 = vpack.c.b16 %v876, %v864
    %v1381 = vpack.c.b16 %v877, %v865
    %v1382 = vpack.c.b16 %v878, %v866
    %v1383 = vpack.c.b16 %v879, %v867
    %v1384 = vpack.c.b16 %v880, %v868
    %v1385 = vpack.c.b16 %v881, %v869
    %v1386 = vpack.c.b16 %v882, %v870
    %v1387 = vpack.c.b16 %v895, %v883
    %v1388 = vpack.c.b16 %v896, %v884
    %v1389 = vpack.c.b16 %v897, %v885
    %v1390 = vpack.c.b16 %v898, %v886
    %v1391 = vpack.c.b16 %v899, %v887
    %v1392 = vpack.c.b16 %v900, %v888
    %v1393 = vpack.c.b16 %v901, %v889
    %v1394 = vpack.c.b16 %v902, %v890
    %v1395 = vpack.c.b16 %v903, %v891
    %v1396 = vpack.c.b16 %v904, %v892
    %v1397 = vpack.c.b16 %v905, %v893
    %v1398 = vpack.c.b16 %v906, %v894
    %v1399 = vpack.c.b16 %v919, %v907
    %v1400 = vpack.c.b16 %v920, %v908
    %v1401 = vpack.c.b16 %v921, %v909
    %v1402 = vpack.c.b16 %v922, %v910
    %v1403 = vpack.c.b16 %v923, %v911
    %v1404 = vpack.c.b16 %v924, %v912
    %v1405 = vpack.c.b16 %v925, %v913
    %v1406 = vpack.c.b16 %v926, %v914
    %v1407 = vpack.c.b16 %v927, %v915
    %v1408 = vpack.c.b16 %v928, %v916
    %v1409 = vpack.c.b16 %v929, %v917
    %v1410 = vpack.c.b16 %v930, %v918
    %v1411 = vpack.c.b16 %v943, %v931
    %v1412 = vpack.c.b16 %v944, %v932
    %v1413 = vpack.c.b16 %v945, %v933
    %v1414 = vpack.c.b16 %v946, %v934
    %v1415 = vpack.c.b16 %v947, %v935
    %v1416 = vpack.c.b16 %v948, %v936
    %v1417 = vpack.c.b16 %v949, %v937
    %v1418 = vpack.c.b16 %v950, %v938
    %v1419 = vpack.c.b16 %v951, %v939
    %v1420 = vpack.c.b16 %v952, %v940
    %v1421 = vpack.c.b16 %v953, %v941
    %v1422 = vpack.c.b16 %v954, %v942
    %v1423 = vpack.c.b16 %v967, %v955
    %v1424 = vpack.c.b16 %v968, %v956
    %v1425 = vpack.c.b16 %v969, %v957
    %v1426 = vpack.c.b16 %v970, %v958
    %v1427 = vpack.c.b16 %v971, %v959
    %v1428 = vpack.c.b16 %v972, %v960
    %v1429 = vpack.c.b16 %v973, %v961
    %v1430 = vpack.c.b16 %v974, %v962
    %v1431 = vpack.c.b16 %v975, %v963
    %v1432 = vpack.c.b16 %v976, %v964
    %v1433 = vpack.c.b16 %v977, %v965
    %v1434 = vpack.c.b16 %v978, %v966
    %v1435 = vpack.c.b16 %v991, %v979
    %v1436 = vpack.c.b16 %v992, %v980
    %v1437 = vpack.c.b16 %v993, %v981
    %v1438 = vpack.c.b16 %v994, %v982
    %v1439 = vpack.c.b16 %v995, %v983
    %v1440 = vpack.c.b16 %v996, %v984
    %v1441 = vpack.c.b16 %v997, %v985
    %v1442 = vpack.c.b16 %v998, %v986
    %v1443 = vpack.c.b16 %v999, %v987
    %v1444 = vpack.c.b16 %v1000, %v988
    %v1445 = vpack.c.b16 %v1001, %v989
    %v1446 = vpack.c.b16 %v1002, %v990
    %v1447 = vpack.c.b16 %v1015, %v1003
    %v1448 = vpack.c.b16 %v1016, %v1004
    %v1449 = vpack.c.b16 %v1017, %v1005
    %v1450 = vpack.c.b16 %v1018, %v1006
    %v1451 = vpack.c.b16 %v1019, %v1007
    %v1452 = vpack.c.b16 %v1020, %v1008
    %v1453 = vpack.c.b16 %v1021, %v1009
    %v1454 = vpack.c.b16 %v1022, %v1010
    %v1455 = vpack.c.b16 %v1023, %v1011
    %v1456 = vpack.c.b16 %v1024, %v1012
    %v1457 = vpack.c.b16 %v1025, %v1013
    %v1458 = vpack.c.b16 %v1026, %v1014
    %v1459 = vpack.c.b16 %v1039, %v1027
    %v1460 = vpack.c.b16 %v1040, %v1028
    %v1461 = vpack.c.b16 %v1041, %v1029
    %v1462 = vpack.c.b16 %v1042, %v1030
    %v1463 = vpack.c.b16 %v1043, %v1031
    %v1464 = vpack.c.b16 %v1044, %v1032
    %v1465 = vpack.c.b16 %v1045, %v1033
    %v1466 = vpack.c.b16 %v1046, %v1034
    %v1467 = vpack.c.b16 %v1047, %v1035
    %v1468 = vpack.c.b16 %v1048, %v1036
    %v1469 = vpack.c.b16 %v1049, %v1037
    %v1470 = vpack.c.b16 %v1050, %v1038
    %v1471 = vpack.c.b16 %v1063, %v1051
    %v1472 = vpack.c.b16 %v1064, %v1052
    %v1473 = vpack.c.b16 %v1065, %v1053
    %v1474 = vpack.c.b16 %v1066, %v1054
    %v1475 = vpack.c.b16 %v1067, %v1055
    %v1476 = vpack.c.b16 %v1068, %v1056
    %v1477 = vpack.c.b16 %v1069, %v1057
    %v1478 = vpack.c.b16 %v1070, %v1058
    %v1479 = vpack.c.b16 %v1071, %v1059
    %v1480 = vpack.c.b16 %v1072, %v1060
    %v1481 = vpack.c.b16 %v1073, %v1061
    %v1482 = vpack.c.b16 %v1074, %v1062
    %v1483 = vpack.c.b16 %v1087, %v1075
    %v1484 = vpack.c.b16 %v1088, %v1076
    %v1485 = vpack.c.b16 %v1089, %v1077
    %v1486 = vpack.c.b16 %v1090, %v1078
    %v1487 = vpack.c.b16 %v1091, %v1079
    %v1488 = vpack.c.b16 %v1092, %v1080
    %v1489 = vpack.c.b16 %v1093, %v1081
    %v1490 = vpack.c.b16 %v1094, %v1082
    %v1491 = vpack.c.b16 %v1095, %v1083
    %v1492 = vpack.c.b16 %v1096, %v1084
    %v1493 = vpack.c.b16 %v1097, %v1085
    %v1494 = vpack.c.b16 %v1098, %v1086
    %v1495 = vpack.c.b16 %v1111, %v1099
    %v1496 = vpack.c.b16 %v1112, %v1100
    %v1497 = vpack.c.b16 %v1113, %v1101
    %v1498 = vpack.c.b16 %v1114, %v1102
    %v1499 = vpack.c.b16 %v1115, %v1103
    %v1500 = vpack.c.b16 %v1116, %v1104
    %v1501 = vpack.c.b16 %v1117, %v1105
    %v1502 = vpack.c.b16 %v1118, %v1106
    %v1503 = vpack.c.b16 %v1119, %v1107
    %v1504 = vpack.c.b16 %v1120, %v1108
    %v1505 = vpack.c.b16 %v1121, %v1109
    %v1506 = vpack.c.b16 %v1122, %v1110
    %v1507 = vpack.c.b16 %v1135, %v1123
    %v1508 = vpack.c.b16 %v1136, %v1124
    %v1509 = vpack.c.b16 %v1137, %v1125
    %v1510 = vpack.c.b16 %v1138, %v1126
    %v1511 = vpack.c.b16 %v1139, %v1127
    %v1512 = vpack.c.b16 %v1140, %v1128
    %v1513 = vpack.c.b16 %v1141, %v1129
    %v1514 = vpack.c.b16 %v1142, %v1130
    %v1515 = vpack.c.b16 %v1143, %v1131
    %v1516 = vpack.c.b16 %v1144, %v1132
    %v1517 = vpack.c.b16 %v1145, %v1133
    %v1518 = vpack.c.b16 %v1146, %v1134
    %v1519 = vpack.c.b16 %v1159, %v1147
    %v1520 = vpack.c.b16 %v1160, %v1148
    %v1521 = vpack.c.b16 %v1161, %v1149
    %v1522 = vpack.c.b16 %v1162, %v1150
    %v1523 = vpack.c.b16 %v1163, %v1151
    %v1524 = vpack.c.b16 %v1164, %v1152
    %v1525 = vpack.c.b16 %v1165, %v1153
    %v1526 = vpack.c.b16 %v1166, %v1154
    %v1527 = vpack.c.b16 %v1167, %v1155
    %v1528 = vpack.c.b16 %v1168, %v1156
    %v1529 = vpack.c.b16 %v1169, %v1157
    %v1530 = vpack.c.b16 %v1170, %v1158
    %v1531 = vpack.c.b16 %v1183, %v1171
    %v1532 = vpack.c.b16 %v1184, %v1172
    %v1533 = vpack.c.b16 %v1185, %v1173
    %v1534 = vpack.c.b16 %v1186, %v1174
    %v1535 = vpack.c.b16 %v1187, %v1175
    %v1536 = vpack.c.b16 %v1188, %v1176
    %v1537 = vpack.c.b16 %v1189, %v1177
    %v1538 = vpack.c.b16 %v1190, %v1178
    %v1539 = vpack.c.b16 %v1191, %v1179
    %v1540 = vpack.c.b16 %v1192, %v1180
    %v1541 = vpack.c.b16 %v1193, %v1181
    %v1542 = vpack.c.b16 %v1194, %v1182
    %v1543 = vpack.c.b16 %v1207, %v1195
    %v1544 = vpack.c.b16 %v1208, %v1196
    %v1545 = vpack.c.b16 %v1209, %v1197
    %v1546 = vpack.c.b16 %v1210, %v1198
    %v1547 = vpack.c.b16 %v1211, %v1199
    %v1548 = vpack.c.b16 %v1212, %v1200
    %v1549 = vpack.c.b16 %v1213, %v1201
    %v1550 = vpack.c.b16 %v1214, %v1202
    %v1551 = vpack.c.b16 %v1215, %v1203
    %v1552 = vpack.c.b16 %v1216, %v1204
    %v1553 = vpack.c.b16 %v1217, %v1205
    %v1554 = vpack.c.b16 %v1218, %v1206
    %v1555 = vpack.c.b16 %v1231, %v1219
    %v1556 = vpack.c.b16 %v1232, %v1220
    %v1557 = vpack.c.b16 %v1233, %v1221
    %v1558 = vpack.c.b16 %v1234, %v1222
    %v1559 = vpack.c.b16 %v1235, %v1223
    %v1560 = vpack.c.b16 %v1236, %v1224
    %v1561 = vpack.c.b16 %v1237, %v1225
    %v1562 = vpack.c.b16 %v1238, %v1226
    %v1563 = vpack.c.b16 %v1239, %v1227
    %v1564 = vpack.c.b16 %v1240, %v1228
    %v1565 = vpack.c.b16 %v1241, %v1229
    %v1566 = vpack.c.b16 %v1242, %v1230
    %v1567 = vpack.c.b16 %v1255, %v1243
    %v1568 = vpack.c.b16 %v1256, %v1244
    %v1569 = vpack.c.b16 %v1257, %v1245
    %v1570 = vpack.c.b16 %v1258, %v1246
    %v1571 = vpack.c.b16 %v1259, %v1247
    %v1572 = vpack.c.b16 %v1260, %v1248
    %v1573 = vpack.c.b16 %v1261, %v1249
    %v1574 = vpack.c.b16 %v1262, %v1250
    %v1575 = vpack.c.b16 %v1263, %v1251
    %v1576 = vpack.c.b16 %v1264, %v1252
    %v1577 = vpack.c.b16 %v1265, %v1253
    %v1578 = vpack.c.b16 %v1266, %v1254
    %v1579 = vpack.c.b16 %v1279, %v1267
    %v1580 = vpack.c.b16 %v1280, %v1268
    %v1581 = vpack.c.b16 %v1281, %v1269
    %v1582 = vpack.c.b16 %v1282, %v1270
    %v1583 = vpack.c.b16 %v1283, %v1271
    %v1584 = vpack.c.b16 %v1284, %v1272
    %v1585 = vpack.c.b16 %v1285, %v1273
    %v1586 = vpack.c.b16 %v1286, %v1274
    %v1587 = vpack.c.b16 %v1287, %v1275
    %v1588 = vpack.c.b16 %v1288, %v1276
    %v1589 = vpack.c.b16 %v1289, %v1277
    %v1590 = vpack.c.b16 %v1290, %v1278
    %v1591 = vpack.c.b16 %v1303, %v1291
    %v1592 = vpack.c.b16 %v1304, %v1292
    %v1593 = vpack.c.b16 %v1305, %v1293
    %v1594 = vpack.c.b16 %v1306, %v1294
    %v1595 = vpack.c.b16 %v1307, %v1295
    %v1596 = vpack.c.b16 %v1308, %v1296
    %v1597 = vpack.c.b16 %v1309, %v1297
    %v1598 = vpack.c.b16 %v1310, %v1298
    %v1599 = vpack.c.b16 %v1311, %v1299
    %v1600 = vpack.c.b16 %v1312, %v1300
    %v1601 = vpack.c.b16 %v1313, %v1301
    %v1602 = vpack.c.b16 %v1314, %v1302
    %1891 = vmatprep.subr.bf16.mxu0 %v1400
    %1892 = vmatpush1.bf16.msra.mxu0 %v1399
    %1893 = vmatprep.subr.bf16.mxu0 %v1388
    %1894 = vmatpush1.bf16.msra.mxu0 %v1387
    %1895 = vmatprep.subr.bf16.mxu0 %v1376
    %1896 = vmatpush1.bf16.msra.mxu0 %v1375
    %1897 = vmatprep.subr.bf16.mxu0 %v1364
    %1898 = vmatpush1.bf16.msra.mxu0 %v1363
    %1899 = vmatprep.subr.bf16.mxu0 %v1352
    %1900 = vmatpush1.bf16.msra.mxu0 %v1351
    %1901 = vmatprep.subr.bf16.mxu0 %v1340
    %1902 = vmatpush1.bf16.msra.mxu0 %v1339
    %1903 = vmatprep.subr.bf16.mxu0 %v1328
    %1904 = vmatpush1.bf16.msra.mxu0 %v1327
    %1905 = vmatprep.subr.bf16.mxu0 %v1316
    %1906 = vmatpush1.bf16.msra.mxu0 %v1315
    %1907 = vmatprep.subr.bf16.mxu0 %v1496
    %1908 = vmatpush2.bf16.msra.mxu0 %v1495
    %1909 = vmatprep.subr.bf16.mxu0 %v1484
    %1910 = vmatpush2.bf16.msra.mxu0 %v1483
    %1911 = vmatprep.subr.bf16.mxu0 %v1472
    %1912 = vmatpush2.bf16.msra.mxu0 %v1471
    %1913 = vmatprep.subr.bf16.mxu0 %v1460
    %1914 = vmatpush2.bf16.msra.mxu0 %v1459
    %1915 = vmatprep.subr.bf16.mxu0 %v1448
    %1916 = vmatpush2.bf16.msra.mxu0 %v1447
    %1917 = vmatprep.subr.bf16.mxu0 %v1436
    %1918 = vmatpush2.bf16.msra.mxu0 %v1435
    %1919 = vmatprep.subr.bf16.mxu0 %v1424
    %1920 = vmatpush2.bf16.msra.mxu0 %v1423
    %1921 = vmatprep.subr.bf16.mxu0 %v1412
    %1922 = vmatpush2.bf16.msra.mxu0 %v1411
    %1923 = vmatprep.mubr.bf16.mxu0 %v97
    %1924 = vmatmul.mubr.bf16.gmra.mxu0 %v96
    %v1925 = vpop.f32.mrf.mxu0
    %v1926 = vadd.f32 %v394, %v1925
    %v1927 = vpop.f32.mrf.mxu0
    %v1928 = vadd.f32 %v398, %v1927
    %v1929 = vpop.f32.mrf.mxu0
    %v1930 = vadd.f32 %v394, %v1929
    %v1931 = vpop.f32.mrf.mxu0
    %v1932 = vadd.f32 %v398, %v1931
    %1933 = vdwg.mxu0
    %1934 = vmatprep.subr.bf16.mxu0 %v1592
    %1935 = vmatpush1.bf16.msra.mxu0 %v1591
    %1936 = vmatprep.subr.bf16.mxu0 %v1580
    %1937 = vmatpush1.bf16.msra.mxu0 %v1579
    %1938 = vmatprep.subr.bf16.mxu0 %v1568
    %1939 = vmatpush1.bf16.msra.mxu0 %v1567
    %1940 = vmatprep.subr.bf16.mxu0 %v1556
    %1941 = vmatpush1.bf16.msra.mxu0 %v1555
    %1942 = vmatprep.subr.bf16.mxu0 %v1544
    %1943 = vmatpush1.bf16.msra.mxu0 %v1543
    %1944 = vmatprep.subr.bf16.mxu0 %v1532
    %1945 = vmatpush1.bf16.msra.mxu0 %v1531
    %1946 = vmatprep.subr.bf16.mxu0 %v1520
    %1947 = vmatpush1.bf16.msra.mxu0 %v1519
    %1948 = vmatprep.subr.bf16.mxu0 %v1508
    %1949 = vmatpush1.bf16.msra.mxu0 %v1507
    %1950 = vmatprep.subr.bf16.mxu0 0
    %1951 = vmatpush2.bf16.msra.mxu0 0
    %1952 = vmatprep.subr.bf16.mxu0 0
    %1953 = vmatpush2.bf16.msra.mxu0 0
    %1954 = vmatprep.subr.bf16.mxu0 0
    %1955 = vmatpush2.bf16.msra.mxu0 0
    %1956 = vmatprep.subr.bf16.mxu0 0
    %1957 = vmatpush2.bf16.msra.mxu0 0
    %1958 = vmatprep.subr.bf16.mxu0 0
    %1959 = vmatpush2.bf16.msra.mxu0 0
    %1960 = vmatprep.subr.bf16.mxu0 0
    %1961 = vmatpush2.bf16.msra.mxu0 0
    %1962 = vmatprep.subr.bf16.mxu0 0
    %1963 = vmatpush2.bf16.msra.mxu0 0
    %1964 = vmatprep.subr.bf16.mxu0 0
    %1965 = vmatpush2.bf16.msra.mxu0 0
    %1966 = vmatprep.mubr.bf16.mxu0 0
    %1967 = vmatmul.mubr.bf16.gmra.mxu0 %v98
    %v1968 = vpop.f32.mrf.mxu0
    %v1969 = vadd.f32 %v1926, %v1968
    %v1970 = vpop.f32.mrf.mxu0
    %v1971 = vadd.f32 %v1928, %v1970
    %v1972 = vpop.f32.mrf.mxu0
    %v1973 = vadd.f32 %v1930, %v1972
    %v1974 = vpop.f32.mrf.mxu0
    %v1975 = vadd.f32 %v1932, %v1974
    %1976 = vdwg.mxu0
    %1977 = vmatprep.subr.bf16.mxu0 %v1402
    %1978 = vmatpush1.bf16.msra.mxu0 %v1401
    %1979 = vmatprep.subr.bf16.mxu0 %v1390
    %1980 = vmatpush1.bf16.msra.mxu0 %v1389
    %1981 = vmatprep.subr.bf16.mxu0 %v1378
    %1982 = vmatpush1.bf16.msra.mxu0 %v1377
    %1983 = vmatprep.subr.bf16.mxu0 %v1366
    %1984 = vmatpush1.bf16.msra.mxu0 %v1365
    %1985 = vmatprep.subr.bf16.mxu0 %v1354
    %1986 = vmatpush1.bf16.msra.mxu0 %v1353
    %1987 = vmatprep.subr.bf16.mxu0 %v1342
    %1988 = vmatpush1.bf16.msra.mxu0 %v1341
    %1989 = vmatprep.subr.bf16.mxu0 %v1330
    %1990 = vmatpush1.bf16.msra.mxu0 %v1329
    %1991 = vmatprep.subr.bf16.mxu0 %v1318
    %1992 = vmatpush1.bf16.msra.mxu0 %v1317
    %1993 = vmatprep.subr.bf16.mxu0 %v1498
    %1994 = vmatpush2.bf16.msra.mxu0 %v1497
    %1995 = vmatprep.subr.bf16.mxu0 %v1486
    %1996 = vmatpush2.bf16.msra.mxu0 %v1485
    %1997 = vmatprep.subr.bf16.mxu0 %v1474
    %1998 = vmatpush2.bf16.msra.mxu0 %v1473
    %1999 = vmatprep.subr.bf16.mxu0 %v1462
    %2000 = vmatpush2.bf16.msra.mxu0 %v1461
    %2001 = vmatprep.subr.bf16.mxu0 %v1450
    %2002 = vmatpush2.bf16.msra.mxu0 %v1449
    %2003 = vmatprep.subr.bf16.mxu0 %v1438
    %2004 = vmatpush2.bf16.msra.mxu0 %v1437
    %2005 = vmatprep.subr.bf16.mxu0 %v1426
    %2006 = vmatpush2.bf16.msra.mxu0 %v1425
    %2007 = vmatprep.subr.bf16.mxu0 %v1414
    %2008 = vmatpush2.bf16.msra.mxu0 %v1413
    %2009 = vmatprep.mubr.bf16.mxu0 %v97
    %2010 = vmatmul.mubr.bf16.gmra.mxu0 %v96
    %v2011 = vpop.f32.mrf.mxu0
    %v2012 = vadd.f32 %v402, %v2011
    %v2013 = vpop.f32.mrf.mxu0
    %v2014 = vadd.f32 %v406, %v2013
    %v2015 = vpop.f32.mrf.mxu0
    %v2016 = vadd.f32 %v402, %v2015
    %v2017 = vpop.f32.mrf.mxu0
    %v2018 = vadd.f32 %v406, %v2017
    %2019 = vdwg.mxu0
    %2020 = vmatprep.subr.bf16.mxu0 %v1594
    %2021 = vmatpush1.bf16.msra.mxu0 %v1593
    %2022 = vmatprep.subr.bf16.mxu0 %v1582
    %2023 = vmatpush1.bf16.msra.mxu0 %v1581
    %2024 = vmatprep.subr.bf16.mxu0 %v1570
    %2025 = vmatpush1.bf16.msra.mxu0 %v1569
    %2026 = vmatprep.subr.bf16.mxu0 %v1558
    %2027 = vmatpush1.bf16.msra.mxu0 %v1557
    %2028 = vmatprep.subr.bf16.mxu0 %v1546
    %2029 = vmatpush1.bf16.msra.mxu0 %v1545
    %2030 = vmatprep.subr.bf16.mxu0 %v1534
    %2031 = vmatpush1.bf16.msra.mxu0 %v1533
    %2032 = vmatprep.subr.bf16.mxu0 %v1522
    %2033 = vmatpush1.bf16.msra.mxu0 %v1521
    %2034 = vmatprep.subr.bf16.mxu0 %v1510
    %2035 = vmatpush1.bf16.msra.mxu0 %v1509
    %2036 = vmatprep.subr.bf16.mxu0 0
    %2037 = vmatpush2.bf16.msra.mxu0 0
    %2038 = vmatprep.subr.bf16.mxu0 0
    %2039 = vmatpush2.bf16.msra.mxu0 0
    %2040 = vmatprep.subr.bf16.mxu0 0
    %2041 = vmatpush2.bf16.msra.mxu0 0
    %2042 = vmatprep.subr.bf16.mxu0 0
    %2043 = vmatpush2.bf16.msra.mxu0 0
    %2044 = vmatprep.subr.bf16.mxu0 0
    %2045 = vmatpush2.bf16.msra.mxu0 0
    %2046 = vmatprep.subr.bf16.mxu0 0
    %2047 = vmatpush2.bf16.msra.mxu0 0
    %2048 = vmatprep.subr.bf16.mxu0 0
    %2049 = vmatpush2.bf16.msra.mxu0 0
    %2050 = vmatprep.subr.bf16.mxu0 0
    %2051 = vmatpush2.bf16.msra.mxu0 0
    %2052 = vmatprep.mubr.bf16.mxu0 0
    %2053 = vmatmul.mubr.bf16.gmra.mxu0 %v98
    %v2054 = vpop.f32.mrf.mxu0
    %v2055 = vadd.f32 %v2012, %v2054
    %v2056 = vpop.f32.mrf.mxu0
    %v2057 = vadd.f32 %v2014, %v2056
    %v2058 = vpop.f32.mrf.mxu0
    %v2059 = vadd.f32 %v2016, %v2058
    %v2060 = vpop.f32.mrf.mxu0
    %v2061 = vadd.f32 %v2018, %v2060
    %2062 = vdwg.mxu0
    %2063 = vmatprep.subr.bf16.mxu0 %v1404
    %2064 = vmatpush1.bf16.msra.mxu0 %v1403
    %2065 = vmatprep.subr.bf16.mxu0 %v1392
    %2066 = vmatpush1.bf16.msra.mxu0 %v1391
    %2067 = vmatprep.subr.bf16.mxu0 %v1380
    %2068 = vmatpush1.bf16.msra.mxu0 %v1379
    %2069 = vmatprep.subr.bf16.mxu0 %v1368
    %2070 = vmatpush1.bf16.msra.mxu0 %v1367
    %2071 = vmatprep.subr.bf16.mxu0 %v1356
    %2072 = vmatpush1.bf16.msra.mxu0 %v1355
    %2073 = vmatprep.subr.bf16.mxu0 %v1344
    %2074 = vmatpush1.bf16.msra.mxu0 %v1343
    %2075 = vmatprep.subr.bf16.mxu0 %v1332
    %2076 = vmatpush1.bf16.msra.mxu0 %v1331
    %2077 = vmatprep.subr.bf16.mxu0 %v1320
    %2078 = vmatpush1.bf16.msra.mxu0 %v1319
    %2079 = vmatprep.subr.bf16.mxu0 %v1500
    %2080 = vmatpush2.bf16.msra.mxu0 %v1499
    %2081 = vmatprep.subr.bf16.mxu0 %v1488
    %2082 = vmatpush2.bf16.msra.mxu0 %v1487
    %2083 = vmatprep.subr.bf16.mxu0 %v1476
    %2084 = vmatpush2.bf16.msra.mxu0 %v1475
    %2085 = vmatprep.subr.bf16.mxu0 %v1464
    %2086 = vmatpush2.bf16.msra.mxu0 %v1463
    %2087 = vmatprep.subr.bf16.mxu0 %v1452
    %2088 = vmatpush2.bf16.msra.mxu0 %v1451
    %2089 = vmatprep.subr.bf16.mxu0 %v1440
    %2090 = vmatpush2.bf16.msra.mxu0 %v1439
    %2091 = vmatprep.subr.bf16.mxu0 %v1428
    %2092 = vmatpush2.bf16.msra.mxu0 %v1427
    %2093 = vmatprep.subr.bf16.mxu0 %v1416
    %2094 = vmatpush2.bf16.msra.mxu0 %v1415
    %2095 = vmatprep.mubr.bf16.mxu0 %v97
    %2096 = vmatmul.mubr.bf16.gmra.mxu0 %v96
    %v2097 = vpop.f32.mrf.mxu0
    %v2098 = vadd.f32 %v410, %v2097
    %v2099 = vpop.f32.mrf.mxu0
    %v2100 = vadd.f32 %v414, %v2099
    %v2101 = vpop.f32.mrf.mxu0
    %v2102 = vadd.f32 %v410, %v2101
    %v2103 = vpop.f32.mrf.mxu0
    %v2104 = vadd.f32 %v414, %v2103
    %2105 = vdwg.mxu0
    %2106 = vmatprep.subr.bf16.mxu0 %v1596
    %2107 = vmatpush1.bf16.msra.mxu0 %v1595
    %2108 = vmatprep.subr.bf16.mxu0 %v1584
    %2109 = vmatpush1.bf16.msra.mxu0 %v1583
    %2110 = vmatprep.subr.bf16.mxu0 %v1572
    %2111 = vmatpush1.bf16.msra.mxu0 %v1571
    %2112 = vmatprep.subr.bf16.mxu0 %v1560
    %2113 = vmatpush1.bf16.msra.mxu0 %v1559
    %2114 = vmatprep.subr.bf16.mxu0 %v1548
    %2115 = vmatpush1.bf16.msra.mxu0 %v1547
    %2116 = vmatprep.subr.bf16.mxu0 %v1536
    %2117 = vmatpush1.bf16.msra.mxu0 %v1535
    %2118 = vmatprep.subr.bf16.mxu0 %v1524
    %2119 = vmatpush1.bf16.msra.mxu0 %v1523
    %2120 = vmatprep.subr.bf16.mxu0 %v1512
    %2121 = vmatpush1.bf16.msra.mxu0 %v1511
    %2122 = vmatprep.subr.bf16.mxu0 0
    %2123 = vmatpush2.bf16.msra.mxu0 0
    %2124 = vmatprep.subr.bf16.mxu0 0
    %2125 = vmatpush2.bf16.msra.mxu0 0
    %2126 = vmatprep.subr.bf16.mxu0 0
    %2127 = vmatpush2.bf16.msra.mxu0 0
    %2128 = vmatprep.subr.bf16.mxu0 0
    %2129 = vmatpush2.bf16.msra.mxu0 0
    %2130 = vmatprep.subr.bf16.mxu0 0
    %2131 = vmatpush2.bf16.msra.mxu0 0
    %2132 = vmatprep.subr.bf16.mxu0 0
    %2133 = vmatpush2.bf16.msra.mxu0 0
    %2134 = vmatprep.subr.bf16.mxu0 0
    %2135 = vmatpush2.bf16.msra.mxu0 0
    %2136 = vmatprep.subr.bf16.mxu0 0
    %2137 = vmatpush2.bf16.msra.mxu0 0
    %2138 = vmatprep.mubr.bf16.mxu0 0
    %2139 = vmatmul.mubr.bf16.gmra.mxu0 %v98
    %v2140 = vpop.f32.mrf.mxu0
    %v2141 = vadd.f32 %v2098, %v2140
    %v2142 = vpop.f32.mrf.mxu0
    %v2143 = vadd.f32 %v2100, %v2142
    %v2144 = vpop.f32.mrf.mxu0
    %v2145 = vadd.f32 %v2102, %v2144
    %v2146 = vpop.f32.mrf.mxu0
    %v2147 = vadd.f32 %v2104, %v2146
    %2148 = vdwg.mxu0
    %2149 = vmatprep.subr.bf16.mxu0 %v1406
    %2150 = vmatpush1.bf16.msra.mxu0 %v1405
    %2151 = vmatprep.subr.bf16.mxu0 %v1394
    %2152 = vmatpush1.bf16.msra.mxu0 %v1393
    %2153 = vmatprep.subr.bf16.mxu0 %v1382
    %2154 = vmatpush1.bf16.msra.mxu0 %v1381
    %2155 = vmatprep.subr.bf16.mxu0 %v1370
    %2156 = vmatpush1.bf16.msra.mxu0 %v1369
    %2157 = vmatprep.subr.bf16.mxu0 %v1358
    %2158 = vmatpush1.bf16.msra.mxu0 %v1357
    %2159 = vmatprep.subr.bf16.mxu0 %v1346
    %2160 = vmatpush1.bf16.msra.mxu0 %v1345
    %2161 = vmatprep.subr.bf16.mxu0 %v1334
    %2162 = vmatpush1.bf16.msra.mxu0 %v1333
    %2163 = vmatprep.subr.bf16.mxu0 %v1322
    %2164 = vmatpush1.bf16.msra.mxu0 %v1321
    %2165 = vmatprep.subr.bf16.mxu0 %v1502
    %2166 = vmatpush2.bf16.msra.mxu0 %v1501
    %2167 = vmatprep.subr.bf16.mxu0 %v1490
    %2168 = vmatpush2.bf16.msra.mxu0 %v1489
    %2169 = vmatprep.subr.bf16.mxu0 %v1478
    %2170 = vmatpush2.bf16.msra.mxu0 %v1477
    %2171 = vmatprep.subr.bf16.mxu0 %v1466
    %2172 = vmatpush2.bf16.msra.mxu0 %v1465
    %2173 = vmatprep.subr.bf16.mxu0 %v1454
    %2174 = vmatpush2.bf16.msra.mxu0 %v1453
    %2175 = vmatprep.subr.bf16.mxu0 %v1442
    %2176 = vmatpush2.bf16.msra.mxu0 %v1441
    %2177 = vmatprep.subr.bf16.mxu0 %v1430
    %2178 = vmatpush2.bf16.msra.mxu0 %v1429
    %2179 = vmatprep.subr.bf16.mxu0 %v1418
    %2180 = vmatpush2.bf16.msra.mxu0 %v1417
    %2181 = vmatprep.mubr.bf16.mxu0 %v97
    %2182 = vmatmul.mubr.bf16.gmra.mxu0 %v96
    %v2183 = vpop.f32.mrf.mxu0
    %v2184 = vadd.f32 %v418, %v2183
    %v2185 = vpop.f32.mrf.mxu0
    %v2186 = vadd.f32 %v422, %v2185
    %v2187 = vpop.f32.mrf.mxu0
    %v2188 = vadd.f32 %v418, %v2187
    %v2189 = vpop.f32.mrf.mxu0
    %v2190 = vadd.f32 %v422, %v2189
    %2191 = vdwg.mxu0
    %2192 = vmatprep.subr.bf16.mxu0 %v1598
    %2193 = vmatpush1.bf16.msra.mxu0 %v1597
    %2194 = vmatprep.subr.bf16.mxu0 %v1586
    %2195 = vmatpush1.bf16.msra.mxu0 %v1585
    %2196 = vmatprep.subr.bf16.mxu0 %v1574
    %2197 = vmatpush1.bf16.msra.mxu0 %v1573
    %2198 = vmatprep.subr.bf16.mxu0 %v1562
    %2199 = vmatpush1.bf16.msra.mxu0 %v1561
    %2200 = vmatprep.subr.bf16.mxu0 %v1550
    %2201 = vmatpush1.bf16.msra.mxu0 %v1549
    %2202 = vmatprep.subr.bf16.mxu0 %v1538
    %2203 = vmatpush1.bf16.msra.mxu0 %v1537
    %2204 = vmatprep.subr.bf16.mxu0 %v1526
    %2205 = vmatpush1.bf16.msra.mxu0 %v1525
    %2206 = vmatprep.subr.bf16.mxu0 %v1514
    %2207 = vmatpush1.bf16.msra.mxu0 %v1513
    %2208 = vmatprep.subr.bf16.mxu0 0
    %2209 = vmatpush2.bf16.msra.mxu0 0
    %2210 = vmatprep.subr.bf16.mxu0 0
    %2211 = vmatpush2.bf16.msra.mxu0 0
    %2212 = vmatprep.subr.bf16.mxu0 0
    %2213 = vmatpush2.bf16.msra.mxu0 0
    %2214 = vmatprep.subr.bf16.mxu0 0
    %2215 = vmatpush2.bf16.msra.mxu0 0
    %2216 = vmatprep.subr.bf16.mxu0 0
    %2217 = vmatpush2.bf16.msra.mxu0 0
    %2218 = vmatprep.subr.bf16.mxu0 0
    %2219 = vmatpush2.bf16.msra.mxu0 0
    %2220 = vmatprep.subr.bf16.mxu0 0
    %2221 = vmatpush2.bf16.msra.mxu0 0
    %2222 = vmatprep.subr.bf16.mxu0 0
    %2223 = vmatpush2.bf16.msra.mxu0 0
    %2224 = vmatprep.mubr.bf16.mxu0 0
    %2225 = vmatmul.mubr.bf16.gmra.mxu0 %v98
    %v2226 = vpop.f32.mrf.mxu0
    %v2227 = vadd.f32 %v2184, %v2226
    %v2228 = vpop.f32.mrf.mxu0
    %v2229 = vadd.f32 %v2186, %v2228
    %v2230 = vpop.f32.mrf.mxu0
    %v2231 = vadd.f32 %v2188, %v2230
    %v2232 = vpop.f32.mrf.mxu0
    %v2233 = vadd.f32 %v2190, %v2232
    %2234 = vdwg.mxu0
    %2235 = vmatprep.subr.bf16.mxu0 %v1408
    %2236 = vmatpush1.bf16.msra.mxu0 %v1407
    %2237 = vmatprep.subr.bf16.mxu0 %v1396
    %2238 = vmatpush1.bf16.msra.mxu0 %v1395
    %2239 = vmatprep.subr.bf16.mxu0 %v1384
    %2240 = vmatpush1.bf16.msra.mxu0 %v1383
    %2241 = vmatprep.subr.bf16.mxu0 %v1372
    %2242 = vmatpush1.bf16.msra.mxu0 %v1371
    %2243 = vmatprep.subr.bf16.mxu0 %v1360
    %2244 = vmatpush1.bf16.msra.mxu0 %v1359
    %2245 = vmatprep.subr.bf16.mxu0 %v1348
    %2246 = vmatpush1.bf16.msra.mxu0 %v1347
    %2247 = vmatprep.subr.bf16.mxu0 %v1336
    %2248 = vmatpush1.bf16.msra.mxu0 %v1335
    %2249 = vmatprep.subr.bf16.mxu0 %v1324
    %2250 = vmatpush1.bf16.msra.mxu0 %v1323
    %2251 = vmatprep.subr.bf16.mxu0 %v1504
    %2252 = vmatpush2.bf16.msra.mxu0 %v1503
    %2253 = vmatprep.subr.bf16.mxu0 %v1492
    %2254 = vmatpush2.bf16.msra.mxu0 %v1491
    %2255 = vmatprep.subr.bf16.mxu0 %v1480
    %2256 = vmatpush2.bf16.msra.mxu0 %v1479
    %2257 = vmatprep.subr.bf16.mxu0 %v1468
    %2258 = vmatpush2.bf16.msra.mxu0 %v1467
    %2259 = vmatprep.subr.bf16.mxu0 %v1456
    %2260 = vmatpush2.bf16.msra.mxu0 %v1455
    %2261 = vmatprep.subr.bf16.mxu0 %v1444
    %2262 = vmatpush2.bf16.msra.mxu0 %v1443
    %2263 = vmatprep.subr.bf16.mxu0 %v1432
    %2264 = vmatpush2.bf16.msra.mxu0 %v1431
    %2265 = vmatprep.subr.bf16.mxu0 %v1420
    %2266 = vmatpush2.bf16.msra.mxu0 %v1419
    %2267 = vmatprep.mubr.bf16.mxu0 %v97
    %2268 = vmatmul.mubr.bf16.gmra.mxu0 %v96
    %v2269 = vpop.f32.mrf.mxu0
    %v2270 = vadd.f32 %v426, %v2269
    %v2271 = vpop.f32.mrf.mxu0
    %v2272 = vadd.f32 %v430, %v2271
    %v2273 = vpop.f32.mrf.mxu0
    %v2274 = vadd.f32 %v426, %v2273
    %v2275 = vpop.f32.mrf.mxu0
    %v2276 = vadd.f32 %v430, %v2275
    %2277 = vdwg.mxu0
    %2278 = vmatprep.subr.bf16.mxu0 %v1600
    %2279 = vmatpush1.bf16.msra.mxu0 %v1599
    %2280 = vmatprep.subr.bf16.mxu0 %v1588
    %2281 = vmatpush1.bf16.msra.mxu0 %v1587
    %2282 = vmatprep.subr.bf16.mxu0 %v1576
    %2283 = vmatpush1.bf16.msra.mxu0 %v1575
    %2284 = vmatprep.subr.bf16.mxu0 %v1564
    %2285 = vmatpush1.bf16.msra.mxu0 %v1563
    %2286 = vmatprep.subr.bf16.mxu0 %v1552
    %2287 = vmatpush1.bf16.msra.mxu0 %v1551
    %2288 = vmatprep.subr.bf16.mxu0 %v1540
    %2289 = vmatpush1.bf16.msra.mxu0 %v1539
    %2290 = vmatprep.subr.bf16.mxu0 %v1528
    %2291 = vmatpush1.bf16.msra.mxu0 %v1527
    %2292 = vmatprep.subr.bf16.mxu0 %v1516
    %2293 = vmatpush1.bf16.msra.mxu0 %v1515
    %2294 = vmatprep.subr.bf16.mxu0 0
    %2295 = vmatpush2.bf16.msra.mxu0 0
    %2296 = vmatprep.subr.bf16.mxu0 0
    %2297 = vmatpush2.bf16.msra.mxu0 0
    %2298 = vmatprep.subr.bf16.mxu0 0
    %2299 = vmatpush2.bf16.msra.mxu0 0
    %2300 = vmatprep.subr.bf16.mxu0 0
    %2301 = vmatpush2.bf16.msra.mxu0 0
    %2302 = vmatprep.subr.bf16.mxu0 0
    %2303 = vmatpush2.bf16.msra.mxu0 0
    %2304 = vmatprep.subr.bf16.mxu0 0
    %2305 = vmatpush2.bf16.msra.mxu0 0
    %2306 = vmatprep.subr.bf16.mxu0 0
    %2307 = vmatpush2.bf16.msra.mxu0 0
    %2308 = vmatprep.subr.bf16.mxu0 0
    %2309 = vmatpush2.bf16.msra.mxu0 0
    %2310 = vmatprep.mubr.bf16.mxu0 0
    %2311 = vmatmul.mubr.bf16.gmra.mxu0 %v98
    %v2312 = vpop.f32.mrf.mxu0
    %v2313 = vadd.f32 %v2270, %v2312
    %v2314 = vpop.f32.mrf.mxu0
    %v2315 = vadd.f32 %v2272, %v2314
    %v2316 = vpop.f32.mrf.mxu0
    %v2317 = vadd.f32 %v2274, %v2316
    %v2318 = vpop.f32.mrf.mxu0
    %v2319 = vadd.f32 %v2276, %v2318
    %2320 = vdwg.mxu0
    %2321 = vmatprep.subr.bf16.mxu0 %v1410
    %2322 = vmatpush1.bf16.msra.mxu0 %v1409
    %2323 = vmatprep.subr.bf16.mxu0 %v1398
    %2324 = vmatpush1.bf16.msra.mxu0 %v1397
    %2325 = vmatprep.subr.bf16.mxu0 %v1386
    %2326 = vmatpush1.bf16.msra.mxu0 %v1385
    %2327 = vmatprep.subr.bf16.mxu0 %v1374
    %2328 = vmatpush1.bf16.msra.mxu0 %v1373
    %2329 = vmatprep.subr.bf16.mxu0 %v1362
    %2330 = vmatpush1.bf16.msra.mxu0 %v1361
    %2331 = vmatprep.subr.bf16.mxu0 %v1350
    %2332 = vmatpush1.bf16.msra.mxu0 %v1349
    %2333 = vmatprep.subr.bf16.mxu0 %v1338
    %2334 = vmatpush1.bf16.msra.mxu0 %v1337
    %2335 = vmatprep.subr.bf16.mxu0 %v1326
    %2336 = vmatpush1.bf16.msra.mxu0 %v1325
    %2337 = vmatprep.subr.bf16.mxu0 %v1506
    %2338 = vmatpush2.bf16.msra.mxu0 %v1505
    %2339 = vmatprep.subr.bf16.mxu0 %v1494
    %2340 = vmatpush2.bf16.msra.mxu0 %v1493
    %2341 = vmatprep.subr.bf16.mxu0 %v1482
    %2342 = vmatpush2.bf16.msra.mxu0 %v1481
    %2343 = vmatprep.subr.bf16.mxu0 %v1470
    %2344 = vmatpush2.bf16.msra.mxu0 %v1469
    %2345 = vmatprep.subr.bf16.mxu0 %v1458
    %2346 = vmatpush2.bf16.msra.mxu0 %v1457
    %2347 = vmatprep.subr.bf16.mxu0 %v1446
    %2348 = vmatpush2.bf16.msra.mxu0 %v1445
    %2349 = vmatprep.subr.bf16.mxu0 %v1434
    %2350 = vmatpush2.bf16.msra.mxu0 %v1433
    %2351 = vmatprep.subr.bf16.mxu0 %v1422
    %2352 = vmatpush2.bf16.msra.mxu0 %v1421
    %2353 = vmatprep.mubr.bf16.mxu0 %v97
    %2354 = vmatmul.mubr.bf16.gmra.mxu0 %v96
    %v2355 = vpop.f32.mrf.mxu0
    %v2356 = vadd.f32 %v434, %v2355
    %v2357 = vpop.f32.mrf.mxu0
    %v2358 = vadd.f32 %v438, %v2357
    %v2359 = vpop.f32.mrf.mxu0
    %v2360 = vadd.f32 %v434, %v2359
    %v2361 = vpop.f32.mrf.mxu0
    %v2362 = vadd.f32 %v438, %v2361
    %2363 = vdwg.mxu0
    %2364 = vmatprep.subr.bf16.mxu0 %v1602
    %2365 = vmatpush1.bf16.msra.mxu0 %v1601
    %2366 = vmatprep.subr.bf16.mxu0 %v1590
    %2367 = vmatpush1.bf16.msra.mxu0 %v1589
    %2368 = vmatprep.subr.bf16.mxu0 %v1578
    %2369 = vmatpush1.bf16.msra.mxu0 %v1577
    %2370 = vmatprep.subr.bf16.mxu0 %v1566
    %2371 = vmatpush1.bf16.msra.mxu0 %v1565
    %2372 = vmatprep.subr.bf16.mxu0 %v1554
    %2373 = vmatpush1.bf16.msra.mxu0 %v1553
    %2374 = vmatprep.subr.bf16.mxu0 %v1542
    %2375 = vmatpush1.bf16.msra.mxu0 %v1541
    %2376 = vmatprep.subr.bf16.mxu0 %v1530
    %2377 = vmatpush1.bf16.msra.mxu0 %v1529
    %2378 = vmatprep.subr.bf16.mxu0 %v1518
    %2379 = vmatpush1.bf16.msra.mxu0 %v1517
    %2380 = vmatprep.subr.bf16.mxu0 0
    %2381 = vmatpush2.bf16.msra.mxu0 0
    %2382 = vmatprep.subr.bf16.mxu0 0
    %2383 = vmatpush2.bf16.msra.mxu0 0
    %2384 = vmatprep.subr.bf16.mxu0 0
    %2385 = vmatpush2.bf16.msra.mxu0 0
    %2386 = vmatprep.subr.bf16.mxu0 0
    %2387 = vmatpush2.bf16.msra.mxu0 0
    %2388 = vmatprep.subr.bf16.mxu0 0
    %2389 = vmatpush2.bf16.msra.mxu0 0
    %2390 = vmatprep.subr.bf16.mxu0 0
    %2391 = vmatpush2.bf16.msra.mxu0 0
    %2392 = vmatprep.subr.bf16.mxu0 0
    %2393 = vmatpush2.bf16.msra.mxu0 0
    %2394 = vmatprep.subr.bf16.mxu0 0
    %2395 = vmatpush2.bf16.msra.mxu0 0
    %2396 = vmatprep.mubr.bf16.mxu0 0
    %2397 = vmatmul.mubr.bf16.gmra.mxu0 %v98
    %v2398 = vpop.f32.mrf.mxu0
    %v2399 = vadd.f32 %v2356, %v2398
    %v2400 = vpop.f32.mrf.mxu0
    %v2401 = vadd.f32 %v2358, %v2400
    %v2402 = vpop.f32.mrf.mxu0
    %v2403 = vadd.f32 %v2360, %v2402
    %v2404 = vpop.f32.mrf.mxu0
    %v2405 = vadd.f32 %v2362, %v2404
    %2406 = vdwg.mxu0
    %v2407 = vmax.f32 %v1969, 0.0
    %v2408 = vmax.f32 %v1971, 0.0
    %v2409 = vmax.f32 %v2055, 0.0
    %v2410 = vmax.f32 %v2057, 0.0
    %v2411 = vmax.f32 %v2141, 0.0
    %v2412 = vmax.f32 %v2143, 0.0
    %v2413 = vmax.f32 %v2227, 0.0
    %v2414 = vmax.f32 %v2229, 0.0
    %v2415 = vmax.f32 %v2313, 0.0
    %v2416 = vmax.f32 %v2315, 0.0
    %v2417 = vmax.f32 %v2399, 0.0
    %v2418 = vmax.f32 %v2401, 0.0
    %v2419 = vmax.f32 %v1973, 0.0
    %v2420 = vmax.f32 %v1975, 0.0
    %v2421 = vmax.f32 %v2059, 0.0
    %v2422 = vmax.f32 %v2061, 0.0
    %v2423 = vmax.f32 %v2145, 0.0
    %v2424 = vmax.f32 %v2147, 0.0
    %v2425 = vmax.f32 %v2231, 0.0
    %v2426 = vmax.f32 %v2233, 0.0
    %v2427 = vmax.f32 %v2317, 0.0
    %v2428 = vmax.f32 %v2319, 0.0
    %v2429 = vmax.f32 %v2403, 0.0
    %v2430 = vmax.f32 %v2405, 0.0
    %v2431 = vpack.c.bf16 %v2419, %v2407
    %v2432 = vpack.c.bf16 %v2420, %v2408
    %v2433 = vpack.c.bf16 %v2421, %v2409
    %v2434 = vpack.c.bf16 %v2422, %v2410
    %v2435 = vpack.c.bf16 %v2423, %v2411
    %v2436 = vpack.c.bf16 %v2424, %v2412
    %v2437 = vpack.c.bf16 %v2425, %v2413
    %v2438 = vpack.c.bf16 %v2426, %v2414
    %v2439 = vpack.c.bf16 %v2427, %v2415
    %v2440 = vpack.c.bf16 %v2428, %v2416
    %v2441 = vpack.c.bf16 %v2429, %v2417
    %v2442 = vpack.c.bf16 %v2430, %v2418
    %v2443 = vld [vmem:[#allocation9] sm:$0xff]
    %v2444 = vld [vmem:[#allocation9 + $0x8] sm:$0xf]
    %v2445 = vld [vmem:[#allocation9 + $0xc] sm:$0xff]
    %v2446 = vld [vmem:[#allocation9 + $0x14] sm:$0xf]
    %v2447 = vld [vmem:[#allocation9 + $0x18] sm:$0xff]
    %v2448 = vld [vmem:[#allocation9 + $0x20] sm:$0xf]
    %v2449 = vld [vmem:[#allocation9 + $0x24] sm:$0xff]
    %v2450 = vld [vmem:[#allocation9 + $0x2c] sm:$0xf]
    %v2451 = vld [vmem:[#allocation9 + $0x30] sm:$0xff]
    %v2452 = vld [vmem:[#allocation9 + $0x38] sm:$0xf]
    %v2453 = vld [vmem:[#allocation9 + $0x3c] sm:$0xff]
    %v2454 = vld [vmem:[#allocation9 + $0x44] sm:$0xf]
    %v2455 = vld [vmem:[#allocation9 + $0x48] sm:$0xff]
    %v2456 = vld [vmem:[#allocation9 + $0x50] sm:$0xf]
    %v2457 = vld [vmem:[#allocation9 + $0x54] sm:$0xff]
    %v2458 = vld [vmem:[#allocation9 + $0x5c] sm:$0xf]
    %v2459 = vld [vmem:[#allocation9 + $0x60] sm:$0xff]
    %v2460 = vld [vmem:[#allocation9 + $0x68] sm:$0xf]
    %v2461 = vld [vmem:[#allocation9 + $0x6c] sm:$0xff]
    %v2462 = vld [vmem:[#allocation9 + $0x74] sm:$0xf]
    %v2463 = vld [vmem:[#allocation9 + $0x78] sm:$0xff]
    %v2464 = vld [vmem:[#allocation9 + $0x80] sm:$0xf]
    %v2465 = vld [vmem:[#allocation9 + $0x84] sm:$0xff]
    %v2466 = vld [vmem:[#allocation9 + $0x8c] sm:$0xf]
    %v2467 = vld [vmem:[#allocation9 + $0x90] sm:$0xff]
    %v2468 = vld [vmem:[#allocation9 + $0x98] sm:$0xf]
    %v2469 = vld [vmem:[#allocation9 + $0x9c] sm:$0xff]
    %v2470 = vld [vmem:[#allocation9 + $0xa4] sm:$0xf]
    %v2471 = vld [vmem:[#allocation9 + $0xa8] sm:$0xff]
    %v2472 = vld [vmem:[#allocation9 + $0xb0] sm:$0xf]
    %v2473 = vld [vmem:[#allocation9 + $0xb4] sm:$0xff]
    %v2474 = vld [vmem:[#allocation9 + $0xbc] sm:$0xf]
    %v2475 = vld [vmem:[#allocation9 + $0xc0] sm:$0xff]
    %v2476 = vld [vmem:[#allocation9 + $0xc8] sm:$0xf]
    %v2477 = vld [vmem:[#allocation9 + $0xcc] sm:$0xff]
    %v2478 = vld [vmem:[#allocation9 + $0xd4] sm:$0xf]
    %v2479 = vld [vmem:[#allocation9 + $0xd8] sm:$0xff]
    %v2480 = vld [vmem:[#allocation9 + $0xe0] sm:$0xf]
    %v2481 = vld [vmem:[#allocation9 + $0xe4] sm:$0xff]
    %v2482 = vld [vmem:[#allocation9 + $0xec] sm:$0xf]
    %v2483 = vld [vmem:[#allocation9 + $0xf0] sm:$0xff]
    %v2484 = vld [vmem:[#allocation9 + $0xf8] sm:$0xf]
    %v2485 = vld [vmem:[#allocation9 + $0xfc] sm:$0xff]
    %v2486 = vld [vmem:[#allocation9 + $0x104] sm:$0xf]
    %v2487 = vld [vmem:[#allocation9 + $0x108] sm:$0xff]
    %v2488 = vld [vmem:[#allocation9 + $0x110] sm:$0xf]
    %v2489 = vld [vmem:[#allocation9 + $0x114] sm:$0xff]
    %v2490 = vld [vmem:[#allocation9 + $0x11c] sm:$0xf]
    %v2491 = vld [vmem:[#allocation9 + $0x120] sm:$0xff]
    %v2492 = vld [vmem:[#allocation9 + $0x128] sm:$0xf]
    %v2493 = vld [vmem:[#allocation9 + $0x12c] sm:$0xff]
    %v2494 = vld [vmem:[#allocation9 + $0x134] sm:$0xf]
    %v2495 = vld [vmem:[#allocation9 + $0x138] sm:$0xff]
    %v2496 = vld [vmem:[#allocation9 + $0x140] sm:$0xf]
    %v2497 = vld [vmem:[#allocation9 + $0x144] sm:$0xff]
    %v2498 = vld [vmem:[#allocation9 + $0x14c] sm:$0xf]
    %v2499 = vld [vmem:[#allocation9 + $0x150] sm:$0xff]
    %v2500 = vld [vmem:[#allocation9 + $0x158] sm:$0xf]
    %v2501 = vld [vmem:[#allocation9 + $0x15c] sm:$0xff]
    %v2502 = vld [vmem:[#allocation9 + $0x164] sm:$0xf]
    %v2503 = vld [vmem:[#allocation9 + $0x168] sm:$0xff]
    %v2504 = vld [vmem:[#allocation9 + $0x170] sm:$0xf]
    %v2505 = vld [vmem:[#allocation9 + $0x174] sm:$0xff]
    %v2506 = vld [vmem:[#allocation9 + $0x17c] sm:$0xf]
    %v2507 = vld [vmem:[#allocation9 + $0x180] sm:$0xff]
    %v2508 = vld [vmem:[#allocation9 + $0x188] sm:$0xf]
    %v2509 = vld [vmem:[#allocation9 + $0x18c] sm:$0xff]
    %v2510 = vld [vmem:[#allocation9 + $0x194] sm:$0xf]
    %v2511 = vld [vmem:[#allocation9 + $0x198] sm:$0xff]
    %v2512 = vld [vmem:[#allocation9 + $0x1a0] sm:$0xf]
    %v2513 = vld [vmem:[#allocation9 + $0x1a4] sm:$0xff]
    %v2514 = vld [vmem:[#allocation9 + $0x1ac] sm:$0xf]
    %v2515 = vld [vmem:[#allocation9 + $0x1b0] sm:$0xff]
    %v2516 = vld [vmem:[#allocation9 + $0x1b8] sm:$0xf]
    %v2517 = vld [vmem:[#allocation9 + $0x1bc] sm:$0xff]
    %v2518 = vld [vmem:[#allocation9 + $0x1c4] sm:$0xf]
    %v2519 = vld [vmem:[#allocation9 + $0x1c8] sm:$0xff]
    %v2520 = vld [vmem:[#allocation9 + $0x1d0] sm:$0xf]
    %v2521 = vld [vmem:[#allocation9 + $0x1d4] sm:$0xff]
    %v2522 = vld [vmem:[#allocation9 + $0x1dc] sm:$0xf]
    %v2523 = vld [vmem:[#allocation9 + $0x1e0] sm:$0xff]
    %v2524 = vld [vmem:[#allocation9 + $0x1e8] sm:$0xf]
    %v2525 = vld [vmem:[#allocation9 + $0x1ec] sm:$0xff]
    %v2526 = vld [vmem:[#allocation9 + $0x1f4] sm:$0xf]
    %v2527 = vld [vmem:[#allocation9 + $0x1f8] sm:$0xff]
    %v2528 = vld [vmem:[#allocation9 + $0x200] sm:$0xf]
    %v2529 = vld [vmem:[#allocation9 + $0x204] sm:$0xff]
    %v2530 = vld [vmem:[#allocation9 + $0x20c] sm:$0xf]
    %v2531 = vld [vmem:[#allocation9 + $0x210] sm:$0xff]
    %v2532 = vld [vmem:[#allocation9 + $0x218] sm:$0xf]
    %v2533 = vld [vmem:[#allocation9 + $0x21c] sm:$0xff]
    %v2534 = vld [vmem:[#allocation9 + $0x224] sm:$0xf]
    %v2535 = vld [vmem:[#allocation9 + $0x228] sm:$0xff]
    %v2536 = vld [vmem:[#allocation9 + $0x230] sm:$0xf]
    %v2537 = vld [vmem:[#allocation9 + $0x234] sm:$0xff]
    %v2538 = vld [vmem:[#allocation9 + $0x23c] sm:$0xf]
    %v2539 = vld [vmem:[#allocation9 + $0x240] sm:$0xff]
    %v2540 = vld [vmem:[#allocation9 + $0x248] sm:$0xf]
    %v2541 = vld [vmem:[#allocation9 + $0x24c] sm:$0xff]
    %v2542 = vld [vmem:[#allocation9 + $0x254] sm:$0xf]
    %v2543 = vld [vmem:[#allocation9 + $0x258] sm:$0xff]
    %v2544 = vld [vmem:[#allocation9 + $0x260] sm:$0xf]
    %v2545 = vld [vmem:[#allocation9 + $0x264] sm:$0xff]
    %v2546 = vld [vmem:[#allocation9 + $0x26c] sm:$0xf]
    %v2547 = vld [vmem:[#allocation9 + $0x270] sm:$0xff]
    %v2548 = vld [vmem:[#allocation9 + $0x278] sm:$0xf]
    %v2549 = vld [vmem:[#allocation9 + $0x27c] sm:$0xff]
    %v2550 = vld [vmem:[#allocation9 + $0x284] sm:$0xf]
    %v2551 = vld [vmem:[#allocation9 + $0x288] sm:$0xff]
    %v2552 = vld [vmem:[#allocation9 + $0x290] sm:$0xf]
    %v2553 = vld [vmem:[#allocation9 + $0x294] sm:$0xff]
    %v2554 = vld [vmem:[#allocation9 + $0x29c] sm:$0xf]
    %v2555 = vld [vmem:[#allocation9 + $0x2a0] sm:$0xff]
    %v2556 = vld [vmem:[#allocation9 + $0x2a8] sm:$0xf]
    %v2557 = vld [vmem:[#allocation9 + $0x2ac] sm:$0xff]
    %v2558 = vld [vmem:[#allocation9 + $0x2b4] sm:$0xf]
    %v2559 = vld [vmem:[#allocation9 + $0x2b8] sm:$0xff]
    %v2560 = vld [vmem:[#allocation9 + $0x2c0] sm:$0xf]
    %v2561 = vld [vmem:[#allocation9 + $0x2c4] sm:$0xff]
    %v2562 = vld [vmem:[#allocation9 + $0x2cc] sm:$0xf]
    %v2563 = vld [vmem:[#allocation9 + $0x2d0] sm:$0xff]
    %v2564 = vld [vmem:[#allocation9 + $0x2d8] sm:$0xf]
    %v2565 = vld [vmem:[#allocation9 + $0x2dc] sm:$0xff]
    %v2566 = vld [vmem:[#allocation9 + $0x2e4] sm:$0xf]
    %v2567 = vld [vmem:[#allocation9 + $0x2e8] sm:$0xff]
    %v2568 = vld [vmem:[#allocation9 + $0x2f0] sm:$0xf]
    %v2569 = vld [vmem:[#allocation9 + $0x2f4] sm:$0xff]
    %v2570 = vld [vmem:[#allocation9 + $0x2fc] sm:$0xf]
    %v2571 = vld [vmem:[#allocation9 + $0x300] sm:$0xff]
    %v2572 = vld [vmem:[#allocation9 + $0x308] sm:$0xf]
    %v2573 = vld [vmem:[#allocation9 + $0x30c] sm:$0xff]
    %v2574 = vld [vmem:[#allocation9 + $0x314] sm:$0xf]
    %v2575 = vld [vmem:[#allocation9 + $0x318] sm:$0xff]
    %v2576 = vld [vmem:[#allocation9 + $0x320] sm:$0xf]
    %v2577 = vld [vmem:[#allocation9 + $0x324] sm:$0xff]
    %v2578 = vld [vmem:[#allocation9 + $0x32c] sm:$0xf]
    %v2579 = vld [vmem:[#allocation9 + $0x330] sm:$0xff]
    %v2580 = vld [vmem:[#allocation9 + $0x338] sm:$0xf]
    %v2581 = vld [vmem:[#allocation9 + $0x33c] sm:$0xff]
    %v2582 = vld [vmem:[#allocation9 + $0x344] sm:$0xf]
    %v2583 = vld [vmem:[#allocation9 + $0x348] sm:$0xff]
    %v2584 = vld [vmem:[#allocation9 + $0x350] sm:$0xf]
    %v2585 = vld [vmem:[#allocation9 + $0x354] sm:$0xff]
    %v2586 = vld [vmem:[#allocation9 + $0x35c] sm:$0xf]
    %v2587 = vld [vmem:[#allocation9 + $0x360] sm:$0xff]
    %v2588 = vld [vmem:[#allocation9 + $0x368] sm:$0xf]
    %v2589 = vld [vmem:[#allocation9 + $0x36c] sm:$0xff]
    %v2590 = vld [vmem:[#allocation9 + $0x374] sm:$0xf]
    %v2591 = vld [vmem:[#allocation9 + $0x378] sm:$0xff]
    %v2592 = vld [vmem:[#allocation9 + $0x380] sm:$0xf]
    %v2593 = vld [vmem:[#allocation9 + $0x384] sm:$0xff]
    %v2594 = vld [vmem:[#allocation9 + $0x38c] sm:$0xf]
    %v2595 = vld [vmem:[#allocation9 + $0x390] sm:$0xff]
    %v2596 = vld [vmem:[#allocation9 + $0x398] sm:$0xf]
    %v2597 = vld [vmem:[#allocation9 + $0x39c] sm:$0xff]
    %v2598 = vld [vmem:[#allocation9 + $0x3a4] sm:$0xf]
    %v2599 = vld [vmem:[#allocation9 + $0x3a8] sm:$0xff]
    %v2600 = vld [vmem:[#allocation9 + $0x3b0] sm:$0xf]
    %v2601 = vld [vmem:[#allocation9 + $0x3b4] sm:$0xff]
    %v2602 = vld [vmem:[#allocation9 + $0x3bc] sm:$0xf]
    %v2603 = vld [vmem:[#allocation9 + $0x3c0] sm:$0xff]
    %v2604 = vld [vmem:[#allocation9 + $0x3c8] sm:$0xf]
    %v2605 = vld [vmem:[#allocation9 + $0x3cc] sm:$0xff]
    %v2606 = vld [vmem:[#allocation9 + $0x3d4] sm:$0xf]
    %v2607 = vld [vmem:[#allocation9 + $0x3d8] sm:$0xff]
    %v2608 = vld [vmem:[#allocation9 + $0x3e0] sm:$0xf]
    %v2609 = vld [vmem:[#allocation9 + $0x3e4] sm:$0xff]
    %v2610 = vld [vmem:[#allocation9 + $0x3ec] sm:$0xf]
    %v2611 = vld [vmem:[#allocation9 + $0x3f0] sm:$0xff]
    %v2612 = vld [vmem:[#allocation9 + $0x3f8] sm:$0xf]
    %v2613 = vld [vmem:[#allocation9 + $0x3fc] sm:$0xff]
    %v2614 = vld [vmem:[#allocation9 + $0x404] sm:$0xf]
    %v2615 = vld [vmem:[#allocation9 + $0x408] sm:$0xff]
    %v2616 = vld [vmem:[#allocation9 + $0x410] sm:$0xf]
    %v2617 = vld [vmem:[#allocation9 + $0x414] sm:$0xff]
    %v2618 = vld [vmem:[#allocation9 + $0x41c] sm:$0xf]
    %v2619 = vld [vmem:[#allocation9 + $0x420] sm:$0xff]
    %v2620 = vld [vmem:[#allocation9 + $0x428] sm:$0xf]
    %v2621 = vld [vmem:[#allocation9 + $0x42c] sm:$0xff]
    %v2622 = vld [vmem:[#allocation9 + $0x434] sm:$0xf]
    %v2623 = vld [vmem:[#allocation9 + $0x438] sm:$0xff]
    %v2624 = vld [vmem:[#allocation9 + $0x440] sm:$0xf]
    %v2625 = vld [vmem:[#allocation9 + $0x444] sm:$0xff]
    %v2626 = vld [vmem:[#allocation9 + $0x44c] sm:$0xf]
    %v2627 = vld [vmem:[#allocation9 + $0x450] sm:$0xff]
    %v2628 = vld [vmem:[#allocation9 + $0x458] sm:$0xf]
    %v2629 = vld [vmem:[#allocation9 + $0x45c] sm:$0xff]
    %v2630 = vld [vmem:[#allocation9 + $0x464] sm:$0xf]
    %v2631 = vld [vmem:[#allocation9 + $0x468] sm:$0xff]
    %v2632 = vld [vmem:[#allocation9 + $0x470] sm:$0xf]
    %v2633 = vld [vmem:[#allocation9 + $0x474] sm:$0xff]
    %v2634 = vld [vmem:[#allocation9 + $0x47c] sm:$0xf]
    %v2635 = vld [vmem:[#allocation9 + $0x480] sm:$0xff]
    %v2636 = vld [vmem:[#allocation9 + $0x488] sm:$0xf]
    %v2637 = vld [vmem:[#allocation9 + $0x48c] sm:$0xff]
    %v2638 = vld [vmem:[#allocation9 + $0x494] sm:$0xf]
    %v2639 = vld [vmem:[#allocation9 + $0x498] sm:$0xff]
    %v2640 = vld [vmem:[#allocation9 + $0x4a0] sm:$0xf]
    %v2641 = vld [vmem:[#allocation9 + $0x4a4] sm:$0xff]
    %v2642 = vld [vmem:[#allocation9 + $0x4ac] sm:$0xf]
    %v2643 = vld [vmem:[#allocation9 + $0x4b0] sm:$0xff]
    %v2644 = vld [vmem:[#allocation9 + $0x4b8] sm:$0xf]
    %v2645 = vld [vmem:[#allocation9 + $0x4bc] sm:$0xff]
    %v2646 = vld [vmem:[#allocation9 + $0x4c4] sm:$0xf]
    %v2647 = vld [vmem:[#allocation9 + $0x4c8] sm:$0xff]
    %v2648 = vld [vmem:[#allocation9 + $0x4d0] sm:$0xf]
    %v2649 = vld [vmem:[#allocation9 + $0x4d4] sm:$0xff]
    %v2650 = vld [vmem:[#allocation9 + $0x4dc] sm:$0xf]
    %v2651 = vld [vmem:[#allocation9 + $0x4e0] sm:$0xff]
    %v2652 = vld [vmem:[#allocation9 + $0x4e8] sm:$0xf]
    %v2653 = vld [vmem:[#allocation9 + $0x4ec] sm:$0xff]
    %v2654 = vld [vmem:[#allocation9 + $0x4f4] sm:$0xf]
    %v2655 = vld [vmem:[#allocation9 + $0x4f8] sm:$0xff]
    %v2656 = vld [vmem:[#allocation9 + $0x500] sm:$0xf]
    %v2657 = vld [vmem:[#allocation9 + $0x504] sm:$0xff]
    %v2658 = vld [vmem:[#allocation9 + $0x50c] sm:$0xf]
    %v2659 = vld [vmem:[#allocation9 + $0x510] sm:$0xff]
    %v2660 = vld [vmem:[#allocation9 + $0x518] sm:$0xf]
    %v2661 = vld [vmem:[#allocation9 + $0x51c] sm:$0xff]
    %v2662 = vld [vmem:[#allocation9 + $0x524] sm:$0xf]
    %v2663 = vld [vmem:[#allocation9 + $0x528] sm:$0xff]
    %v2664 = vld [vmem:[#allocation9 + $0x530] sm:$0xf]
    %v2665 = vld [vmem:[#allocation9 + $0x534] sm:$0xff]
    %v2666 = vld [vmem:[#allocation9 + $0x53c] sm:$0xf]
    %v2667 = vld [vmem:[#allocation9 + $0x540] sm:$0xff]
    %v2668 = vld [vmem:[#allocation9 + $0x548] sm:$0xf]
    %v2669 = vld [vmem:[#allocation9 + $0x54c] sm:$0xff]
    %v2670 = vld [vmem:[#allocation9 + $0x554] sm:$0xf]
    %v2671 = vld [vmem:[#allocation9 + $0x558] sm:$0xff]
    %v2672 = vld [vmem:[#allocation9 + $0x560] sm:$0xf]
    %v2673 = vld [vmem:[#allocation9 + $0x564] sm:$0xff]
    %v2674 = vld [vmem:[#allocation9 + $0x56c] sm:$0xf]
    %v2675 = vld [vmem:[#allocation9 + $0x570] sm:$0xff]
    %v2676 = vld [vmem:[#allocation9 + $0x578] sm:$0xf]
    %v2677 = vld [vmem:[#allocation9 + $0x57c] sm:$0xff]
    %v2678 = vld [vmem:[#allocation9 + $0x584] sm:$0xf]
    %v2679 = vld [vmem:[#allocation9 + $0x588] sm:$0xff]
    %v2680 = vld [vmem:[#allocation9 + $0x590] sm:$0xf]
    %v2681 = vld [vmem:[#allocation9 + $0x594] sm:$0xff]
    %v2682 = vld [vmem:[#allocation9 + $0x59c] sm:$0xf]
    %v2683 = vld [vmem:[#allocation9 + $0x5a0] sm:$0xff]
    %v2684 = vld [vmem:[#allocation9 + $0x5a8] sm:$0xf]
    %v2685 = vld [vmem:[#allocation9 + $0x5ac] sm:$0xff]
    %v2686 = vld [vmem:[#allocation9 + $0x5b4] sm:$0xf]
    %v2687 = vld [vmem:[#allocation9 + $0x5b8] sm:$0xff]
    %v2688 = vld [vmem:[#allocation9 + $0x5c0] sm:$0xf]
    %v2689 = vld [vmem:[#allocation9 + $0x5c4] sm:$0xff]
    %v2690 = vld [vmem:[#allocation9 + $0x5cc] sm:$0xf]
    %v2691 = vld [vmem:[#allocation9 + $0x5d0] sm:$0xff]
    %v2692 = vld [vmem:[#allocation9 + $0x5d8] sm:$0xf]
    %v2693 = vld [vmem:[#allocation9 + $0x5dc] sm:$0xff]
    %v2694 = vld [vmem:[#allocation9 + $0x5e4] sm:$0xf]
    %v2695 = vld [vmem:[#allocation9 + $0x5e8] sm:$0xff]
    %v2696 = vld [vmem:[#allocation9 + $0x5f0] sm:$0xf]
    %v2697 = vld [vmem:[#allocation9 + $0x5f4] sm:$0xff]
    %v2698 = vld [vmem:[#allocation9 + $0x5fc] sm:$0xf]
    %v2699 = vld [vmem:[#allocation9 + $0x600] sm:$0xff]
    %v2700 = vld [vmem:[#allocation9 + $0x608] sm:$0xf]
    %v2701 = vld [vmem:[#allocation9 + $0x60c] sm:$0xff]
    %v2702 = vld [vmem:[#allocation9 + $0x614] sm:$0xf]
    %v2703 = vld [vmem:[#allocation9 + $0x618] sm:$0xff]
    %v2704 = vld [vmem:[#allocation9 + $0x620] sm:$0xf]
    %v2705 = vld [vmem:[#allocation9 + $0x624] sm:$0xff]
    %v2706 = vld [vmem:[#allocation9 + $0x62c] sm:$0xf]
    %v2707 = vld [vmem:[#allocation9 + $0x630] sm:$0xff]
    %v2708 = vld [vmem:[#allocation9 + $0x638] sm:$0xf]
    %v2709 = vld [vmem:[#allocation9 + $0x63c] sm:$0xff]
    %v2710 = vld [vmem:[#allocation9 + $0x644] sm:$0xf]
    %v2711 = vld [vmem:[#allocation9 + $0x648] sm:$0xff]
    %v2712 = vld [vmem:[#allocation9 + $0x650] sm:$0xf]
    %v2713 = vld [vmem:[#allocation9 + $0x654] sm:$0xff]
    %v2714 = vld [vmem:[#allocation9 + $0x65c] sm:$0xf]
    %v2715 = vld [vmem:[#allocation9 + $0x660] sm:$0xff]
    %v2716 = vld [vmem:[#allocation9 + $0x668] sm:$0xf]
    %v2717 = vld [vmem:[#allocation9 + $0x66c] sm:$0xff]
    %v2718 = vld [vmem:[#allocation9 + $0x674] sm:$0xf]
    %v2719 = vld [vmem:[#allocation9 + $0x678] sm:$0xff]
    %v2720 = vld [vmem:[#allocation9 + $0x680] sm:$0xf]
    %v2721 = vld [vmem:[#allocation9 + $0x684] sm:$0xff]
    %v2722 = vld [vmem:[#allocation9 + $0x68c] sm:$0xf]
    %v2723 = vld [vmem:[#allocation9 + $0x690] sm:$0xff]
    %v2724 = vld [vmem:[#allocation9 + $0x698] sm:$0xf]
    %v2725 = vld [vmem:[#allocation9 + $0x69c] sm:$0xff]
    %v2726 = vld [vmem:[#allocation9 + $0x6a4] sm:$0xf]
    %v2727 = vld [vmem:[#allocation9 + $0x6a8] sm:$0xff]
    %v2728 = vld [vmem:[#allocation9 + $0x6b0] sm:$0xf]
    %v2729 = vld [vmem:[#allocation9 + $0x6b4] sm:$0xff]
    %v2730 = vld [vmem:[#allocation9 + $0x6bc] sm:$0xf]
    %v2731 = vld [vmem:[#allocation9 + $0x6c0] sm:$0xff]
    %v2732 = vld [vmem:[#allocation9 + $0x6c8] sm:$0xf]
    %v2733 = vld [vmem:[#allocation9 + $0x6cc] sm:$0xff]
    %v2734 = vld [vmem:[#allocation9 + $0x6d4] sm:$0xf]
    %v2735 = vld [vmem:[#allocation9 + $0x6d8] sm:$0xff]
    %v2736 = vld [vmem:[#allocation9 + $0x6e0] sm:$0xf]
    %v2737 = vld [vmem:[#allocation9 + $0x6e4] sm:$0xff]
    %v2738 = vld [vmem:[#allocation9 + $0x6ec] sm:$0xf]
    %v2739 = vld [vmem:[#allocation9 + $0x6f0] sm:$0xff]
    %v2740 = vld [vmem:[#allocation9 + $0x6f8] sm:$0xf]
    %v2741 = vld [vmem:[#allocation9 + $0x6fc] sm:$0xff]
    %v2742 = vld [vmem:[#allocation9 + $0x704] sm:$0xf]
    %v2743 = vld [vmem:[#allocation9 + $0x708] sm:$0xff]
    %v2744 = vld [vmem:[#allocation9 + $0x710] sm:$0xf]
    %v2745 = vld [vmem:[#allocation9 + $0x714] sm:$0xff]
    %v2746 = vld [vmem:[#allocation9 + $0x71c] sm:$0xf]
    %v2747 = vld [vmem:[#allocation9 + $0x720] sm:$0xff]
    %v2748 = vld [vmem:[#allocation9 + $0x728] sm:$0xf]
    %v2749 = vld [vmem:[#allocation9 + $0x72c] sm:$0xff]
    %v2750 = vld [vmem:[#allocation9 + $0x734] sm:$0xf]
    %v2751 = vld [vmem:[#allocation9 + $0x738] sm:$0xff]
    %v2752 = vld [vmem:[#allocation9 + $0x740] sm:$0xf]
    %v2753 = vld [vmem:[#allocation9 + $0x744] sm:$0xff]
    %v2754 = vld [vmem:[#allocation9 + $0x74c] sm:$0xf]
    %v2755 = vld [vmem:[#allocation9 + $0x750] sm:$0xff]
    %v2756 = vld [vmem:[#allocation9 + $0x758] sm:$0xf]
    %v2757 = vld [vmem:[#allocation9 + $0x75c] sm:$0xff]
    %v2758 = vld [vmem:[#allocation9 + $0x764] sm:$0xf]
    %v2759 = vld [vmem:[#allocation9 + $0x768] sm:$0xff]
    %v2760 = vld [vmem:[#allocation9 + $0x770] sm:$0xf]
    %v2761 = vld [vmem:[#allocation9 + $0x774] sm:$0xff]
    %v2762 = vld [vmem:[#allocation9 + $0x77c] sm:$0xf]
    %v2763 = vld [vmem:[#allocation9 + $0x780] sm:$0xff]
    %v2764 = vld [vmem:[#allocation9 + $0x788] sm:$0xf]
    %v2765 = vld [vmem:[#allocation9 + $0x78c] sm:$0xff]
    %v2766 = vld [vmem:[#allocation9 + $0x794] sm:$0xf]
    %v2767 = vld [vmem:[#allocation9 + $0x798] sm:$0xff]
    %v2768 = vld [vmem:[#allocation9 + $0x7a0] sm:$0xf]
    %v2769 = vld [vmem:[#allocation9 + $0x7a4] sm:$0xff]
    %v2770 = vld [vmem:[#allocation9 + $0x7ac] sm:$0xf]
    %v2771 = vld [vmem:[#allocation9 + $0x7b0] sm:$0xff]
    %v2772 = vld [vmem:[#allocation9 + $0x7b8] sm:$0xf]
    %v2773 = vld [vmem:[#allocation9 + $0x7bc] sm:$0xff]
    %v2774 = vld [vmem:[#allocation9 + $0x7c4] sm:$0xf]
    %v2775 = vld [vmem:[#allocation9 + $0x7c8] sm:$0xff]
    %v2776 = vld [vmem:[#allocation9 + $0x7d0] sm:$0xf]
    %v2777 = vld [vmem:[#allocation9 + $0x7d4] sm:$0xff]
    %v2778 = vld [vmem:[#allocation9 + $0x7dc] sm:$0xf]
    %v2779 = vld [vmem:[#allocation9 + $0x7e0] sm:$0xff]
    %v2780 = vld [vmem:[#allocation9 + $0x7e8] sm:$0xf]
    %v2781 = vld [vmem:[#allocation9 + $0x7ec] sm:$0xff]
    %v2782 = vld [vmem:[#allocation9 + $0x7f4] sm:$0xf]
    %v2783 = vld [vmem:[#allocation9 + $0x7f8] sm:$0xff]
    %v2784 = vld [vmem:[#allocation9 + $0x800] sm:$0xf]
    %v2785 = vld [vmem:[#allocation9 + $0x804] sm:$0xff]
    %v2786 = vld [vmem:[#allocation9 + $0x80c] sm:$0xf]
    %v2787 = vld [vmem:[#allocation9 + $0x810] sm:$0xff]
    %v2788 = vld [vmem:[#allocation9 + $0x818] sm:$0xf]
    %v2789 = vld [vmem:[#allocation9 + $0x81c] sm:$0xff]
    %v2790 = vld [vmem:[#allocation9 + $0x824] sm:$0xf]
    %v2791 = vld [vmem:[#allocation9 + $0x828] sm:$0xff]
    %v2792 = vld [vmem:[#allocation9 + $0x830] sm:$0xf]
    %v2793 = vld [vmem:[#allocation9 + $0x834] sm:$0xff]
    %v2794 = vld [vmem:[#allocation9 + $0x83c] sm:$0xf]
    %v2795 = vld [vmem:[#allocation9 + $0x840] sm:$0xff]
    %v2796 = vld [vmem:[#allocation9 + $0x848] sm:$0xf]
    %v2797 = vld [vmem:[#allocation9 + $0x84c] sm:$0xff]
    %v2798 = vld [vmem:[#allocation9 + $0x854] sm:$0xf]
    %v2799 = vld [vmem:[#allocation9 + $0x858] sm:$0xff]
    %v2800 = vld [vmem:[#allocation9 + $0x860] sm:$0xf]
    %v2801 = vld [vmem:[#allocation9 + $0x864] sm:$0xff]
    %v2802 = vld [vmem:[#allocation9 + $0x86c] sm:$0xf]
    %v2803 = vld [vmem:[#allocation9 + $0x870] sm:$0xff]
    %v2804 = vld [vmem:[#allocation9 + $0x878] sm:$0xf]
    %v2805 = vld [vmem:[#allocation9 + $0x87c] sm:$0xff]
    %v2806 = vld [vmem:[#allocation9 + $0x884] sm:$0xf]
    %v2807 = vld [vmem:[#allocation9 + $0x888] sm:$0xff]
    %v2808 = vld [vmem:[#allocation9 + $0x890] sm:$0xf]
    %v2809 = vld [vmem:[#allocation9 + $0x894] sm:$0xff]
    %v2810 = vld [vmem:[#allocation9 + $0x89c] sm:$0xf]
    %v2811 = vld [vmem:[#allocation9 + $0x8a0] sm:$0xff]
    %v2812 = vld [vmem:[#allocation9 + $0x8a8] sm:$0xf]
    %v2813 = vld [vmem:[#allocation9 + $0x8ac] sm:$0xff]
    %v2814 = vld [vmem:[#allocation9 + $0x8b4] sm:$0xf]
    %v2815 = vld [vmem:[#allocation9 + $0x8b8] sm:$0xff]
    %v2816 = vld [vmem:[#allocation9 + $0x8c0] sm:$0xf]
    %v2817 = vld [vmem:[#allocation9 + $0x8c4] sm:$0xff]
    %v2818 = vld [vmem:[#allocation9 + $0x8cc] sm:$0xf]
    %v2819 = vld [vmem:[#allocation9 + $0x8d0] sm:$0xff]
    %v2820 = vld [vmem:[#allocation9 + $0x8d8] sm:$0xf]
    %v2821 = vld [vmem:[#allocation9 + $0x8dc] sm:$0xff]
    %v2822 = vld [vmem:[#allocation9 + $0x8e4] sm:$0xf]
    %v2823 = vld [vmem:[#allocation9 + $0x8e8] sm:$0xff]
    %v2824 = vld [vmem:[#allocation9 + $0x8f0] sm:$0xf]
    %v2825 = vld [vmem:[#allocation9 + $0x8f4] sm:$0xff]
    %v2826 = vld [vmem:[#allocation9 + $0x8fc] sm:$0xf]
    %v2827 = vld [vmem:[#allocation11] sm:$0x7]
    %v2829 = vlaneseq
    %v2830 = vshrl.u32 %v2829, 7
    %v2831 = vsub.s32 0, %v2830
    %v2832 = vrot.slane %v2827, %v2831
    %v2833 = vlaneseq
    %v2834 = vshrl.u32 %v2833, 7
    %v2835 = vsub.s32 1, %v2834
    %v2836 = vrot.slane %v2827, %v2835
    %v2837 = vlaneseq
    %v2838 = vshrl.u32 %v2837, 7
    %v2839 = vsub.s32 2, %v2838
    %v2840 = vrot.slane %v2827, %v2839
    %v3228 = vunpack.c.l.b16 %v2443
    %v3229 = vunpack.c.h.b16 %v2443
    %v3230 = vunpack.c.l.b16 %v2444
    %v3231 = vunpack.c.l.b16 %v2445
    %v3232 = vunpack.c.h.b16 %v2445
    %v3233 = vunpack.c.l.b16 %v2446
    %v3234 = vunpack.c.l.b16 %v2447
    %v3235 = vunpack.c.h.b16 %v2447
    %v3236 = vunpack.c.l.b16 %v2448
    %v3237 = vunpack.c.l.b16 %v2449
    %v3238 = vunpack.c.h.b16 %v2449
    %v3239 = vunpack.c.l.b16 %v2450
    %v3240 = vunpack.c.l.b16 %v2451
    %v3241 = vunpack.c.h.b16 %v2451
    %v3242 = vunpack.c.l.b16 %v2452
    %v3243 = vunpack.c.l.b16 %v2453
    %v3244 = vunpack.c.h.b16 %v2453
    %v3245 = vunpack.c.l.b16 %v2454
    %v3246 = vunpack.c.l.b16 %v2455
    %v3247 = vunpack.c.h.b16 %v2455
    %v3248 = vunpack.c.l.b16 %v2456
    %v3249 = vunpack.c.l.b16 %v2457
    %v3250 = vunpack.c.h.b16 %v2457
    %v3251 = vunpack.c.l.b16 %v2458
    %v3252 = vunpack.c.l.b16 %v2459
    %v3253 = vunpack.c.h.b16 %v2459
    %v3254 = vunpack.c.l.b16 %v2460
    %v3255 = vunpack.c.l.b16 %v2461
    %v3256 = vunpack.c.h.b16 %v2461
    %v3257 = vunpack.c.l.b16 %v2462
    %v3258 = vunpack.c.l.b16 %v2463
    %v3259 = vunpack.c.h.b16 %v2463
    %v3260 = vunpack.c.l.b16 %v2464
    %v3261 = vunpack.c.l.b16 %v2465
    %v3262 = vunpack.c.h.b16 %v2465
    %v3263 = vunpack.c.l.b16 %v2466
    %v3264 = vunpack.c.l.b16 %v2467
    %v3265 = vunpack.c.h.b16 %v2467
    %v3266 = vunpack.c.l.b16 %v2468
    %v3267 = vunpack.c.l.b16 %v2469
    %v3268 = vunpack.c.h.b16 %v2469
    %v3269 = vunpack.c.l.b16 %v2470
    %v3270 = vunpack.c.l.b16 %v2471
    %v3271 = vunpack.c.h.b16 %v2471
    %v3272 = vunpack.c.l.b16 %v2472
    %v3273 = vunpack.c.l.b16 %v2473
    %v3274 = vunpack.c.h.b16 %v2473
    %v3275 = vunpack.c.l.b16 %v2474
    %v3276 = vunpack.c.l.b16 %v2475
    %v3277 = vunpack.c.h.b16 %v2475
    %v3278 = vunpack.c.l.b16 %v2476
    %v3279 = vunpack.c.l.b16 %v2477
    %v3280 = vunpack.c.h.b16 %v2477
    %v3281 = vunpack.c.l.b16 %v2478
    %v3282 = vunpack.c.l.b16 %v2479
    %v3283 = vunpack.c.h.b16 %v2479
    %v3284 = vunpack.c.l.b16 %v2480
    %v3285 = vunpack.c.l.b16 %v2481
    %v3286 = vunpack.c.h.b16 %v2481
    %v3287 = vunpack.c.l.b16 %v2482
    %v3288 = vunpack.c.l.b16 %v2483
    %v3289 = vunpack.c.h.b16 %v2483
    %v3290 = vunpack.c.l.b16 %v2484
    %v3291 = vunpack.c.l.b16 %v2485
    %v3292 = vunpack.c.h.b16 %v2485
    %v3293 = vunpack.c.l.b16 %v2486
    %v3294 = vunpack.c.l.b16 %v2487
    %v3295 = vunpack.c.h.b16 %v2487
    %v3296 = vunpack.c.l.b16 %v2488
    %v3297 = vunpack.c.l.b16 %v2489
    %v3298 = vunpack.c.h.b16 %v2489
    %v3299 = vunpack.c.l.b16 %v2490
    %v3300 = vunpack.c.l.b16 %v2491
    %v3301 = vunpack.c.h.b16 %v2491
    %v3302 = vunpack.c.l.b16 %v2492
    %v3303 = vunpack.c.l.b16 %v2493
    %v3304 = vunpack.c.h.b16 %v2493
    %v3305 = vunpack.c.l.b16 %v2494
    %v3306 = vunpack.c.l.b16 %v2495
    %v3307 = vunpack.c.h.b16 %v2495
    %v3308 = vunpack.c.l.b16 %v2496
    %v3309 = vunpack.c.l.b16 %v2497
    %v3310 = vunpack.c.h.b16 %v2497
    %v3311 = vunpack.c.l.b16 %v2498
    %v3312 = vunpack.c.l.b16 %v2499
    %v3313 = vunpack.c.h.b16 %v2499
    %v3314 = vunpack.c.l.b16 %v2500
    %v3315 = vunpack.c.l.b16 %v2501
    %v3316 = vunpack.c.h.b16 %v2501
    %v3317 = vunpack.c.l.b16 %v2502
    %v3318 = vunpack.c.l.b16 %v2503
    %v3319 = vunpack.c.h.b16 %v2503
    %v3320 = vunpack.c.l.b16 %v2504
    %v3321 = vunpack.c.l.b16 %v2505
    %v3322 = vunpack.c.h.b16 %v2505
    %v3323 = vunpack.c.l.b16 %v2506
    %v3324 = vunpack.c.l.b16 %v2507
    %v3325 = vunpack.c.h.b16 %v2507
    %v3326 = vunpack.c.l.b16 %v2508
    %v3327 = vunpack.c.l.b16 %v2509
    %v3328 = vunpack.c.h.b16 %v2509
    %v3329 = vunpack.c.l.b16 %v2510
    %v3330 = vunpack.c.l.b16 %v2511
    %v3331 = vunpack.c.h.b16 %v2511
    %v3332 = vunpack.c.l.b16 %v2512
    %v3333 = vunpack.c.l.b16 %v2513
    %v3334 = vunpack.c.h.b16 %v2513
    %v3335 = vunpack.c.l.b16 %v2514
    %v3336 = vunpack.c.l.b16 %v2515
    %v3337 = vunpack.c.h.b16 %v2515
    %v3338 = vunpack.c.l.b16 %v2516
    %v3339 = vunpack.c.l.b16 %v2517
    %v3340 = vunpack.c.h.b16 %v2517
    %v3341 = vunpack.c.l.b16 %v2518
    %v3342 = vunpack.c.l.b16 %v2519
    %v3343 = vunpack.c.h.b16 %v2519
    %v3344 = vunpack.c.l.b16 %v2520
    %v3345 = vunpack.c.l.b16 %v2521
    %v3346 = vunpack.c.h.b16 %v2521
    %v3347 = vunpack.c.l.b16 %v2522
    %v3348 = vunpack.c.l.b16 %v2523
    %v3349 = vunpack.c.h.b16 %v2523
    %v3350 = vunpack.c.l.b16 %v2524
    %v3351 = vunpack.c.l.b16 %v2525
    %v3352 = vunpack.c.h.b16 %v2525
    %v3353 = vunpack.c.l.b16 %v2526
    %v3354 = vunpack.c.l.b16 %v2527
    %v3355 = vunpack.c.h.b16 %v2527
    %v3356 = vunpack.c.l.b16 %v2528
    %v3357 = vunpack.c.l.b16 %v2529
    %v3358 = vunpack.c.h.b16 %v2529
    %v3359 = vunpack.c.l.b16 %v2530
    %v3360 = vunpack.c.l.b16 %v2531
    %v3361 = vunpack.c.h.b16 %v2531
    %v3362 = vunpack.c.l.b16 %v2532
    %v3363 = vunpack.c.l.b16 %v2533
    %v3364 = vunpack.c.h.b16 %v2533
    %v3365 = vunpack.c.l.b16 %v2534
    %v3366 = vunpack.c.l.b16 %v2535
    %v3367 = vunpack.c.h.b16 %v2535
    %v3368 = vunpack.c.l.b16 %v2536
    %v3369 = vunpack.c.l.b16 %v2537
    %v3370 = vunpack.c.h.b16 %v2537
    %v3371 = vunpack.c.l.b16 %v2538
    %v3372 = vunpack.c.l.b16 %v2539
    %v3373 = vunpack.c.h.b16 %v2539
    %v3374 = vunpack.c.l.b16 %v2540
    %v3375 = vunpack.c.l.b16 %v2541
    %v3376 = vunpack.c.h.b16 %v2541
    %v3377 = vunpack.c.l.b16 %v2542
    %v3378 = vunpack.c.l.b16 %v2543
    %v3379 = vunpack.c.h.b16 %v2543
    %v3380 = vunpack.c.l.b16 %v2544
    %v3381 = vunpack.c.l.b16 %v2545
    %v3382 = vunpack.c.h.b16 %v2545
    %v3383 = vunpack.c.l.b16 %v2546
    %v3384 = vunpack.c.l.b16 %v2547
    %v3385 = vunpack.c.h.b16 %v2547
    %v3386 = vunpack.c.l.b16 %v2548
    %v3387 = vunpack.c.l.b16 %v2549
    %v3388 = vunpack.c.h.b16 %v2549
    %v3389 = vunpack.c.l.b16 %v2550
    %v3390 = vunpack.c.l.b16 %v2551
    %v3391 = vunpack.c.h.b16 %v2551
    %v3392 = vunpack.c.l.b16 %v2552
    %v3393 = vunpack.c.l.b16 %v2553
    %v3394 = vunpack.c.h.b16 %v2553
    %v3395 = vunpack.c.l.b16 %v2554
    %v3396 = vunpack.c.l.b16 %v2555
    %v3397 = vunpack.c.h.b16 %v2555
    %v3398 = vunpack.c.l.b16 %v2556
    %v3399 = vunpack.c.l.b16 %v2557
    %v3400 = vunpack.c.h.b16 %v2557
    %v3401 = vunpack.c.l.b16 %v2558
    %v3402 = vunpack.c.l.b16 %v2559
    %v3403 = vunpack.c.h.b16 %v2559
    %v3404 = vunpack.c.l.b16 %v2560
    %v3405 = vunpack.c.l.b16 %v2561
    %v3406 = vunpack.c.h.b16 %v2561
    %v3407 = vunpack.c.l.b16 %v2562
    %v3408 = vunpack.c.l.b16 %v2563
    %v3409 = vunpack.c.h.b16 %v2563
    %v3410 = vunpack.c.l.b16 %v2564
    %v3411 = vunpack.c.l.b16 %v2565
    %v3412 = vunpack.c.h.b16 %v2565
    %v3413 = vunpack.c.l.b16 %v2566
    %v3414 = vunpack.c.l.b16 %v2567
    %v3415 = vunpack.c.h.b16 %v2567
    %v3416 = vunpack.c.l.b16 %v2568
    %v3417 = vunpack.c.l.b16 %v2569
    %v3418 = vunpack.c.h.b16 %v2569
    %v3419 = vunpack.c.l.b16 %v2570
    %v3420 = vunpack.c.l.b16 %v2571
    %v3421 = vunpack.c.h.b16 %v2571
    %v3422 = vunpack.c.l.b16 %v2572
    %v3423 = vunpack.c.l.b16 %v2573
    %v3424 = vunpack.c.h.b16 %v2573
    %v3425 = vunpack.c.l.b16 %v2574
    %v3426 = vunpack.c.l.b16 %v2575
    %v3427 = vunpack.c.h.b16 %v2575
    %v3428 = vunpack.c.l.b16 %v2576
    %v3429 = vunpack.c.l.b16 %v2577
    %v3430 = vunpack.c.h.b16 %v2577
    %v3431 = vunpack.c.l.b16 %v2578
    %v3432 = vunpack.c.l.b16 %v2579
    %v3433 = vunpack.c.h.b16 %v2579
    %v3434 = vunpack.c.l.b16 %v2580
    %v3435 = vunpack.c.l.b16 %v2581
    %v3436 = vunpack.c.h.b16 %v2581
    %v3437 = vunpack.c.l.b16 %v2582
    %v3438 = vunpack.c.l.b16 %v2583
    %v3439 = vunpack.c.h.b16 %v2583
    %v3440 = vunpack.c.l.b16 %v2584
    %v3441 = vunpack.c.l.b16 %v2585
    %v3442 = vunpack.c.h.b16 %v2585
    %v3443 = vunpack.c.l.b16 %v2586
    %v3444 = vunpack.c.l.b16 %v2587
    %v3445 = vunpack.c.h.b16 %v2587
    %v3446 = vunpack.c.l.b16 %v2588
    %v3447 = vunpack.c.l.b16 %v2589
    %v3448 = vunpack.c.h.b16 %v2589
    %v3449 = vunpack.c.l.b16 %v2590
    %v3450 = vunpack.c.l.b16 %v2591
    %v3451 = vunpack.c.h.b16 %v2591
    %v3452 = vunpack.c.l.b16 %v2592
    %v3453 = vunpack.c.l.b16 %v2593
    %v3454 = vunpack.c.h.b16 %v2593
    %v3455 = vunpack.c.l.b16 %v2594
    %v3456 = vunpack.c.l.b16 %v2595
    %v3457 = vunpack.c.h.b16 %v2595
    %v3458 = vunpack.c.l.b16 %v2596
    %v3459 = vunpack.c.l.b16 %v2597
    %v3460 = vunpack.c.h.b16 %v2597
    %v3461 = vunpack.c.l.b16 %v2598
    %v3462 = vunpack.c.l.b16 %v2599
    %v3463 = vunpack.c.h.b16 %v2599
    %v3464 = vunpack.c.l.b16 %v2600
    %v3465 = vunpack.c.l.b16 %v2601
    %v3466 = vunpack.c.h.b16 %v2601
    %v3467 = vunpack.c.l.b16 %v2602
    %v3468 = vunpack.c.l.b16 %v2603
    %v3469 = vunpack.c.h.b16 %v2603
    %v3470 = vunpack.c.l.b16 %v2604
    %v3471 = vunpack.c.l.b16 %v2605
    %v3472 = vunpack.c.h.b16 %v2605
    %v3473 = vunpack.c.l.b16 %v2606
    %v3474 = vunpack.c.l.b16 %v2607
    %v3475 = vunpack.c.h.b16 %v2607
    %v3476 = vunpack.c.l.b16 %v2608
    %v3477 = vunpack.c.l.b16 %v2609
    %v3478 = vunpack.c.h.b16 %v2609
    %v3479 = vunpack.c.l.b16 %v2610
    %v3480 = vunpack.c.l.b16 %v2611
    %v3481 = vunpack.c.h.b16 %v2611
    %v3482 = vunpack.c.l.b16 %v2612
    %v3483 = vunpack.c.l.b16 %v2613
    %v3484 = vunpack.c.h.b16 %v2613
    %v3485 = vunpack.c.l.b16 %v2614
    %v3486 = vunpack.c.l.b16 %v2615
    %v3487 = vunpack.c.h.b16 %v2615
    %v3488 = vunpack.c.l.b16 %v2616
    %v3489 = vunpack.c.l.b16 %v2617
    %v3490 = vunpack.c.h.b16 %v2617
    %v3491 = vunpack.c.l.b16 %v2618
    %v3492 = vunpack.c.l.b16 %v2619
    %v3493 = vunpack.c.h.b16 %v2619
    %v3494 = vunpack.c.l.b16 %v2620
    %v3495 = vunpack.c.l.b16 %v2621
    %v3496 = vunpack.c.h.b16 %v2621
    %v3497 = vunpack.c.l.b16 %v2622
    %v3498 = vunpack.c.l.b16 %v2623
    %v3499 = vunpack.c.h.b16 %v2623
    %v3500 = vunpack.c.l.b16 %v2624
    %v3501 = vunpack.c.l.b16 %v2625
    %v3502 = vunpack.c.h.b16 %v2625
    %v3503 = vunpack.c.l.b16 %v2626
    %v3504 = vunpack.c.l.b16 %v2627
    %v3505 = vunpack.c.h.b16 %v2627
    %v3506 = vunpack.c.l.b16 %v2628
    %v3507 = vunpack.c.l.b16 %v2629
    %v3508 = vunpack.c.h.b16 %v2629
    %v3509 = vunpack.c.l.b16 %v2630
    %v3510 = vunpack.c.l.b16 %v2631
    %v3511 = vunpack.c.h.b16 %v2631
    %v3512 = vunpack.c.l.b16 %v2632
    %v3513 = vunpack.c.l.b16 %v2633
    %v3514 = vunpack.c.h.b16 %v2633
    %v3515 = vunpack.c.l.b16 %v2634
    %v3516 = vunpack.c.l.b16 %v2635
    %v3517 = vunpack.c.h.b16 %v2635
    %v3518 = vunpack.c.l.b16 %v2636
    %v3519 = vunpack.c.l.b16 %v2637
    %v3520 = vunpack.c.h.b16 %v2637
    %v3521 = vunpack.c.l.b16 %v2638
    %v3522 = vunpack.c.l.b16 %v2639
    %v3523 = vunpack.c.h.b16 %v2639
    %v3524 = vunpack.c.l.b16 %v2640
    %v3525 = vunpack.c.l.b16 %v2641
    %v3526 = vunpack.c.h.b16 %v2641
    %v3527 = vunpack.c.l.b16 %v2642
    %v3528 = vunpack.c.l.b16 %v2643
    %v3529 = vunpack.c.h.b16 %v2643
    %v3530 = vunpack.c.l.b16 %v2644
    %v3531 = vunpack.c.l.b16 %v2645
    %v3532 = vunpack.c.h.b16 %v2645
    %v3533 = vunpack.c.l.b16 %v2646
    %v3534 = vunpack.c.l.b16 %v2647
    %v3535 = vunpack.c.h.b16 %v2647
    %v3536 = vunpack.c.l.b16 %v2648
    %v3537 = vunpack.c.l.b16 %v2649
    %v3538 = vunpack.c.h.b16 %v2649
    %v3539 = vunpack.c.l.b16 %v2650
    %v3540 = vunpack.c.l.b16 %v2651
    %v3541 = vunpack.c.h.b16 %v2651
    %v3542 = vunpack.c.l.b16 %v2652
    %v3543 = vunpack.c.l.b16 %v2653
    %v3544 = vunpack.c.h.b16 %v2653
    %v3545 = vunpack.c.l.b16 %v2654
    %v3546 = vunpack.c.l.b16 %v2655
    %v3547 = vunpack.c.h.b16 %v2655
    %v3548 = vunpack.c.l.b16 %v2656
    %v3549 = vunpack.c.l.b16 %v2657
    %v3550 = vunpack.c.h.b16 %v2657
    %v3551 = vunpack.c.l.b16 %v2658
    %v3552 = vunpack.c.l.b16 %v2659
    %v3553 = vunpack.c.h.b16 %v2659
    %v3554 = vunpack.c.l.b16 %v2660
    %v3555 = vunpack.c.l.b16 %v2661
    %v3556 = vunpack.c.h.b16 %v2661
    %v3557 = vunpack.c.l.b16 %v2662
    %v3558 = vunpack.c.l.b16 %v2663
    %v3559 = vunpack.c.h.b16 %v2663
    %v3560 = vunpack.c.l.b16 %v2664
    %v3561 = vunpack.c.l.b16 %v2665
    %v3562 = vunpack.c.h.b16 %v2665
    %v3563 = vunpack.c.l.b16 %v2666
    %v3564 = vunpack.c.l.b16 %v2667
    %v3565 = vunpack.c.h.b16 %v2667
    %v3566 = vunpack.c.l.b16 %v2668
    %v3567 = vunpack.c.l.b16 %v2669
    %v3568 = vunpack.c.h.b16 %v2669
    %v3569 = vunpack.c.l.b16 %v2670
    %v3570 = vunpack.c.l.b16 %v2671
    %v3571 = vunpack.c.h.b16 %v2671
    %v3572 = vunpack.c.l.b16 %v2672
    %v3573 = vunpack.c.l.b16 %v2673
    %v3574 = vunpack.c.h.b16 %v2673
    %v3575 = vunpack.c.l.b16 %v2674
    %v3576 = vunpack.c.l.b16 %v2675
    %v3577 = vunpack.c.h.b16 %v2675
    %v3578 = vunpack.c.l.b16 %v2676
    %v3579 = vunpack.c.l.b16 %v2677
    %v3580 = vunpack.c.h.b16 %v2677
    %v3581 = vunpack.c.l.b16 %v2678
    %v3582 = vunpack.c.l.b16 %v2679
    %v3583 = vunpack.c.h.b16 %v2679
    %v3584 = vunpack.c.l.b16 %v2680
    %v3585 = vunpack.c.l.b16 %v2681
    %v3586 = vunpack.c.h.b16 %v2681
    %v3587 = vunpack.c.l.b16 %v2682
    %v3588 = vunpack.c.l.b16 %v2683
    %v3589 = vunpack.c.h.b16 %v2683
    %v3590 = vunpack.c.l.b16 %v2684
    %v3591 = vunpack.c.l.b16 %v2685
    %v3592 = vunpack.c.h.b16 %v2685
    %v3593 = vunpack.c.l.b16 %v2686
    %v3594 = vunpack.c.l.b16 %v2687
    %v3595 = vunpack.c.h.b16 %v2687
    %v3596 = vunpack.c.l.b16 %v2688
    %v3597 = vunpack.c.l.b16 %v2689
    %v3598 = vunpack.c.h.b16 %v2689
    %v3599 = vunpack.c.l.b16 %v2690
    %v3600 = vunpack.c.l.b16 %v2691
    %v3601 = vunpack.c.h.b16 %v2691
    %v3602 = vunpack.c.l.b16 %v2692
    %v3603 = vunpack.c.l.b16 %v2693
    %v3604 = vunpack.c.h.b16 %v2693
    %v3605 = vunpack.c.l.b16 %v2694
    %v3606 = vunpack.c.l.b16 %v2695
    %v3607 = vunpack.c.h.b16 %v2695
    %v3608 = vunpack.c.l.b16 %v2696
    %v3609 = vunpack.c.l.b16 %v2697
    %v3610 = vunpack.c.h.b16 %v2697
    %v3611 = vunpack.c.l.b16 %v2698
    %v3612 = vunpack.c.l.b16 %v2699
    %v3613 = vunpack.c.h.b16 %v2699
    %v3614 = vunpack.c.l.b16 %v2700
    %v3615 = vunpack.c.l.b16 %v2701
    %v3616 = vunpack.c.h.b16 %v2701
    %v3617 = vunpack.c.l.b16 %v2702
    %v3618 = vunpack.c.l.b16 %v2703
    %v3619 = vunpack.c.h.b16 %v2703
    %v3620 = vunpack.c.l.b16 %v2704
    %v3621 = vunpack.c.l.b16 %v2705
    %v3622 = vunpack.c.h.b16 %v2705
    %v3623 = vunpack.c.l.b16 %v2706
    %v3624 = vunpack.c.l.b16 %v2707
    %v3625 = vunpack.c.h.b16 %v2707
    %v3626 = vunpack.c.l.b16 %v2708
    %v3627 = vunpack.c.l.b16 %v2709
    %v3628 = vunpack.c.h.b16 %v2709
    %v3629 = vunpack.c.l.b16 %v2710
    %v3630 = vunpack.c.l.b16 %v2711
    %v3631 = vunpack.c.h.b16 %v2711
    %v3632 = vunpack.c.l.b16 %v2712
    %v3633 = vunpack.c.l.b16 %v2713
    %v3634 = vunpack.c.h.b16 %v2713
    %v3635 = vunpack.c.l.b16 %v2714
    %v3636 = vunpack.c.l.b16 %v2715
    %v3637 = vunpack.c.h.b16 %v2715
    %v3638 = vunpack.c.l.b16 %v2716
    %v3639 = vunpack.c.l.b16 %v2717
    %v3640 = vunpack.c.h.b16 %v2717
    %v3641 = vunpack.c.l.b16 %v2718
    %v3642 = vunpack.c.l.b16 %v2719
    %v3643 = vunpack.c.h.b16 %v2719
    %v3644 = vunpack.c.l.b16 %v2720
    %v3645 = vunpack.c.l.b16 %v2721
    %v3646 = vunpack.c.h.b16 %v2721
    %v3647 = vunpack.c.l.b16 %v2722
    %v3648 = vunpack.c.l.b16 %v2723
    %v3649 = vunpack.c.h.b16 %v2723
    %v3650 = vunpack.c.l.b16 %v2724
    %v3651 = vunpack.c.l.b16 %v2725
    %v3652 = vunpack.c.h.b16 %v2725
    %v3653 = vunpack.c.l.b16 %v2726
    %v3654 = vunpack.c.l.b16 %v2727
    %v3655 = vunpack.c.h.b16 %v2727
    %v3656 = vunpack.c.l.b16 %v2728
    %v3657 = vunpack.c.l.b16 %v2729
    %v3658 = vunpack.c.h.b16 %v2729
    %v3659 = vunpack.c.l.b16 %v2730
    %v3660 = vunpack.c.l.b16 %v2731
    %v3661 = vunpack.c.h.b16 %v2731
    %v3662 = vunpack.c.l.b16 %v2732
    %v3663 = vunpack.c.l.b16 %v2733
    %v3664 = vunpack.c.h.b16 %v2733
    %v3665 = vunpack.c.l.b16 %v2734
    %v3666 = vunpack.c.l.b16 %v2735
    %v3667 = vunpack.c.h.b16 %v2735
    %v3668 = vunpack.c.l.b16 %v2736
    %v3669 = vunpack.c.l.b16 %v2737
    %v3670 = vunpack.c.h.b16 %v2737
    %v3671 = vunpack.c.l.b16 %v2738
    %v3672 = vunpack.c.l.b16 %v2739
    %v3673 = vunpack.c.h.b16 %v2739
    %v3674 = vunpack.c.l.b16 %v2740
    %v3675 = vunpack.c.l.b16 %v2741
    %v3676 = vunpack.c.h.b16 %v2741
    %v3677 = vunpack.c.l.b16 %v2742
    %v3678 = vunpack.c.l.b16 %v2743
    %v3679 = vunpack.c.h.b16 %v2743
    %v3680 = vunpack.c.l.b16 %v2744
    %v3681 = vunpack.c.l.b16 %v2745
    %v3682 = vunpack.c.h.b16 %v2745
    %v3683 = vunpack.c.l.b16 %v2746
    %v3684 = vunpack.c.l.b16 %v2747
    %v3685 = vunpack.c.h.b16 %v2747
    %v3686 = vunpack.c.l.b16 %v2748
    %v3687 = vunpack.c.l.b16 %v2749
    %v3688 = vunpack.c.h.b16 %v2749
    %v3689 = vunpack.c.l.b16 %v2750
    %v3690 = vunpack.c.l.b16 %v2751
    %v3691 = vunpack.c.h.b16 %v2751
    %v3692 = vunpack.c.l.b16 %v2752
    %v3693 = vunpack.c.l.b16 %v2753
    %v3694 = vunpack.c.h.b16 %v2753
    %v3695 = vunpack.c.l.b16 %v2754
    %v3696 = vunpack.c.l.b16 %v2755
    %v3697 = vunpack.c.h.b16 %v2755
    %v3698 = vunpack.c.l.b16 %v2756
    %v3699 = vunpack.c.l.b16 %v2757
    %v3700 = vunpack.c.h.b16 %v2757
    %v3701 = vunpack.c.l.b16 %v2758
    %v3702 = vunpack.c.l.b16 %v2759
    %v3703 = vunpack.c.h.b16 %v2759
    %v3704 = vunpack.c.l.b16 %v2760
    %v3705 = vunpack.c.l.b16 %v2761
    %v3706 = vunpack.c.h.b16 %v2761
    %v3707 = vunpack.c.l.b16 %v2762
    %v3708 = vunpack.c.l.b16 %v2763
    %v3709 = vunpack.c.h.b16 %v2763
    %v3710 = vunpack.c.l.b16 %v2764
    %v3711 = vunpack.c.l.b16 %v2765
    %v3712 = vunpack.c.h.b16 %v2765
    %v3713 = vunpack.c.l.b16 %v2766
    %v3714 = vunpack.c.l.b16 %v2767
    %v3715 = vunpack.c.h.b16 %v2767
    %v3716 = vunpack.c.l.b16 %v2768
    %v3717 = vunpack.c.l.b16 %v2769
    %v3718 = vunpack.c.h.b16 %v2769
    %v3719 = vunpack.c.l.b16 %v2770
    %v3720 = vunpack.c.l.b16 %v2771
    %v3721 = vunpack.c.h.b16 %v2771
    %v3722 = vunpack.c.l.b16 %v2772
    %v3723 = vunpack.c.l.b16 %v2773
    %v3724 = vunpack.c.h.b16 %v2773
    %v3725 = vunpack.c.l.b16 %v2774
    %v3726 = vunpack.c.l.b16 %v2775
    %v3727 = vunpack.c.h.b16 %v2775
    %v3728 = vunpack.c.l.b16 %v2776
    %v3729 = vunpack.c.l.b16 %v2777
    %v3730 = vunpack.c.h.b16 %v2777
    %v3731 = vunpack.c.l.b16 %v2778
    %v3732 = vunpack.c.l.b16 %v2779
    %v3733 = vunpack.c.h.b16 %v2779
    %v3734 = vunpack.c.l.b16 %v2780
    %v3735 = vunpack.c.l.b16 %v2781
    %v3736 = vunpack.c.h.b16 %v2781
    %v3737 = vunpack.c.l.b16 %v2782
    %v3738 = vunpack.c.l.b16 %v2783
    %v3739 = vunpack.c.h.b16 %v2783
    %v3740 = vunpack.c.l.b16 %v2784
    %v3741 = vunpack.c.l.b16 %v2785
    %v3742 = vunpack.c.h.b16 %v2785
    %v3743 = vunpack.c.l.b16 %v2786
    %v3744 = vunpack.c.l.b16 %v2787
    %v3745 = vunpack.c.h.b16 %v2787
    %v3746 = vunpack.c.l.b16 %v2788
    %v3747 = vunpack.c.l.b16 %v2789
    %v3748 = vunpack.c.h.b16 %v2789
    %v3749 = vunpack.c.l.b16 %v2790
    %v3750 = vunpack.c.l.b16 %v2791
    %v3751 = vunpack.c.h.b16 %v2791
    %v3752 = vunpack.c.l.b16 %v2792
    %v3753 = vunpack.c.l.b16 %v2793
    %v3754 = vunpack.c.h.b16 %v2793
    %v3755 = vunpack.c.l.b16 %v2794
    %v3756 = vunpack.c.l.b16 %v2795
    %v3757 = vunpack.c.h.b16 %v2795
    %v3758 = vunpack.c.l.b16 %v2796
    %v3759 = vunpack.c.l.b16 %v2797
    %v3760 = vunpack.c.h.b16 %v2797
    %v3761 = vunpack.c.l.b16 %v2798
    %v3762 = vunpack.c.l.b16 %v2799
    %v3763 = vunpack.c.h.b16 %v2799
    %v3764 = vunpack.c.l.b16 %v2800
    %v3765 = vunpack.c.l.b16 %v2801
    %v3766 = vunpack.c.h.b16 %v2801
    %v3767 = vunpack.c.l.b16 %v2802
    %v3768 = vunpack.c.l.b16 %v2803
    %v3769 = vunpack.c.h.b16 %v2803
    %v3770 = vunpack.c.l.b16 %v2804
    %v3771 = vunpack.c.l.b16 %v2805
    %v3772 = vunpack.c.h.b16 %v2805
    %v3773 = vunpack.c.l.b16 %v2806
    %v3774 = vunpack.c.l.b16 %v2807
    %v3775 = vunpack.c.h.b16 %v2807
    %v3776 = vunpack.c.l.b16 %v2808
    %v3777 = vunpack.c.l.b16 %v2809
    %v3778 = vunpack.c.h.b16 %v2809
    %v3779 = vunpack.c.l.b16 %v2810
    %v3780 = vunpack.c.l.b16 %v2811
    %v3781 = vunpack.c.h.b16 %v2811
    %v3782 = vunpack.c.l.b16 %v2812
    %v3783 = vunpack.c.l.b16 %v2813
    %v3784 = vunpack.c.h.b16 %v2813
    %v3785 = vunpack.c.l.b16 %v2814
    %v3786 = vunpack.c.l.b16 %v2815
    %v3787 = vunpack.c.h.b16 %v2815
    %v3788 = vunpack.c.l.b16 %v2816
    %v3789 = vunpack.c.l.b16 %v2817
    %v3790 = vunpack.c.h.b16 %v2817
    %v3791 = vunpack.c.l.b16 %v2818
    %v3792 = vunpack.c.l.b16 %v2819
    %v3793 = vunpack.c.h.b16 %v2819
    %v3794 = vunpack.c.l.b16 %v2820
    %v3795 = vunpack.c.l.b16 %v2821
    %v3796 = vunpack.c.h.b16 %v2821
    %v3797 = vunpack.c.l.b16 %v2822
    %v3798 = vunpack.c.l.b16 %v2823
    %v3799 = vunpack.c.h.b16 %v2823
    %v3800 = vunpack.c.l.b16 %v2824
    %v3801 = vunpack.c.l.b16 %v2825
    %v3802 = vunpack.c.h.b16 %v2825
    %v3803 = vunpack.c.l.b16 %v2826
    %v3804 = vpack.c.b16 %v3231, %v3228
    %v3805 = vpack.c.b16 %v3232, %v3229
    %v3806 = vpack.c.b16 %v3233, %v3230
    %v3807 = vpack.c.b16 %v3237, %v3234
    %v3808 = vpack.c.b16 %v3238, %v3235
    %v3809 = vpack.c.b16 %v3239, %v3236
    %v3810 = vpack.c.b16 %v3243, %v3240
    %v3811 = vpack.c.b16 %v3244, %v3241
    %v3812 = vpack.c.b16 %v3245, %v3242
    %v3813 = vpack.c.b16 %v3249, %v3246
    %v3814 = vpack.c.b16 %v3250, %v3247
    %v3815 = vpack.c.b16 %v3251, %v3248
    %v3816 = vpack.c.b16 %v3255, %v3252
    %v3817 = vpack.c.b16 %v3256, %v3253
    %v3818 = vpack.c.b16 %v3257, %v3254
    %v3819 = vpack.c.b16 %v3261, %v3258
    %v3820 = vpack.c.b16 %v3262, %v3259
    %v3821 = vpack.c.b16 %v3263, %v3260
    %v3822 = vpack.c.b16 %v3267, %v3264
    %v3823 = vpack.c.b16 %v3268, %v3265
    %v3824 = vpack.c.b16 %v3269, %v3266
    %v3825 = vpack.c.b16 %v3273, %v3270
    %v3826 = vpack.c.b16 %v3274, %v3271
    %v3827 = vpack.c.b16 %v3275, %v3272
    %v3828 = vpack.c.b16 %v3279, %v3276
    %v3829 = vpack.c.b16 %v3280, %v3277
    %v3830 = vpack.c.b16 %v3281, %v3278
    %v3831 = vpack.c.b16 %v3285, %v3282
    %v3832 = vpack.c.b16 %v3286, %v3283
    %v3833 = vpack.c.b16 %v3287, %v3284
    %v3834 = vpack.c.b16 %v3291, %v3288
    %v3835 = vpack.c.b16 %v3292, %v3289
    %v3836 = vpack.c.b16 %v3293, %v3290
    %v3837 = vpack.c.b16 %v3297, %v3294
    %v3838 = vpack.c.b16 %v3298, %v3295
    %v3839 = vpack.c.b16 %v3299, %v3296
    %v3840 = vpack.c.b16 %v3303, %v3300
    %v3841 = vpack.c.b16 %v3304, %v3301
    %v3842 = vpack.c.b16 %v3305, %v3302
    %v3843 = vpack.c.b16 %v3309, %v3306
    %v3844 = vpack.c.b16 %v3310, %v3307
    %v3845 = vpack.c.b16 %v3311, %v3308
    %v3846 = vpack.c.b16 %v3315, %v3312
    %v3847 = vpack.c.b16 %v3316, %v3313
    %v3848 = vpack.c.b16 %v3317, %v3314
    %v3849 = vpack.c.b16 %v3321, %v3318
    %v3850 = vpack.c.b16 %v3322, %v3319
    %v3851 = vpack.c.b16 %v3323, %v3320
    %v3852 = vpack.c.b16 %v3327, %v3324
    %v3853 = vpack.c.b16 %v3328, %v3325
    %v3854 = vpack.c.b16 %v3329, %v3326
    %v3855 = vpack.c.b16 %v3333, %v3330
    %v3856 = vpack.c.b16 %v3334, %v3331
    %v3857 = vpack.c.b16 %v3335, %v3332
    %v3858 = vpack.c.b16 %v3339, %v3336
    %v3859 = vpack.c.b16 %v3340, %v3337
    %v3860 = vpack.c.b16 %v3341, %v3338
    %v3861 = vpack.c.b16 %v3345, %v3342
    %v3862 = vpack.c.b16 %v3346, %v3343
    %v3863 = vpack.c.b16 %v3347, %v3344
    %v3864 = vpack.c.b16 %v3351, %v3348
    %v3865 = vpack.c.b16 %v3352, %v3349
    %v3866 = vpack.c.b16 %v3353, %v3350
    %v3867 = vpack.c.b16 %v3357, %v3354
    %v3868 = vpack.c.b16 %v3358, %v3355
    %v3869 = vpack.c.b16 %v3359, %v3356
    %v3870 = vpack.c.b16 %v3363, %v3360
    %v3871 = vpack.c.b16 %v3364, %v3361
    %v3872 = vpack.c.b16 %v3365, %v3362
    %v3873 = vpack.c.b16 %v3369, %v3366
    %v3874 = vpack.c.b16 %v3370, %v3367
    %v3875 = vpack.c.b16 %v3371, %v3368
    %v3876 = vpack.c.b16 %v3375, %v3372
    %v3877 = vpack.c.b16 %v3376, %v3373
    %v3878 = vpack.c.b16 %v3377, %v3374
    %v3879 = vpack.c.b16 %v3381, %v3378
    %v3880 = vpack.c.b16 %v3382, %v3379
    %v3881 = vpack.c.b16 %v3383, %v3380
    %v3882 = vpack.c.b16 %v3387, %v3384
    %v3883 = vpack.c.b16 %v3388, %v3385
    %v3884 = vpack.c.b16 %v3389, %v3386
    %v3885 = vpack.c.b16 %v3393, %v3390
    %v3886 = vpack.c.b16 %v3394, %v3391
    %v3887 = vpack.c.b16 %v3395, %v3392
    %v3888 = vpack.c.b16 %v3399, %v3396
    %v3889 = vpack.c.b16 %v3400, %v3397
    %v3890 = vpack.c.b16 %v3401, %v3398
    %v3891 = vpack.c.b16 %v3405, %v3402
    %v3892 = vpack.c.b16 %v3406, %v3403
    %v3893 = vpack.c.b16 %v3407, %v3404
    %v3894 = vpack.c.b16 %v3411, %v3408
    %v3895 = vpack.c.b16 %v3412, %v3409
    %v3896 = vpack.c.b16 %v3413, %v3410
    %v3897 = vpack.c.b16 %v3417, %v3414
    %v3898 = vpack.c.b16 %v3418, %v3415
    %v3899 = vpack.c.b16 %v3419, %v3416
    %v3900 = vpack.c.b16 %v3423, %v3420
    %v3901 = vpack.c.b16 %v3424, %v3421
    %v3902 = vpack.c.b16 %v3425, %v3422
    %v3903 = vpack.c.b16 %v3429, %v3426
    %v3904 = vpack.c.b16 %v3430, %v3427
    %v3905 = vpack.c.b16 %v3431, %v3428
    %v3906 = vpack.c.b16 %v3435, %v3432
    %v3907 = vpack.c.b16 %v3436, %v3433
    %v3908 = vpack.c.b16 %v3437, %v3434
    %v3909 = vpack.c.b16 %v3441, %v3438
    %v3910 = vpack.c.b16 %v3442, %v3439
    %v3911 = vpack.c.b16 %v3443, %v3440
    %v3912 = vpack.c.b16 %v3447, %v3444
    %v3913 = vpack.c.b16 %v3448, %v3445
    %v3914 = vpack.c.b16 %v3449, %v3446
    %v3915 = vpack.c.b16 %v3453, %v3450
    %v3916 = vpack.c.b16 %v3454, %v3451
    %v3917 = vpack.c.b16 %v3455, %v3452
    %v3918 = vpack.c.b16 %v3459, %v3456
    %v3919 = vpack.c.b16 %v3460, %v3457
    %v3920 = vpack.c.b16 %v3461, %v3458
    %v3921 = vpack.c.b16 %v3465, %v3462
    %v3922 = vpack.c.b16 %v3466, %v3463
    %v3923 = vpack.c.b16 %v3467, %v3464
    %v3924 = vpack.c.b16 %v3471, %v3468
    %v3925 = vpack.c.b16 %v3472, %v3469
    %v3926 = vpack.c.b16 %v3473, %v3470
    %v3927 = vpack.c.b16 %v3477, %v3474
    %v3928 = vpack.c.b16 %v3478, %v3475
    %v3929 = vpack.c.b16 %v3479, %v3476
    %v3930 = vpack.c.b16 %v3483, %v3480
    %v3931 = vpack.c.b16 %v3484, %v3481
    %v3932 = vpack.c.b16 %v3485, %v3482
    %v3933 = vpack.c.b16 %v3489, %v3486
    %v3934 = vpack.c.b16 %v3490, %v3487
    %v3935 = vpack.c.b16 %v3491, %v3488
    %v3936 = vpack.c.b16 %v3495, %v3492
    %v3937 = vpack.c.b16 %v3496, %v3493
    %v3938 = vpack.c.b16 %v3497, %v3494
    %v3939 = vpack.c.b16 %v3501, %v3498
    %v3940 = vpack.c.b16 %v3502, %v3499
    %v3941 = vpack.c.b16 %v3503, %v3500
    %v3942 = vpack.c.b16 %v3507, %v3504
    %v3943 = vpack.c.b16 %v3508, %v3505
    %v3944 = vpack.c.b16 %v3509, %v3506
    %v3945 = vpack.c.b16 %v3513, %v3510
    %v3946 = vpack.c.b16 %v3514, %v3511
    %v3947 = vpack.c.b16 %v3515, %v3512
    %v3948 = vpack.c.b16 %v3519, %v3516
    %v3949 = vpack.c.b16 %v3520, %v3517
    %v3950 = vpack.c.b16 %v3521, %v3518
    %v3951 = vpack.c.b16 %v3525, %v3522
    %v3952 = vpack.c.b16 %v3526, %v3523
    %v3953 = vpack.c.b16 %v3527, %v3524
    %v3954 = vpack.c.b16 %v3531, %v3528
    %v3955 = vpack.c.b16 %v3532, %v3529
    %v3956 = vpack.c.b16 %v3533, %v3530
    %v3957 = vpack.c.b16 %v3537, %v3534
    %v3958 = vpack.c.b16 %v3538, %v3535
    %v3959 = vpack.c.b16 %v3539, %v3536
    %v3960 = vpack.c.b16 %v3543, %v3540
    %v3961 = vpack.c.b16 %v3544, %v3541
    %v3962 = vpack.c.b16 %v3545, %v3542
    %v3963 = vpack.c.b16 %v3549, %v3546
    %v3964 = vpack.c.b16 %v3550, %v3547
    %v3965 = vpack.c.b16 %v3551, %v3548
    %v3966 = vpack.c.b16 %v3555, %v3552
    %v3967 = vpack.c.b16 %v3556, %v3553
    %v3968 = vpack.c.b16 %v3557, %v3554
    %v3969 = vpack.c.b16 %v3561, %v3558
    %v3970 = vpack.c.b16 %v3562, %v3559
    %v3971 = vpack.c.b16 %v3563, %v3560
    %v3972 = vpack.c.b16 %v3567, %v3564
    %v3973 = vpack.c.b16 %v3568, %v3565
    %v3974 = vpack.c.b16 %v3569, %v3566
    %v3975 = vpack.c.b16 %v3573, %v3570
    %v3976 = vpack.c.b16 %v3574, %v3571
    %v3977 = vpack.c.b16 %v3575, %v3572
    %v3978 = vpack.c.b16 %v3579, %v3576
    %v3979 = vpack.c.b16 %v3580, %v3577
    %v3980 = vpack.c.b16 %v3581, %v3578
    %v3981 = vpack.c.b16 %v3585, %v3582
    %v3982 = vpack.c.b16 %v3586, %v3583
    %v3983 = vpack.c.b16 %v3587, %v3584
    %v3984 = vpack.c.b16 %v3591, %v3588
    %v3985 = vpack.c.b16 %v3592, %v3589
    %v3986 = vpack.c.b16 %v3593, %v3590
    %v3987 = vpack.c.b16 %v3597, %v3594
    %v3988 = vpack.c.b16 %v3598, %v3595
    %v3989 = vpack.c.b16 %v3599, %v3596
    %v3990 = vpack.c.b16 %v3603, %v3600
    %v3991 = vpack.c.b16 %v3604, %v3601
    %v3992 = vpack.c.b16 %v3605, %v3602
    %v3993 = vpack.c.b16 %v3609, %v3606
    %v3994 = vpack.c.b16 %v3610, %v3607
    %v3995 = vpack.c.b16 %v3611, %v3608
    %v3996 = vpack.c.b16 %v3615, %v3612
    %v3997 = vpack.c.b16 %v3616, %v3613
    %v3998 = vpack.c.b16 %v3617, %v3614
    %v3999 = vpack.c.b16 %v3621, %v3618
    %v4000 = vpack.c.b16 %v3622, %v3619
    %v4001 = vpack.c.b16 %v3623, %v3620
    %v4002 = vpack.c.b16 %v3627, %v3624
    %v4003 = vpack.c.b16 %v3628, %v3625
    %v4004 = vpack.c.b16 %v3629, %v3626
    %v4005 = vpack.c.b16 %v3633, %v3630
    %v4006 = vpack.c.b16 %v3634, %v3631
    %v4007 = vpack.c.b16 %v3635, %v3632
    %v4008 = vpack.c.b16 %v3639, %v3636
    %v4009 = vpack.c.b16 %v3640, %v3637
    %v4010 = vpack.c.b16 %v3641, %v3638
    %v4011 = vpack.c.b16 %v3645, %v3642
    %v4012 = vpack.c.b16 %v3646, %v3643
    %v4013 = vpack.c.b16 %v3647, %v3644
    %v4014 = vpack.c.b16 %v3651, %v3648
    %v4015 = vpack.c.b16 %v3652, %v3649
    %v4016 = vpack.c.b16 %v3653, %v3650
    %v4017 = vpack.c.b16 %v3657, %v3654
    %v4018 = vpack.c.b16 %v3658, %v3655
    %v4019 = vpack.c.b16 %v3659, %v3656
    %v4020 = vpack.c.b16 %v3663, %v3660
    %v4021 = vpack.c.b16 %v3664, %v3661
    %v4022 = vpack.c.b16 %v3665, %v3662
    %v4023 = vpack.c.b16 %v3669, %v3666
    %v4024 = vpack.c.b16 %v3670, %v3667
    %v4025 = vpack.c.b16 %v3671, %v3668
    %v4026 = vpack.c.b16 %v3675, %v3672
    %v4027 = vpack.c.b16 %v3676, %v3673
    %v4028 = vpack.c.b16 %v3677, %v3674
    %v4029 = vpack.c.b16 %v3681, %v3678
    %v4030 = vpack.c.b16 %v3682, %v3679
    %v4031 = vpack.c.b16 %v3683, %v3680
    %v4032 = vpack.c.b16 %v3687, %v3684
    %v4033 = vpack.c.b16 %v3688, %v3685
    %v4034 = vpack.c.b16 %v3689, %v3686
    %v4035 = vpack.c.b16 %v3693, %v3690
    %v4036 = vpack.c.b16 %v3694, %v3691
    %v4037 = vpack.c.b16 %v3695, %v3692
    %v4038 = vpack.c.b16 %v3699, %v3696
    %v4039 = vpack.c.b16 %v3700, %v3697
    %v4040 = vpack.c.b16 %v3701, %v3698
    %v4041 = vpack.c.b16 %v3705, %v3702
    %v4042 = vpack.c.b16 %v3706, %v3703
    %v4043 = vpack.c.b16 %v3707, %v3704
    %v4044 = vpack.c.b16 %v3711, %v3708
    %v4045 = vpack.c.b16 %v3712, %v3709
    %v4046 = vpack.c.b16 %v3713, %v3710
    %v4047 = vpack.c.b16 %v3717, %v3714
    %v4048 = vpack.c.b16 %v3718, %v3715
    %v4049 = vpack.c.b16 %v3719, %v3716
    %v4050 = vpack.c.b16 %v3723, %v3720
    %v4051 = vpack.c.b16 %v3724, %v3721
    %v4052 = vpack.c.b16 %v3725, %v3722
    %v4053 = vpack.c.b16 %v3729, %v3726
    %v4054 = vpack.c.b16 %v3730, %v3727
    %v4055 = vpack.c.b16 %v3731, %v3728
    %v4056 = vpack.c.b16 %v3735, %v3732
    %v4057 = vpack.c.b16 %v3736, %v3733
    %v4058 = vpack.c.b16 %v3737, %v3734
    %v4059 = vpack.c.b16 %v3741, %v3738
    %v4060 = vpack.c.b16 %v3742, %v3739
    %v4061 = vpack.c.b16 %v3743, %v3740
    %v4062 = vpack.c.b16 %v3747, %v3744
    %v4063 = vpack.c.b16 %v3748, %v3745
    %v4064 = vpack.c.b16 %v3749, %v3746
    %v4065 = vpack.c.b16 %v3753, %v3750
    %v4066 = vpack.c.b16 %v3754, %v3751
    %v4067 = vpack.c.b16 %v3755, %v3752
    %v4068 = vpack.c.b16 %v3759, %v3756
    %v4069 = vpack.c.b16 %v3760, %v3757
    %v4070 = vpack.c.b16 %v3761, %v3758
    %v4071 = vpack.c.b16 %v3765, %v3762
    %v4072 = vpack.c.b16 %v3766, %v3763
    %v4073 = vpack.c.b16 %v3767, %v3764
    %v4074 = vpack.c.b16 %v3771, %v3768
    %v4075 = vpack.c.b16 %v3772, %v3769
    %v4076 = vpack.c.b16 %v3773, %v3770
    %v4077 = vpack.c.b16 %v3777, %v3774
    %v4078 = vpack.c.b16 %v3778, %v3775
    %v4079 = vpack.c.b16 %v3779, %v3776
    %v4080 = vpack.c.b16 %v3783, %v3780
    %v4081 = vpack.c.b16 %v3784, %v3781
    %v4082 = vpack.c.b16 %v3785, %v3782
    %v4083 = vpack.c.b16 %v3789, %v3786
    %v4084 = vpack.c.b16 %v3790, %v3787
    %v4085 = vpack.c.b16 %v3791, %v3788
    %v4086 = vpack.c.b16 %v3795, %v3792
    %v4087 = vpack.c.b16 %v3796, %v3793
    %v4088 = vpack.c.b16 %v3797, %v3794
    %v4089 = vpack.c.b16 %v3801, %v3798
    %v4090 = vpack.c.b16 %v3802, %v3799
    %v4091 = vpack.c.b16 %v3803, %v3800
    %4380 = vmatprep.subr.bf16.mxu0 %v3826
    %4381 = vmatpush1.bf16.msra.mxu0 %v3825
    %4382 = vmatprep.subr.bf16.mxu0 %v3823
    %4383 = vmatpush1.bf16.msra.mxu0 %v3822
    %4384 = vmatprep.subr.bf16.mxu0 %v3820
    %4385 = vmatpush1.bf16.msra.mxu0 %v3819
    %4386 = vmatprep.subr.bf16.mxu0 %v3817
    %4387 = vmatpush1.bf16.msra.mxu0 %v3816
    %4388 = vmatprep.subr.bf16.mxu0 %v3814
    %4389 = vmatpush1.bf16.msra.mxu0 %v3813
    %4390 = vmatprep.subr.bf16.mxu0 %v3811
    %4391 = vmatpush1.bf16.msra.mxu0 %v3810
    %4392 = vmatprep.subr.bf16.mxu0 %v3808
    %4393 = vmatpush1.bf16.msra.mxu0 %v3807
    %4394 = vmatprep.subr.bf16.mxu0 %v3805
    %4395 = vmatpush1.bf16.msra.mxu0 %v3804
    %4396 = vmatprep.subr.bf16.mxu0 %v3850
    %4397 = vmatpush2.bf16.msra.mxu0 %v3849
    %4398 = vmatprep.subr.bf16.mxu0 %v3847
    %4399 = vmatpush2.bf16.msra.mxu0 %v3846
    %4400 = vmatprep.subr.bf16.mxu0 %v3844
    %4401 = vmatpush2.bf16.msra.mxu0 %v3843
    %4402 = vmatprep.subr.bf16.mxu0 %v3841
    %4403 = vmatpush2.bf16.msra.mxu0 %v3840
    %4404 = vmatprep.subr.bf16.mxu0 %v3838
    %4405 = vmatpush2.bf16.msra.mxu0 %v3837
    %4406 = vmatprep.subr.bf16.mxu0 %v3835
    %4407 = vmatpush2.bf16.msra.mxu0 %v3834
    %4408 = vmatprep.subr.bf16.mxu0 %v3832
    %4409 = vmatpush2.bf16.msra.mxu0 %v3831
    %4410 = vmatprep.subr.bf16.mxu0 %v3829
    %4411 = vmatpush2.bf16.msra.mxu0 %v3828
    %4412 = vmatprep.mubr.bf16.mxu0 %v2432
    %4413 = vmatmul.mubr.bf16.gmra.mxu0 %v2431
    %v4414 = vpop.f32.mrf.mxu0
    %v4415 = vadd.f32 %v2832, %v4414
    %v4416 = vpop.f32.mrf.mxu0
    %v4417 = vadd.f32 %v2836, %v4416
    %v4418 = vpop.f32.mrf.mxu0
    %v4419 = vadd.f32 %v2832, %v4418
    %v4420 = vpop.f32.mrf.mxu0
    %v4421 = vadd.f32 %v2836, %v4420
    %4422 = vdwg.mxu0
    %4423 = vmatprep.subr.bf16.mxu0 %v3874
    %4424 = vmatpush1.bf16.msra.mxu0 %v3873
    %4425 = vmatprep.subr.bf16.mxu0 %v3871
    %4426 = vmatpush1.bf16.msra.mxu0 %v3870
    %4427 = vmatprep.subr.bf16.mxu0 %v3868
    %4428 = vmatpush1.bf16.msra.mxu0 %v3867
    %4429 = vmatprep.subr.bf16.mxu0 %v3865
    %4430 = vmatpush1.bf16.msra.mxu0 %v3864
    %4431 = vmatprep.subr.bf16.mxu0 %v3862
    %4432 = vmatpush1.bf16.msra.mxu0 %v3861
    %4433 = vmatprep.subr.bf16.mxu0 %v3859
    %4434 = vmatpush1.bf16.msra.mxu0 %v3858
    %4435 = vmatprep.subr.bf16.mxu0 %v3856
    %4436 = vmatpush1.bf16.msra.mxu0 %v3855
    %4437 = vmatprep.subr.bf16.mxu0 %v3853
    %4438 = vmatpush1.bf16.msra.mxu0 %v3852
    %4439 = vmatprep.subr.bf16.mxu0 %v3898
    %4440 = vmatpush2.bf16.msra.mxu0 %v3897
    %4441 = vmatprep.subr.bf16.mxu0 %v3895
    %4442 = vmatpush2.bf16.msra.mxu0 %v3894
    %4443 = vmatprep.subr.bf16.mxu0 %v3892
    %4444 = vmatpush2.bf16.msra.mxu0 %v3891
    %4445 = vmatprep.subr.bf16.mxu0 %v3889
    %4446 = vmatpush2.bf16.msra.mxu0 %v3888
    %4447 = vmatprep.subr.bf16.mxu0 %v3886
    %4448 = vmatpush2.bf16.msra.mxu0 %v3885
    %4449 = vmatprep.subr.bf16.mxu0 %v3883
    %4450 = vmatpush2.bf16.msra.mxu0 %v3882
    %4451 = vmatprep.subr.bf16.mxu0 %v3880
    %4452 = vmatpush2.bf16.msra.mxu0 %v3879
    %4453 = vmatprep.subr.bf16.mxu0 %v3877
    %4454 = vmatpush2.bf16.msra.mxu0 %v3876
    %4455 = vmatprep.mubr.bf16.mxu0 %v2434
    %4456 = vmatmul.mubr.bf16.gmra.mxu0 %v2433
    %v4457 = vpop.f32.mrf.mxu0
    %v4458 = vadd.f32 %v4415, %v4457
    %v4459 = vpop.f32.mrf.mxu0
    %v4460 = vadd.f32 %v4417, %v4459
    %v4461 = vpop.f32.mrf.mxu0
    %v4462 = vadd.f32 %v4419, %v4461
    %v4463 = vpop.f32.mrf.mxu0
    %v4464 = vadd.f32 %v4421, %v4463
    %4465 = vdwg.mxu0
    %4466 = vmatprep.subr.bf16.mxu0 %v3922
    %4467 = vmatpush1.bf16.msra.mxu0 %v3921
    %4468 = vmatprep.subr.bf16.mxu0 %v3919
    %4469 = vmatpush1.bf16.msra.mxu0 %v3918
    %4470 = vmatprep.subr.bf16.mxu0 %v3916
    %4471 = vmatpush1.bf16.msra.mxu0 %v3915
    %4472 = vmatprep.subr.bf16.mxu0 %v3913
    %4473 = vmatpush1.bf16.msra.mxu0 %v3912
    %4474 = vmatprep.subr.bf16.mxu0 %v3910
    %4475 = vmatpush1.bf16.msra.mxu0 %v3909
    %4476 = vmatprep.subr.bf16.mxu0 %v3907
    %4477 = vmatpush1.bf16.msra.mxu0 %v3906
    %4478 = vmatprep.subr.bf16.mxu0 %v3904
    %4479 = vmatpush1.bf16.msra.mxu0 %v3903
    %4480 = vmatprep.subr.bf16.mxu0 %v3901
    %4481 = vmatpush1.bf16.msra.mxu0 %v3900
    %4482 = vmatprep.subr.bf16.mxu0 %v3946
    %4483 = vmatpush2.bf16.msra.mxu0 %v3945
    %4484 = vmatprep.subr.bf16.mxu0 %v3943
    %4485 = vmatpush2.bf16.msra.mxu0 %v3942
    %4486 = vmatprep.subr.bf16.mxu0 %v3940
    %4487 = vmatpush2.bf16.msra.mxu0 %v3939
    %4488 = vmatprep.subr.bf16.mxu0 %v3937
    %4489 = vmatpush2.bf16.msra.mxu0 %v3936
    %4490 = vmatprep.subr.bf16.mxu0 %v3934
    %4491 = vmatpush2.bf16.msra.mxu0 %v3933
    %4492 = vmatprep.subr.bf16.mxu0 %v3931
    %4493 = vmatpush2.bf16.msra.mxu0 %v3930
    %4494 = vmatprep.subr.bf16.mxu0 %v3928
    %4495 = vmatpush2.bf16.msra.mxu0 %v3927
    %4496 = vmatprep.subr.bf16.mxu0 %v3925
    %4497 = vmatpush2.bf16.msra.mxu0 %v3924
    %4498 = vmatprep.mubr.bf16.mxu0 %v2436
    %4499 = vmatmul.mubr.bf16.gmra.mxu0 %v2435
    %v4500 = vpop.f32.mrf.mxu0
    %v4501 = vadd.f32 %v4458, %v4500
    %v4502 = vpop.f32.mrf.mxu0
    %v4503 = vadd.f32 %v4460, %v4502
    %v4504 = vpop.f32.mrf.mxu0
    %v4505 = vadd.f32 %v4462, %v4504
    %v4506 = vpop.f32.mrf.mxu0
    %v4507 = vadd.f32 %v4464, %v4506
    %4508 = vdwg.mxu0
    %4509 = vmatprep.subr.bf16.mxu0 %v3970
    %4510 = vmatpush1.bf16.msra.mxu0 %v3969
    %4511 = vmatprep.subr.bf16.mxu0 %v3967
    %4512 = vmatpush1.bf16.msra.mxu0 %v3966
    %4513 = vmatprep.subr.bf16.mxu0 %v3964
    %4514 = vmatpush1.bf16.msra.mxu0 %v3963
    %4515 = vmatprep.subr.bf16.mxu0 %v3961
    %4516 = vmatpush1.bf16.msra.mxu0 %v3960
    %4517 = vmatprep.subr.bf16.mxu0 %v3958
    %4518 = vmatpush1.bf16.msra.mxu0 %v3957
    %4519 = vmatprep.subr.bf16.mxu0 %v3955
    %4520 = vmatpush1.bf16.msra.mxu0 %v3954
    %4521 = vmatprep.subr.bf16.mxu0 %v3952
    %4522 = vmatpush1.bf16.msra.mxu0 %v3951
    %4523 = vmatprep.subr.bf16.mxu0 %v3949
    %4524 = vmatpush1.bf16.msra.mxu0 %v3948
    %4525 = vmatprep.subr.bf16.mxu0 %v3994
    %4526 = vmatpush2.bf16.msra.mxu0 %v3993
    %4527 = vmatprep.subr.bf16.mxu0 %v3991
    %4528 = vmatpush2.bf16.msra.mxu0 %v3990
    %4529 = vmatprep.subr.bf16.mxu0 %v3988
    %4530 = vmatpush2.bf16.msra.mxu0 %v3987
    %4531 = vmatprep.subr.bf16.mxu0 %v3985
    %4532 = vmatpush2.bf16.msra.mxu0 %v3984
    %4533 = vmatprep.subr.bf16.mxu0 %v3982
    %4534 = vmatpush2.bf16.msra.mxu0 %v3981
    %4535 = vmatprep.subr.bf16.mxu0 %v3979
    %4536 = vmatpush2.bf16.msra.mxu0 %v3978
    %4537 = vmatprep.subr.bf16.mxu0 %v3976
    %4538 = vmatpush2.bf16.msra.mxu0 %v3975
    %4539 = vmatprep.subr.bf16.mxu0 %v3973
    %4540 = vmatpush2.bf16.msra.mxu0 %v3972
    %4541 = vmatprep.mubr.bf16.mxu0 %v2438
    %4542 = vmatmul.mubr.bf16.gmra.mxu0 %v2437
    %v4543 = vpop.f32.mrf.mxu0
    %v4544 = vadd.f32 %v4501, %v4543
    %v4545 = vpop.f32.mrf.mxu0
    %v4546 = vadd.f32 %v4503, %v4545
    %v4547 = vpop.f32.mrf.mxu0
    %v4548 = vadd.f32 %v4505, %v4547
    %v4549 = vpop.f32.mrf.mxu0
    %v4550 = vadd.f32 %v4507, %v4549
    %4551 = vdwg.mxu0
    %4552 = vmatprep.subr.bf16.mxu0 %v4018
    %4553 = vmatpush1.bf16.msra.mxu0 %v4017
    %4554 = vmatprep.subr.bf16.mxu0 %v4015
    %4555 = vmatpush1.bf16.msra.mxu0 %v4014
    %4556 = vmatprep.subr.bf16.mxu0 %v4012
    %4557 = vmatpush1.bf16.msra.mxu0 %v4011
    %4558 = vmatprep.subr.bf16.mxu0 %v4009
    %4559 = vmatpush1.bf16.msra.mxu0 %v4008
    %4560 = vmatprep.subr.bf16.mxu0 %v4006
    %4561 = vmatpush1.bf16.msra.mxu0 %v4005
    %4562 = vmatprep.subr.bf16.mxu0 %v4003
    %4563 = vmatpush1.bf16.msra.mxu0 %v4002
    %4564 = vmatprep.subr.bf16.mxu0 %v4000
    %4565 = vmatpush1.bf16.msra.mxu0 %v3999
    %4566 = vmatprep.subr.bf16.mxu0 %v3997
    %4567 = vmatpush1.bf16.msra.mxu0 %v3996
    %4568 = vmatprep.subr.bf16.mxu0 %v4042
    %4569 = vmatpush2.bf16.msra.mxu0 %v4041
    %4570 = vmatprep.subr.bf16.mxu0 %v4039
    %4571 = vmatpush2.bf16.msra.mxu0 %v4038
    %4572 = vmatprep.subr.bf16.mxu0 %v4036
    %4573 = vmatpush2.bf16.msra.mxu0 %v4035
    %4574 = vmatprep.subr.bf16.mxu0 %v4033
    %4575 = vmatpush2.bf16.msra.mxu0 %v4032
    %4576 = vmatprep.subr.bf16.mxu0 %v4030
    %4577 = vmatpush2.bf16.msra.mxu0 %v4029
    %4578 = vmatprep.subr.bf16.mxu0 %v4027
    %4579 = vmatpush2.bf16.msra.mxu0 %v4026
    %4580 = vmatprep.subr.bf16.mxu0 %v4024
    %4581 = vmatpush2.bf16.msra.mxu0 %v4023
    %4582 = vmatprep.subr.bf16.mxu0 %v4021
    %4583 = vmatpush2.bf16.msra.mxu0 %v4020
    %4584 = vmatprep.mubr.bf16.mxu0 %v2440
    %4585 = vmatmul.mubr.bf16.gmra.mxu0 %v2439
    %v4586 = vpop.f32.mrf.mxu0
    %v4587 = vadd.f32 %v4544, %v4586
    %v4588 = vpop.f32.mrf.mxu0
    %v4589 = vadd.f32 %v4546, %v4588
    %v4590 = vpop.f32.mrf.mxu0
    %v4591 = vadd.f32 %v4548, %v4590
    %v4592 = vpop.f32.mrf.mxu0
    %v4593 = vadd.f32 %v4550, %v4592
    %4594 = vdwg.mxu0
    %4595 = vmatprep.subr.bf16.mxu0 %v4066
    %4596 = vmatpush1.bf16.msra.mxu0 %v4065
    %4597 = vmatprep.subr.bf16.mxu0 %v4063
    %4598 = vmatpush1.bf16.msra.mxu0 %v4062
    %4599 = vmatprep.subr.bf16.mxu0 %v4060
    %4600 = vmatpush1.bf16.msra.mxu0 %v4059
    %4601 = vmatprep.subr.bf16.mxu0 %v4057
    %4602 = vmatpush1.bf16.msra.mxu0 %v4056
    %4603 = vmatprep.subr.bf16.mxu0 %v4054
    %4604 = vmatpush1.bf16.msra.mxu0 %v4053
    %4605 = vmatprep.subr.bf16.mxu0 %v4051
    %4606 = vmatpush1.bf16.msra.mxu0 %v4050
    %4607 = vmatprep.subr.bf16.mxu0 %v4048
    %4608 = vmatpush1.bf16.msra.mxu0 %v4047
    %4609 = vmatprep.subr.bf16.mxu0 %v4045
    %4610 = vmatpush1.bf16.msra.mxu0 %v4044
    %4611 = vmatprep.subr.bf16.mxu0 %v4090
    %4612 = vmatpush2.bf16.msra.mxu0 %v4089
    %4613 = vmatprep.subr.bf16.mxu0 %v4087
    %4614 = vmatpush2.bf16.msra.mxu0 %v4086
    %4615 = vmatprep.subr.bf16.mxu0 %v4084
    %4616 = vmatpush2.bf16.msra.mxu0 %v4083
    %4617 = vmatprep.subr.bf16.mxu0 %v4081
    %4618 = vmatpush2.bf16.msra.mxu0 %v4080
    %4619 = vmatprep.subr.bf16.mxu0 %v4078
    %4620 = vmatpush2.bf16.msra.mxu0 %v4077
    %4621 = vmatprep.subr.bf16.mxu0 %v4075
    %4622 = vmatpush2.bf16.msra.mxu0 %v4074
    %4623 = vmatprep.subr.bf16.mxu0 %v4072
    %4624 = vmatpush2.bf16.msra.mxu0 %v4071
    %4625 = vmatprep.subr.bf16.mxu0 %v4069
    %4626 = vmatpush2.bf16.msra.mxu0 %v4068
    %4627 = vmatprep.mubr.bf16.mxu0 %v2442
    %4628 = vmatmul.mubr.bf16.gmra.mxu0 %v2441
    %v4629 = vpop.f32.mrf.mxu0
    %v4630 = vadd.f32 %v4587, %v4629
    %v4631 = vpop.f32.mrf.mxu0
    %v4632 = vadd.f32 %v4589, %v4631
    %v4633 = vpop.f32.mrf.mxu0
    %v4634 = vadd.f32 %v4591, %v4633
    %v4635 = vpop.f32.mrf.mxu0
    %v4636 = vadd.f32 %v4593, %v4635
    %4637 = vdwg.mxu0
    %4638 = vmatprep.subr.bf16.mxu0 0
    %4639 = vmatpush1.bf16.msra.mxu0 %v3827
    %4640 = vmatprep.subr.bf16.mxu0 0
    %4641 = vmatpush1.bf16.msra.mxu0 %v3824
    %4642 = vmatprep.subr.bf16.mxu0 0
    %4643 = vmatpush1.bf16.msra.mxu0 %v3821
    %4644 = vmatprep.subr.bf16.mxu0 0
    %4645 = vmatpush1.bf16.msra.mxu0 %v3818
    %4646 = vmatprep.subr.bf16.mxu0 0
    %4647 = vmatpush1.bf16.msra.mxu0 %v3815
    %4648 = vmatprep.subr.bf16.mxu0 0
    %4649 = vmatpush1.bf16.msra.mxu0 %v3812
    %4650 = vmatprep.subr.bf16.mxu0 0
    %4651 = vmatpush1.bf16.msra.mxu0 %v3809
    %4652 = vmatprep.subr.bf16.mxu0 0
    %4653 = vmatpush1.bf16.msra.mxu0 %v3806
    %4654 = vmatprep.subr.bf16.mxu0 0
    %4655 = vmatpush2.bf16.msra.mxu0 %v3851
    %4656 = vmatprep.subr.bf16.mxu0 0
    %4657 = vmatpush2.bf16.msra.mxu0 %v3848
    %4658 = vmatprep.subr.bf16.mxu0 0
    %4659 = vmatpush2.bf16.msra.mxu0 %v3845
    %4660 = vmatprep.subr.bf16.mxu0 0
    %4661 = vmatpush2.bf16.msra.mxu0 %v3842
    %4662 = vmatprep.subr.bf16.mxu0 0
    %4663 = vmatpush2.bf16.msra.mxu0 %v3839
    %4664 = vmatprep.subr.bf16.mxu0 0
    %4665 = vmatpush2.bf16.msra.mxu0 %v3836
    %4666 = vmatprep.subr.bf16.mxu0 0
    %4667 = vmatpush2.bf16.msra.mxu0 %v3833
    %4668 = vmatprep.subr.bf16.mxu0 0
    %4669 = vmatpush2.bf16.msra.mxu0 %v3830
    %4670 = vmatprep.mubr.bf16.mxu0 %v2432
    %4671 = vmatmul.mubr.bf16.gmra.mxu0 %v2431
    %v4672 = vpop.f32.mrf.mxu0
    %v4673 = vadd.f32 %v2840, %v4672
    %v4674 = vpop.f32.mrf.mxu0
    %v4675 = vpop.f32.mrf.mxu0
    %v4676 = vadd.f32 %v2840, %v4675
    %v4677 = vpop.f32.mrf.mxu0
    %4678 = vdwg.mxu0
    %4679 = vmatprep.subr.bf16.mxu0 0
    %4680 = vmatpush1.bf16.msra.mxu0 %v3875
    %4681 = vmatprep.subr.bf16.mxu0 0
    %4682 = vmatpush1.bf16.msra.mxu0 %v3872
    %4683 = vmatprep.subr.bf16.mxu0 0
    %4684 = vmatpush1.bf16.msra.mxu0 %v3869
    %4685 = vmatprep.subr.bf16.mxu0 0
    %4686 = vmatpush1.bf16.msra.mxu0 %v3866
    %4687 = vmatprep.subr.bf16.mxu0 0
    %4688 = vmatpush1.bf16.msra.mxu0 %v3863
    %4689 = vmatprep.subr.bf16.mxu0 0
    %4690 = vmatpush1.bf16.msra.mxu0 %v3860
    %4691 = vmatprep.subr.bf16.mxu0 0
    %4692 = vmatpush1.bf16.msra.mxu0 %v3857
    %4693 = vmatprep.subr.bf16.mxu0 0
    %4694 = vmatpush1.bf16.msra.mxu0 %v3854
    %4695 = vmatprep.subr.bf16.mxu0 0
    %4696 = vmatpush2.bf16.msra.mxu0 %v3899
    %4697 = vmatprep.subr.bf16.mxu0 0
    %4698 = vmatpush2.bf16.msra.mxu0 %v3896
    %4699 = vmatprep.subr.bf16.mxu0 0
    %4700 = vmatpush2.bf16.msra.mxu0 %v3893
    %4701 = vmatprep.subr.bf16.mxu0 0
    %4702 = vmatpush2.bf16.msra.mxu0 %v3890
    %4703 = vmatprep.subr.bf16.mxu0 0
    %4704 = vmatpush2.bf16.msra.mxu0 %v3887
    %4705 = vmatprep.subr.bf16.mxu0 0
    %4706 = vmatpush2.bf16.msra.mxu0 %v3884
    %4707 = vmatprep.subr.bf16.mxu0 0
    %4708 = vmatpush2.bf16.msra.mxu0 %v3881
    %4709 = vmatprep.subr.bf16.mxu0 0
    %4710 = vmatpush2.bf16.msra.mxu0 %v3878
    %4711 = vmatprep.mubr.bf16.mxu0 %v2434
    %4712 = vmatmul.mubr.bf16.gmra.mxu0 %v2433
    %v4713 = vpop.f32.mrf.mxu0
    %v4714 = vadd.f32 %v4673, %v4713
    %v4715 = vpop.f32.mrf.mxu0
    %v4716 = vpop.f32.mrf.mxu0
    %v4717 = vadd.f32 %v4676, %v4716
    %v4718 = vpop.f32.mrf.mxu0
    %4719 = vdwg.mxu0
    %4720 = vmatprep.subr.bf16.mxu0 0
    %4721 = vmatpush1.bf16.msra.mxu0 %v3923
    %4722 = vmatprep.subr.bf16.mxu0 0
    %4723 = vmatpush1.bf16.msra.mxu0 %v3920
    %4724 = vmatprep.subr.bf16.mxu0 0
    %4725 = vmatpush1.bf16.msra.mxu0 %v3917
    %4726 = vmatprep.subr.bf16.mxu0 0
    %4727 = vmatpush1.bf16.msra.mxu0 %v3914
    %4728 = vmatprep.subr.bf16.mxu0 0
    %4729 = vmatpush1.bf16.msra.mxu0 %v3911
    %4730 = vmatprep.subr.bf16.mxu0 0
    %4731 = vmatpush1.bf16.msra.mxu0 %v3908
    %4732 = vmatprep.subr.bf16.mxu0 0
    %4733 = vmatpush1.bf16.msra.mxu0 %v3905
    %4734 = vmatprep.subr.bf16.mxu0 0
    %4735 = vmatpush1.bf16.msra.mxu0 %v3902
    %4736 = vmatprep.subr.bf16.mxu0 0
    %4737 = vmatpush2.bf16.msra.mxu0 %v3947
    %4738 = vmatprep.subr.bf16.mxu0 0
    %4739 = vmatpush2.bf16.msra.mxu0 %v3944
    %4740 = vmatprep.subr.bf16.mxu0 0
    %4741 = vmatpush2.bf16.msra.mxu0 %v3941
    %4742 = vmatprep.subr.bf16.mxu0 0
    %4743 = vmatpush2.bf16.msra.mxu0 %v3938
    %4744 = vmatprep.subr.bf16.mxu0 0
    %4745 = vmatpush2.bf16.msra.mxu0 %v3935
    %4746 = vmatprep.subr.bf16.mxu0 0
    %4747 = vmatpush2.bf16.msra.mxu0 %v3932
    %4748 = vmatprep.subr.bf16.mxu0 0
    %4749 = vmatpush2.bf16.msra.mxu0 %v3929
    %4750 = vmatprep.subr.bf16.mxu0 0
    %4751 = vmatpush2.bf16.msra.mxu0 %v3926
    %4752 = vmatprep.mubr.bf16.mxu0 %v2436
    %4753 = vmatmul.mubr.bf16.gmra.mxu0 %v2435
    %v4754 = vpop.f32.mrf.mxu0
    %v4755 = vadd.f32 %v4714, %v4754
    %v4756 = vpop.f32.mrf.mxu0
    %v4757 = vpop.f32.mrf.mxu0
    %v4758 = vadd.f32 %v4717, %v4757
    %v4759 = vpop.f32.mrf.mxu0
    %4760 = vdwg.mxu0
    %4761 = vmatprep.subr.bf16.mxu0 0
    %4762 = vmatpush1.bf16.msra.mxu0 %v3971
    %4763 = vmatprep.subr.bf16.mxu0 0
    %4764 = vmatpush1.bf16.msra.mxu0 %v3968
    %4765 = vmatprep.subr.bf16.mxu0 0
    %4766 = vmatpush1.bf16.msra.mxu0 %v3965
    %4767 = vmatprep.subr.bf16.mxu0 0
    %4768 = vmatpush1.bf16.msra.mxu0 %v3962
    %4769 = vmatprep.subr.bf16.mxu0 0
    %4770 = vmatpush1.bf16.msra.mxu0 %v3959
    %4771 = vmatprep.subr.bf16.mxu0 0
    %4772 = vmatpush1.bf16.msra.mxu0 %v3956
    %4773 = vmatprep.subr.bf16.mxu0 0
    %4774 = vmatpush1.bf16.msra.mxu0 %v3953
    %4775 = vmatprep.subr.bf16.mxu0 0
    %4776 = vmatpush1.bf16.msra.mxu0 %v3950
    %4777 = vmatprep.subr.bf16.mxu0 0
    %4778 = vmatpush2.bf16.msra.mxu0 %v3995
    %4779 = vmatprep.subr.bf16.mxu0 0
    %4780 = vmatpush2.bf16.msra.mxu0 %v3992
    %4781 = vmatprep.subr.bf16.mxu0 0
    %4782 = vmatpush2.bf16.msra.mxu0 %v3989
    %4783 = vmatprep.subr.bf16.mxu0 0
    %4784 = vmatpush2.bf16.msra.mxu0 %v3986
    %4785 = vmatprep.subr.bf16.mxu0 0
    %4786 = vmatpush2.bf16.msra.mxu0 %v3983
    %4787 = vmatprep.subr.bf16.mxu0 0
    %4788 = vmatpush2.bf16.msra.mxu0 %v3980
    %4789 = vmatprep.subr.bf16.mxu0 0
    %4790 = vmatpush2.bf16.msra.mxu0 %v3977
    %4791 = vmatprep.subr.bf16.mxu0 0
    %4792 = vmatpush2.bf16.msra.mxu0 %v3974
    %4793 = vmatprep.mubr.bf16.mxu0 %v2438
    %4794 = vmatmul.mubr.bf16.gmra.mxu0 %v2437
    %v4795 = vpop.f32.mrf.mxu0
    %v4796 = vadd.f32 %v4755, %v4795
    %v4797 = vpop.f32.mrf.mxu0
    %v4798 = vpop.f32.mrf.mxu0
    %v4799 = vadd.f32 %v4758, %v4798
    %v4800 = vpop.f32.mrf.mxu0
    %4801 = vdwg.mxu0
    %4802 = vmatprep.subr.bf16.mxu0 0
    %4803 = vmatpush1.bf16.msra.mxu0 %v4019
    %4804 = vmatprep.subr.bf16.mxu0 0
    %4805 = vmatpush1.bf16.msra.mxu0 %v4016
    %4806 = vmatprep.subr.bf16.mxu0 0
    %4807 = vmatpush1.bf16.msra.mxu0 %v4013
    %4808 = vmatprep.subr.bf16.mxu0 0
    %4809 = vmatpush1.bf16.msra.mxu0 %v4010
    %4810 = vmatprep.subr.bf16.mxu0 0
    %4811 = vmatpush1.bf16.msra.mxu0 %v4007
    %4812 = vmatprep.subr.bf16.mxu0 0
    %4813 = vmatpush1.bf16.msra.mxu0 %v4004
    %4814 = vmatprep.subr.bf16.mxu0 0
    %4815 = vmatpush1.bf16.msra.mxu0 %v4001
    %4816 = vmatprep.subr.bf16.mxu0 0
    %4817 = vmatpush1.bf16.msra.mxu0 %v3998
    %4818 = vmatprep.subr.bf16.mxu0 0
    %4819 = vmatpush2.bf16.msra.mxu0 %v4043
    %4820 = vmatprep.subr.bf16.mxu0 0
    %4821 = vmatpush2.bf16.msra.mxu0 %v4040
    %4822 = vmatprep.subr.bf16.mxu0 0
    %4823 = vmatpush2.bf16.msra.mxu0 %v4037
    %4824 = vmatprep.subr.bf16.mxu0 0
    %4825 = vmatpush2.bf16.msra.mxu0 %v4034
    %4826 = vmatprep.subr.bf16.mxu0 0
    %4827 = vmatpush2.bf16.msra.mxu0 %v4031
    %4828 = vmatprep.subr.bf16.mxu0 0
    %4829 = vmatpush2.bf16.msra.mxu0 %v4028
    %4830 = vmatprep.subr.bf16.mxu0 0
    %4831 = vmatpush2.bf16.msra.mxu0 %v4025
    %4832 = vmatprep.subr.bf16.mxu0 0
    %4833 = vmatpush2.bf16.msra.mxu0 %v4022
    %4834 = vmatprep.mubr.bf16.mxu0 %v2440
    %4835 = vmatmul.mubr.bf16.gmra.mxu0 %v2439
    %v4836 = vpop.f32.mrf.mxu0
    %v4837 = vadd.f32 %v4796, %v4836
    %v4838 = vpop.f32.mrf.mxu0
    %v4839 = vpop.f32.mrf.mxu0
    %v4840 = vadd.f32 %v4799, %v4839
    %v4841 = vpop.f32.mrf.mxu0
    %4842 = vdwg.mxu0
    %4843 = vmatprep.subr.bf16.mxu0 0
    %4844 = vmatpush1.bf16.msra.mxu0 %v4067
    %4845 = vmatprep.subr.bf16.mxu0 0
    %4846 = vmatpush1.bf16.msra.mxu0 %v4064
    %4847 = vmatprep.subr.bf16.mxu0 0
    %4848 = vmatpush1.bf16.msra.mxu0 %v4061
    %4849 = vmatprep.subr.bf16.mxu0 0
    %4850 = vmatpush1.bf16.msra.mxu0 %v4058
    %4851 = vmatprep.subr.bf16.mxu0 0
    %4852 = vmatpush1.bf16.msra.mxu0 %v4055
    %4853 = vmatprep.subr.bf16.mxu0 0
    %4854 = vmatpush1.bf16.msra.mxu0 %v4052
    %4855 = vmatprep.subr.bf16.mxu0 0
    %4856 = vmatpush1.bf16.msra.mxu0 %v4049
    %4857 = vmatprep.subr.bf16.mxu0 0
    %4858 = vmatpush1.bf16.msra.mxu0 %v4046
    %4859 = vmatprep.subr.bf16.mxu0 0
    %4860 = vmatpush2.bf16.msra.mxu0 %v4091
    %4861 = vmatprep.subr.bf16.mxu0 0
    %4862 = vmatpush2.bf16.msra.mxu0 %v4088
    %4863 = vmatprep.subr.bf16.mxu0 0
    %4864 = vmatpush2.bf16.msra.mxu0 %v4085
    %4865 = vmatprep.subr.bf16.mxu0 0
    %4866 = vmatpush2.bf16.msra.mxu0 %v4082
    %4867 = vmatprep.subr.bf16.mxu0 0
    %4868 = vmatpush2.bf16.msra.mxu0 %v4079
    %4869 = vmatprep.subr.bf16.mxu0 0
    %4870 = vmatpush2.bf16.msra.mxu0 %v4076
    %4871 = vmatprep.subr.bf16.mxu0 0
    %4872 = vmatpush2.bf16.msra.mxu0 %v4073
    %4873 = vmatprep.subr.bf16.mxu0 0
    %4874 = vmatpush2.bf16.msra.mxu0 %v4070
    %4875 = vmatprep.mubr.bf16.mxu0 %v2442
    %4876 = vmatmul.mubr.bf16.gmra.mxu0 %v2441
    %v4877 = vpop.f32.mrf.mxu0
    %v4878 = vadd.f32 %v4837, %v4877
    %v4879 = vpop.f32.mrf.mxu0
    %v4880 = vpop.f32.mrf.mxu0
    %v4881 = vadd.f32 %v4840, %v4880
    %v4882 = vpop.f32.mrf.mxu0
    %4883 = vdwg.mxu0
    %v4884 = vlaneseq
    %v4885 = vshrl.u32 %v4884, 7
    %v4886 = vadd.s32 %v4885, 8
    %v4887 = vlaneseq
    %v4888 = vand.u32 %v4887, 127
    %v4889 = vadd.s32 %v4888, 128
    %v4890 = vadd.s32 %v4888, 256
    %s4891 = smul.u32 0, 16
    %v4892 = vstv %s4891
    %v4893 = vadd.s32 %v4892, %v4885
    %v4894 = vadd.s32 %v4892, %v4886
    %v4895 = vmul.u32 %v4893, 384
    %v4896 = vmul.u32 %v4894, 384
    %v4897 = vadd.s32 %v4895, %v4888
    %v4898 = vadd.s32 %v4895, %v4889
    %v4899 = vadd.s32 %v4895, %v4890
    %v4900 = vadd.s32 %v4896, %v4888
    %v4901 = vadd.s32 %v4896, %v4889
    %v4902 = vadd.s32 %v4896, %v4890
    %s4903 = sld [smem:[#allocation2]]
    %v4904 = vmul.u32 %v4897, 2654435769
    %v4905 = vmul.u32 %v4898, 2654435769
    %v4906 = vmul.u32 %v4899, 2654435769
    %v4907 = vmul.u32 %v4900, 2654435769
    %v4908 = vmul.u32 %v4901, 2654435769
    %v4909 = vmul.u32 %v4902, 2654435769
    %s4910 = smul.u32 %s4903, 2246822507
    %v4911 = vstv %s4910
    %v4912 = vadd.s32 %v4904, %v4911
    %v4913 = vadd.s32 %v4905, %v4911
    %v4914 = vadd.s32 %v4906, %v4911
    %v4915 = vadd.s32 %v4907, %v4911
    %v4916 = vadd.s32 %v4908, %v4911
    %v4917 = vadd.s32 %v4909, %v4911
    %v4918 = vshrl.u32 %v4912, 16
    %v4919 = vshrl.u32 %v4913, 16
    %v4920 = vshrl.u32 %v4914, 16
    %v4921 = vshrl.u32 %v4915, 16
    %v4922 = vshrl.u32 %v4916, 16
    %v4923 = vshrl.u32 %v4917, 16
    %v4924 = vxor.u32 %v4912, %v4918
    %v4925 = vxor.u32 %v4913, %v4919
    %v4926 = vxor.u32 %v4914, %v4920
    %v4927 = vxor.u32 %v4915, %v4921
    %v4928 = vxor.u32 %v4916, %v4922
    %v4929 = vxor.u32 %v4917, %v4923
    %v4930 = vmul.u32 %v4924, 2146121005
    %v4931 = vmul.u32 %v4925, 2146121005
    %v4932 = vmul.u32 %v4926, 2146121005
    %v4933 = vmul.u32 %v4927, 2146121005
    %v4934 = vmul.u32 %v4928, 2146121005
    %v4935 = vmul.u32 %v4929, 2146121005
    %v4936 = vshrl.u32 %v4930, 15
    %v4937 = vshrl.u32 %v4931, 15
    %v4938 = vshrl.u32 %v4932, 15
    %v4939 = vshrl.u32 %v4933, 15
    %v4940 = vshrl.u32 %v4934, 15
    %v4941 = vshrl.u32 %v4935, 15
    %v4942 = vxor.u32 %v4930, %v4936
    %v4943 = vxor.u32 %v4931, %v4937
    %v4944 = vxor.u32 %v4932, %v4938
    %v4945 = vxor.u32 %v4933, %v4939
    %v4946 = vxor.u32 %v4934, %v4940
    %v4947 = vxor.u32 %v4935, %v4941
    %v4948 = vmul.u32 %v4942, 2221713035
    %v4949 = vmul.u32 %v4943, 2221713035
    %v4950 = vmul.u32 %v4944, 2221713035
    %v4951 = vmul.u32 %v4945, 2221713035
    %v4952 = vmul.u32 %v4946, 2221713035
    %v4953 = vmul.u32 %v4947, 2221713035
    %v4954 = vshrl.u32 %v4948, 16
    %v4955 = vshrl.u32 %v4949, 16
    %v4956 = vshrl.u32 %v4950, 16
    %v4957 = vshrl.u32 %v4951, 16
    %v4958 = vshrl.u32 %v4952, 16
    %v4959 = vshrl.u32 %v4953, 16
    %v4960 = vxor.u32 %v4948, %v4954
    %v4961 = vxor.u32 %v4949, %v4955
    %v4962 = vxor.u32 %v4950, %v4956
    %v4963 = vxor.u32 %v4951, %v4957
    %v4964 = vxor.u32 %v4952, %v4958
    %v4965 = vxor.u32 %v4953, %v4959
    %vm4966 = vcmp.ge.u32.totalorder %v4960, 858993459
    %vm4967 = vcmp.ge.u32.totalorder %v4961, 858993459
    %vm4968 = vcmp.ge.u32.totalorder %v4962, 858993459
    %vm4969 = vcmp.ge.u32.totalorder %v4963, 858993459
    %vm4970 = vcmp.ge.u32.totalorder %v4964, 858993459
    %vm4971 = vcmp.ge.u32.totalorder %v4965, 858993459
    %v4972 = vmul.f32 %v4630, 1.25
    %v4973 = vmul.f32 %v4632, 1.25
    %v4974 = vmul.f32 %v4878, 1.25
    %v4975 = vmul.f32 %v4634, 1.25
    %v4976 = vmul.f32 %v4636, 1.25
    %v4977 = vmul.f32 %v4881, 1.25
    %v4978 = vsel %vm4966, %v4972, 0.0
    %v4979 = vsel %vm4967, %v4973, 0.0
    %v4980 = vsel %vm4968, %v4974, 0.0
    %v4981 = vsel %vm4969, %v4975, 0.0
    %v4982 = vsel %vm4970, %v4976, 0.0
    %v4983 = vsel %vm4971, %v4977, 0.0
    %4984 = vst [vmem:[#allocation12] sm:$0xff] %v4978
    %4985 = vst [vmem:[#allocation12 + $0x8] sm:$0xff] %v4979
    %4986 = vst [vmem:[#allocation12 + $0x10] sm:$0xff] %v4980
    %4987 = vst [vmem:[#allocation12 + $0x18] sm:$0xff] %v4981
    %4988 = vst [vmem:[#allocation12 + $0x20] sm:$0xff] %v4982
    %4989 = vst [vmem:[#allocation12 + $0x28] sm:$0xff] %v4983
    // Predicated region
    $region46: #{tpu_custom_call.1} parent=1 // pred_check
      _
    $region47: #{tpu_custom_call.1} parent=1 // pred_check_branch
      %4991 = sbr.rel (0) target = $region49
    $region48: #{tpu_custom_call.1} parent=1 // pred_region
      %s4993 = ssub.s32 768, 768
      %4994 = vsyncadd [#allocation5], %s4993
      %s4995 = sshll.u32 [#allocation12], 4
      %s4996 = int_to_ptr.vmem [resolvable:$true] %s4995
      %5001 = dma.vmem_to_hbm [thread:$0]  %s4996, 768, %s6, [#allocation5], 384, 384, 24
    $region49: #{tpu_custom_call.1} parent=1 // pred_fallthru
      _
    // Predicated region
    $region50: #{tpu_custom_call.1} parent=1 // pred_check
      _
    $region51: #{tpu_custom_call.1} parent=1 // pred_check_branch
      %5003 = sbr.rel (0) target = $region53
    $region52: #{tpu_custom_call.1} parent=1 // pred_region
      %5004 = dma.done [#allocation5], 768
    $region53: #{tpu_custom_call.1} parent=1 // pred_fallthru
      _
    %5005 = vsyncpa [#allocation4], 1
    %5006 = vsyncpa [#allocation7], 1
    %5007 = vsyncpa [#allocation10], 1
    %5008 = vsyncpa [#allocation5], 1

</llo_original>
